<compile_context>
chip_gen: v7x
topology: tpu7x:2x2x1
jax: 0.10.0
libtpu: 0.0.40
codegen_flags: <defaults>
</compile_context>

<pallas_src>
from functools import partial

import numpy as np
import jax
import jax.numpy as jnp
from jax.experimental import pallas as pl
from jax.experimental.pallas import tpu as pltpu

# --- problem sizes (small, consistent with the module's forward) ---------------
B   = 2      # batch
N   = 16     # seq_len (dim_seq)
DIM = 8      # dim (model dim)
DFF = 32     # dim_ff
H   = 2      # heads
E   = 7      # enc_in
DH  = DFF // H
LN_EPS = 1e-5
_PREC = jax.lax.Precision.HIGHEST


def _gelu_exact(x):
    # PyTorch nn.GELU() default == exact erf-based GELU.
    return 0.5 * x * (1.0 + jax.lax.erf(x * 0.7071067811865476))


# ------------------------------- Pallas kernel ---------------------------------
def _mgb_kernel(vp_ref, xmask_ref,
                w_in_ref, b_in_ref, ln_g_ref, ln_b_ref,
                imp_ref, sgu_w_ref, sgu_b_ref,
                w_out_ref, b_out_ref,
                out_ref):
    # rows = batch_block * N  (batch folded into the sublane/row dimension)
    x = vp_ref[...]                                              # (rows, 2*DIM) = [value | pos]
    rows = x.shape[0]

    # Packed proj_in_value / proj_in_pos: one matmul with block-diagonal weights, exact GELU.
    h1 = _gelu_exact(jnp.dot(x, w_in_ref[...], precision=_PREC) + b_in_ref[...])   # (rows, 2*DFF)
    v1 = h1[:, :DFF]                                             # gelu(value @ w_vin + b_vin)
    p1 = h1[:, DFF:]                                             # gelu(pos   @ w_pin + b_pin)

    # SGU LayerNorm over the feature dim (eps=1e-5, affine).
    mu = jnp.mean(p1, axis=-1, keepdims=True)
    var = jnp.mean(jnp.square(p1 - mu), axis=-1, keepdims=True)
    g = (p1 - mu) * jax.lax.rsqrt(var + LN_EPS) * ln_g_ref[...] + ln_b_ref[...]    # (rows, DFF)

    # Mask bias, accumulated straight onto g (the SGU matmul distributes over the sum):
    #   gmb[r, h*DH+d] = g[r, h*DH+d] + sum_e (1 - mask)[r, e] * impute[h, n(r), e, d]
    rmask = 1.0 - xmask_ref[...]                                 # (rows, E)
    gmb = g
    for e in range(E):                                           # 7 FMAs on (rows, DFF) tiles
        gmb = gmb + rmask[:, e:e + 1] * imp_ref[e]

    # Per-head spatial gating fused with the packed output projection.
    # gate_h = W_h @ (g_h + mb_h) + bias_h ;  out += (gate_h*v1_h) @ Wv_h  +  gate_h @ Wp_h
    # (Wv_h / Wp_h are zero-padded into the combined [vout | pout] column layout, so no
    #  lane concatenation of gate parts is needed.)
    out = jnp.zeros((rows, 2 * DIM), jnp.float32) + b_out_ref[...]
    for h in range(H):
        lo, hi = h * DH, (h + 1) * DH
        gate_h = jnp.dot(sgu_w_ref[h], gmb[:, lo:hi], precision=_PREC) + sgu_b_ref[h]
        out = out + jnp.dot(gate_h * v1[:, lo:hi], w_out_ref[0, h], precision=_PREC)
        out = out + jnp.dot(gate_h,                w_out_ref[1, h], precision=_PREC)

    out_ref[...] = out                                           # (rows, 2*DIM) = [vout | pout]


# ------------------------------- wrapper ---------------------------------------
def _full(shape):
    return pl.BlockSpec(shape, lambda i, _r=len(shape): (0,) * _r)


def _pick_batch_block():
    """Single-TC chips (v5e/v6e): fold the whole batch into one grid step.
    Dual-TC chips (v7x, megacore v4/v5p) or unknown: one batch per 'parallel' grid step."""
    try:
        kind = jax.devices()[0].device_kind.lower()
    except Exception:
        return 1
    if ("lite" in kind) or ("v5e" in kind) or ("v6e" in kind):
        return B
    return 1


def _pack_params(params, bb):
    (w_vin, b_vin, w_pin, b_pin, ln_g, ln_b,
     sgu_w, sgu_b, imp, w_vout, b_vout, w_pout, b_pout) = params

    # proj_in packed block-diagonal: [v | p] (rows,16) @ [[w_vin,0],[0,w_pin]] -> [v1 | p1]
    z_dd = jnp.zeros((DIM, DFF), jnp.float32)
    w_in = jnp.concatenate([jnp.concatenate([w_vin, z_dd], axis=1),
                            jnp.concatenate([z_dd, w_pin], axis=1)], axis=0)   # (2*DIM, 2*DFF)
    b_in = jnp.concatenate([b_vin, b_pin], axis=1)                             # (1, 2*DFF)

    # impute bias: (H, N, E, DH) -> (E, N, H*DH) merged-head lanes, tiled over the batch block
    imp_enf = jnp.transpose(imp, (2, 1, 0, 3)).reshape(E, N, DFF)
    imp_bc = jnp.tile(imp_enf, (1, bb, 1))                                     # (E, bb*N, DFF)

    # SGU weight: block-diagonal over the bb batches folded into rows
    eye_b = jnp.eye(bb, dtype=jnp.float32)
    sgu_w_bd = jnp.einsum('bc,hmn->hbmcn', eye_b, sgu_w).reshape(H, bb * N, bb * N)

    # SGU bias pre-broadcast: (H, N, 1) -> (H, bb*N, DH)
    sgu_b_bc = jnp.tile(sgu_b, (1, bb, DH))

    # per-head output weights padded into the combined [vout | pout] column layout
    w_vout_h = w_vout.reshape(H, DH, DIM)
    w_pout_h = w_pout.reshape(H, DH, DIM)
    zero_h = jnp.zeros((H, DH, DIM), jnp.float32)
    w_out_v = jnp.concatenate([w_vout_h, zero_h], axis=-1)                     # cols [:DIM]
    w_out_p = jnp.concatenate([zero_h, w_pout_h], axis=-1)                     # cols [DIM:]
    w_out = jnp.stack([w_out_v, w_out_p], axis=0)                              # (2, H, DH, 2*DIM)
    b_out = jnp.concatenate([b_vout, b_pout], axis=1)                          # (1, 2*DIM)

    return w_in, b_in, ln_g, ln_b, imp_bc, sgu_w_bd, sgu_b_bc, w_out, b_out


@partial(jax.jit, static_argnames=("bb",))
def _mgb_forward(value, pos, x_mask, params, *, bb):
    packed = _pack_params(params, bb)
    (w_in, b_in, ln_g, ln_b, imp_bc, sgu_w_bd, sgu_b_bc, w_out, b_out) = packed

    vp = jnp.concatenate([value, pos], axis=-1).reshape(B * N, 2 * DIM)        # merged input slab
    xm = x_mask.reshape(B * N, E)
    rows = bb * N
    grid = (B // bb,)

    flops = (2 * B * N * (2 * DIM) * (2 * DFF)        # packed proj_in
             + 2 * H * B * N * N * DH                 # SGU spatial matmuls
             + 4 * H * B * N * DH * (2 * DIM)         # per-head packed proj_out
             + 2 * B * N * E * DFF)                   # mask-bias FMAs
    bytes_accessed = 4 * (vp.size + xm.size + B * N * 2 * DIM
                          + sum(int(p.size) for p in packed))
    cost = pl.CostEstimate(flops=int(flops),
                           transcendentals=int(2 * B * N * DFF + B * N),
                           bytes_accessed=int(bytes_accessed))

    out = pl.pallas_call(
        _mgb_kernel,
        out_shape=jax.ShapeDtypeStruct((B * N, 2 * DIM), jnp.float32),
        grid=grid,
        in_specs=[
            pl.BlockSpec((rows, 2 * DIM), lambda i: (i, 0)),   # [value | pos]
            pl.BlockSpec((rows, E),       lambda i: (i, 0)),   # x_mask
            _full((2 * DIM, 2 * DFF)),                         # packed proj_in weight
            _full((1, 2 * DFF)),                               # packed proj_in bias
            _full((1, DFF)), _full((1, DFF)),                  # LayerNorm gamma, beta
            _full((E, rows, DFF)),                             # impute bias (permuted)
            _full((H, rows, rows)),                            # SGU weight (batch blockdiag)
            _full((H, rows, DH)),                              # SGU bias (pre-broadcast)
            _full((2, H, DH, 2 * DIM)),                        # per-head packed proj_out
            _full((1, 2 * DIM)),                               # packed proj_out bias
        ],
        out_specs=pl.BlockSpec((rows, 2 * DIM), lambda i: (i, 0)),
        compiler_params=pltpu.CompilerParams(dimension_semantics=("parallel",)),
        cost_estimate=cost,
    )(vp, xm, w_in, b_in, ln_g, ln_b, imp_bc, sgu_w_bd, sgu_b_bc, w_out, b_out)

    out3 = out.reshape(B, N, 2 * DIM)
    return out3[..., :DIM], out3[..., DIM:]


def masked_gated_block(value, pos, x_mask, params, batch_block=None):
    bb = batch_block if batch_block is not None else _pick_batch_block()
    assert B % bb == 0
    vout, pout = _mgb_forward(value, pos, x_mask, params, bb=bb)
    return vout, pout, x_mask


# --------------------------- pure-JAX reference ---------------------------------
def reference(value, pos, x_mask, params):
    (w_vin, b_vin, w_pin, b_pin, ln_g, ln_b,
     sgu_w, sgu_b, imp, w_vout, b_vout, w_pout, b_pout) = params
    v1 = _gelu_exact(jnp.einsum('bnd,df->bnf', value, w_vin, precision=_PREC) + b_vin)
    p1 = _gelu_exact(jnp.einsum('bnd,df->bnf', pos,   w_pin, precision=_PREC) + b_pin)
    mu = jnp.mean(p1, -1, keepdims=True)
    var = jnp.mean(jnp.square(p1 - mu), -1, keepdims=True)
    g = (p1 - mu) * jax.lax.rsqrt(var + LN_EPS) * ln_g + ln_b
    gate = g.reshape(B, N, H, DH).transpose(0, 2, 1, 3)                 # b h n d
    gate = jnp.einsum('bhnd,hmn->bhmd', gate, sgu_w, precision=_PREC)
    rmask = jnp.broadcast_to((1.0 - x_mask)[:, None], (B, H, N, E))
    mask_bias = jnp.einsum('bhne,hnem->bhnm', rmask, imp, precision=_PREC)
    mask_gate = jnp.einsum('bhnd,hmn->bhmd', mask_bias, sgu_w, precision=_PREC)
    gate = gate + sgu_b[None] + mask_gate                               # sgu_b is (H,N,1)
    gate = gate.transpose(0, 2, 1, 3).reshape(B, N, DFF)
    v2 = gate * v1
    vout = jnp.einsum('bnf,fd->bnd', v2,   w_vout, precision=_PREC) + b_vout
    pout = jnp.einsum('bnf,fd->bnd', gate, w_pout, precision=_PREC) + b_pout
    return vout, pout, x_mask


# --------------------------------- main -----------------------------------------
def make_params(key):
    ks = jax.random.split(key, 10)
    u = lambda k, shape, bound: jax.random.uniform(k, shape, jnp.float32, -bound, bound)
    w_vin = u(ks[0], (DIM, DFF), 1.0 / np.sqrt(DIM))
    b_vin = u(ks[1], (1, DFF),   1.0 / np.sqrt(DIM))
    w_pin = u(ks[2], (DIM, DFF), 1.0 / np.sqrt(DIM))
    b_pin = u(ks[3], (1, DFF),   1.0 / np.sqrt(DIM))
    ln_g = jnp.ones((1, DFF), jnp.float32)
    ln_b = jnp.zeros((1, DFF), jnp.float32)
    init_eps = 0.001 / N
    sgu_w = u(ks[4], (H, N, N), init_eps)
    sgu_b = jnp.ones((H, N, 1), jnp.float32)                      # nn.Parameter(torch.ones(h, n))
    imp   = jax.random.normal(ks[5], (H, N, E, DH), jnp.float32)  # torch.randn(h, n, enc_in, dff//h)
    w_vout = u(ks[6], (DFF, DIM), 1.0 / np.sqrt(DFF))
    b_vout = u(ks[7], (1, DIM),   1.0 / np.sqrt(DFF))
    w_pout = u(ks[8], (DFF, DIM), 1.0 / np.sqrt(DFF))
    b_pout = u(ks[9], (1, DIM),   1.0 / np.sqrt(DFF))
    return (w_vin, b_vin, w_pin, b_pin, ln_g, ln_b,
            sgu_w, sgu_b, imp, w_vout, b_vout, w_pout, b_pout)


if __name__ == "__main__":
    key = jax.random.PRNGKey(0)
    kp, kv, kq, km = jax.random.split(key, 4)
    params = make_params(kp)

    value  = jax.random.normal(kv, (B, N, DIM), jnp.float32)
    pos    = jax.random.normal(kq, (B, N, DIM), jnp.float32)
    x_mask = (jax.random.uniform(km, (B, N, E)) > 0.3).astype(jnp.float32)  # 1 = observed

    v_ref, p_ref, _ = reference(value, pos, x_mask, params)

    # Validate both grid variants (one-batch-per-step for dual-TC chips, folded batch for
    # single-TC chips); the auto path below picks one of these based on the device.
    for bb in (1, B):
        vout, pout, mout = masked_gated_block(value, pos, x_mask, params, batch_block=bb)
        jax.block_until_ready((vout, pout, mout))
        np.testing.assert_allclose(np.asarray(vout), np.asarray(v_ref), rtol=2e-3, atol=2e-3)
        np.testing.assert_allclose(np.asarray(pout), np.asarray(p_ref), rtol=2e-3, atol=2e-3)
        np.testing.assert_allclose(np.asarray(mout), np.asarray(x_mask), rtol=0, atol=0)

    # Hardware-aware default path.
    vout, pout, mout = masked_gated_block(value, pos, x_mask, params)
    jax.block_until_ready((vout, pout, mout))
    np.testing.assert_allclose(np.asarray(vout), np.asarray(v_ref), rtol=2e-3, atol=2e-3)
    np.testing.assert_allclose(np.asarray(pout), np.asarray(p_ref), rtol=2e-3, atol=2e-3)

    print("KERNEL_OK")
</pallas_src>

<mosaic_0001>
module attributes {stable_mosaic.version = 11 : i64} {
  func.func @_mgb_kernel(%arg0: i32, %arg1: memref<16x16xf32, #tpu.memory_space<vmem>>, %arg2: memref<16x7xf32, #tpu.memory_space<vmem>>, %arg3: memref<16x64xf32, #tpu.memory_space<vmem>>, %arg4: memref<1x64xf32, #tpu.memory_space<vmem>>, %arg5: memref<1x32xf32, #tpu.memory_space<vmem>>, %arg6: memref<1x32xf32, #tpu.memory_space<vmem>>, %arg7: memref<7x16x32xf32, #tpu.memory_space<vmem>>, %arg8: memref<2x16x16xf32, #tpu.memory_space<vmem>>, %arg9: memref<2x16x16xf32, #tpu.memory_space<vmem>>, %arg10: memref<2x2x16x16xf32, #tpu.memory_space<vmem>>, %arg11: memref<1x16xf32, #tpu.memory_space<vmem>>, %arg12: memref<16x16xf32, #tpu.memory_space<vmem>>) attributes {dimension_semantics = [#tpu.dimension_semantics<parallel>], iteration_bounds = array<i64: 2>, scalar_prefetch = 0 : i64, scratch_operands = 0 : i64, tpu.core_type = #tpu.core_type<tc>, window_params = [{transform_indices = @transform_0, window_bounds = array<i64: 16, 16>}, {transform_indices = @transform_1, window_bounds = array<i64: 16, 7>}, {pipeline_mode = #tpu.pipeline_mode<synchronous>, transform_indices = @transform_2, window_bounds = array<i64: 16, 64>}, {pipeline_mode = #tpu.pipeline_mode<synchronous>, transform_indices = @transform_3, window_bounds = array<i64: 1, 64>}, {pipeline_mode = #tpu.pipeline_mode<synchronous>, transform_indices = @transform_4, window_bounds = array<i64: 1, 32>}, {pipeline_mode = #tpu.pipeline_mode<synchronous>, transform_indices = @transform_5, window_bounds = array<i64: 1, 32>}, {pipeline_mode = #tpu.pipeline_mode<synchronous>, transform_indices = @transform_6, window_bounds = array<i64: 7, 16, 32>}, {pipeline_mode = #tpu.pipeline_mode<synchronous>, transform_indices = @transform_7, window_bounds = array<i64: 2, 16, 16>}, {pipeline_mode = #tpu.pipeline_mode<synchronous>, transform_indices = @transform_8, window_bounds = array<i64: 2, 16, 16>}, {pipeline_mode = #tpu.pipeline_mode<synchronous>, transform_indices = @transform_9, window_bounds = array<i64: 2, 2, 16, 16>}, {pipeline_mode = #tpu.pipeline_mode<synchronous>, transform_indices = @transform_10, window_bounds = array<i64: 1, 16>}, {transform_indices = @transform_11, window_bounds = array<i64: 16, 16>}]} {
    %c0 = arith.constant 0 : index
    %c0_0 = arith.constant 0 : index
    %0 = vector.load %arg1[%c0, %c0_0] : memref<16x16xf32, #tpu.memory_space<vmem>>, vector<16x16xf32>
    %c0_1 = arith.constant 0 : index
    %c0_2 = arith.constant 0 : index
    %1 = vector.load %arg3[%c0_1, %c0_2] : memref<16x64xf32, #tpu.memory_space<vmem>>, vector<16x64xf32>
    %cst = arith.constant dense<0.000000e+00> : vector<16x64xf32>
    %2 = tpu.matmul %0, %1, %cst {dimension_numbers = #tpu.dot_dimension_numbers<[1], [0], [0], [1], [0, 0, 1, 1], [], []>, precision = #tpu.contract_precision<fp32>} : vector<16x16xf32>, vector<16x64xf32>, vector<16x64xf32> -> vector<16x64xf32>
    %c0_3 = arith.constant 0 : index
    %c0_4 = arith.constant 0 : index
    %3 = vector.load %arg4[%c0_3, %c0_4] : memref<1x64xf32, #tpu.memory_space<vmem>>, vector<1x64xf32>
    %4 = vector.broadcast %3 : vector<1x64xf32> to vector<16x64xf32>
    %5 = arith.addf %2, %4 : vector<16x64xf32>
    %cst_5 = arith.constant 5.000000e-01 : f32
    %6 = vector.broadcast %cst_5 : f32 to vector<16x64xf32>
    %7 = arith.mulf %6, %5 : vector<16x64xf32>
    %cst_6 = arith.constant 0.707106769 : f32
    %8 = vector.broadcast %cst_6 : f32 to vector<16x64xf32>
    %9 = arith.mulf %5, %8 : vector<16x64xf32>
    %10 = math.erf %9 : vector<16x64xf32>
    %cst_7 = arith.constant 1.000000e+00 : f32
    %11 = vector.broadcast %cst_7 : f32 to vector<16x64xf32>
    %12 = arith.addf %11, %10 : vector<16x64xf32>
    %13 = arith.mulf %7, %12 : vector<16x64xf32>
    %14 = vector.extract_strided_slice %13 {offsets = [0, 0], sizes = [16, 32], strides = [1, 1]} : vector<16x64xf32> to vector<16x32xf32>
    %15 = vector.extract_strided_slice %13 {offsets = [0, 32], sizes = [16, 32], strides = [1, 1]} : vector<16x64xf32> to vector<16x32xf32>
    %cst_8 = arith.constant dense<0.000000e+00> : vector<16xf32>
    %16 = vector.multi_reduction <add>, %15, %cst_8 [1] : vector<16x32xf32> to vector<16xf32>
    %17 = vector.shape_cast %16 : vector<16xf32> to vector<16x1xf32>
    %cst_9 = arith.constant 3.200000e+01 : f32
    %18 = vector.broadcast %cst_9 : f32 to vector<16x1xf32>
    %19 = arith.divf %17, %18 : vector<16x1xf32>
    %20 = vector.broadcast %19 : vector<16x1xf32> to vector<16x32xf32>
    %21 = arith.subf %15, %20 : vector<16x32xf32>
    %22 = arith.mulf %21, %21 : vector<16x32xf32>
    %cst_10 = arith.constant dense<0.000000e+00> : vector<16xf32>
    %23 = vector.multi_reduction <add>, %22, %cst_10 [1] : vector<16x32xf32> to vector<16xf32>
    %24 = vector.shape_cast %23 : vector<16xf32> to vector<16x1xf32>
    %cst_11 = arith.constant 3.200000e+01 : f32
    %25 = vector.broadcast %cst_11 : f32 to vector<16x1xf32>
    %26 = arith.divf %24, %25 : vector<16x1xf32>
    %27 = vector.broadcast %19 : vector<16x1xf32> to vector<16x32xf32>
    %28 = arith.subf %15, %27 : vector<16x32xf32>
    %cst_12 = arith.constant 9.99999974E-6 : f32
    %29 = vector.broadcast %cst_12 : f32 to vector<16x1xf32>
    %30 = arith.addf %26, %29 : vector<16x1xf32>
    %31 = math.rsqrt %30 : vector<16x1xf32>
    %32 = vector.broadcast %31 : vector<16x1xf32> to vector<16x32xf32>
    %33 = arith.mulf %28, %32 : vector<16x32xf32>
    %c0_13 = arith.constant 0 : index
    %c0_14 = arith.constant 0 : index
    %34 = vector.load %arg5[%c0_13, %c0_14] : memref<1x32xf32, #tpu.memory_space<vmem>>, vector<1x32xf32>
    %35 = vector.broadcast %34 : vector<1x32xf32> to vector<16x32xf32>
    %36 = arith.mulf %33, %35 : vector<16x32xf32>
    %c0_15 = arith.constant 0 : index
    %c0_16 = arith.constant 0 : index
    %37 = vector.load %arg6[%c0_15, %c0_16] : memref<1x32xf32, #tpu.memory_space<vmem>>, vector<1x32xf32>
    %38 = vector.broadcast %37 : vector<1x32xf32> to vector<16x32xf32>
    %39 = arith.addf %36, %38 : vector<16x32xf32>
    %c0_17 = arith.constant 0 : index
    %c0_18 = arith.constant 0 : index
    %40 = vector.load %arg2[%c0_17, %c0_18] : memref<16x7xf32, #tpu.memory_space<vmem>>, vector<16x7xf32>
    %cst_19 = arith.constant 1.000000e+00 : f32
    %41 = vector.broadcast %cst_19 : f32 to vector<16x7xf32>
    %42 = arith.subf %41, %40 : vector<16x7xf32>
    %43 = vector.extract_strided_slice %42 {offsets = [0, 0], sizes = [16, 1], strides = [1, 1]} : vector<16x7xf32> to vector<16x1xf32>
    %c0_20 = arith.constant 0 : index
    %c0_21 = arith.constant 0 : index
    %c0_22 = arith.constant 0 : index
    %44 = vector.load %arg7[%c0_20, %c0_21, %c0_22] : memref<7x16x32xf32, #tpu.memory_space<vmem>>, vector<1x16x32xf32>
    %45 = vector.shape_cast %44 : vector<1x16x32xf32> to vector<16x32xf32>
    %46 = vector.broadcast %43 : vector<16x1xf32> to vector<16x32xf32>
    %47 = arith.mulf %46, %45 : vector<16x32xf32>
    %48 = arith.addf %39, %47 : vector<16x32xf32>
    %49 = vector.extract_strided_slice %42 {offsets = [0, 1], sizes = [16, 1], strides = [1, 1]} : vector<16x7xf32> to vector<16x1xf32>
    %c1 = arith.constant 1 : index
    %c0_23 = arith.constant 0 : index
    %c0_24 = arith.constant 0 : index
    %50 = vector.load %arg7[%c1, %c0_23, %c0_24] : memref<7x16x32xf32, #tpu.memory_space<vmem>>, vector<1x16x32xf32>
    %51 = vector.shape_cast %50 : vector<1x16x32xf32> to vector<16x32xf32>
    %52 = vector.broadcast %49 : vector<16x1xf32> to vector<16x32xf32>
    %53 = arith.mulf %52, %51 : vector<16x32xf32>
    %54 = arith.addf %48, %53 : vector<16x32xf32>
    %55 = vector.extract_strided_slice %42 {offsets = [0, 2], sizes = [16, 1], strides = [1, 1]} : vector<16x7xf32> to vector<16x1xf32>
    %c2 = arith.constant 2 : index
    %c0_25 = arith.constant 0 : index
    %c0_26 = arith.constant 0 : index
    %56 = vector.load %arg7[%c2, %c0_25, %c0_26] : memref<7x16x32xf32, #tpu.memory_space<vmem>>, vector<1x16x32xf32>
    %57 = vector.shape_cast %56 : vector<1x16x32xf32> to vector<16x32xf32>
    %58 = vector.broadcast %55 : vector<16x1xf32> to vector<16x32xf32>
    %59 = arith.mulf %58, %57 : vector<16x32xf32>
    %60 = arith.addf %54, %59 : vector<16x32xf32>
    %61 = vector.extract_strided_slice %42 {offsets = [0, 3], sizes = [16, 1], strides = [1, 1]} : vector<16x7xf32> to vector<16x1xf32>
    %c3 = arith.constant 3 : index
    %c0_27 = arith.constant 0 : index
    %c0_28 = arith.constant 0 : index
    %62 = vector.load %arg7[%c3, %c0_27, %c0_28] : memref<7x16x32xf32, #tpu.memory_space<vmem>>, vector<1x16x32xf32>
    %63 = vector.shape_cast %62 : vector<1x16x32xf32> to vector<16x32xf32>
    %64 = vector.broadcast %61 : vector<16x1xf32> to vector<16x32xf32>
    %65 = arith.mulf %64, %63 : vector<16x32xf32>
    %66 = arith.addf %60, %65 : vector<16x32xf32>
    %67 = vector.extract_strided_slice %42 {offsets = [0, 4], sizes = [16, 1], strides = [1, 1]} : vector<16x7xf32> to vector<16x1xf32>
    %c4 = arith.constant 4 : index
    %c0_29 = arith.constant 0 : index
    %c0_30 = arith.constant 0 : index
    %68 = vector.load %arg7[%c4, %c0_29, %c0_30] : memref<7x16x32xf32, #tpu.memory_space<vmem>>, vector<1x16x32xf32>
    %69 = vector.shape_cast %68 : vector<1x16x32xf32> to vector<16x32xf32>
    %70 = vector.broadcast %67 : vector<16x1xf32> to vector<16x32xf32>
    %71 = arith.mulf %70, %69 : vector<16x32xf32>
    %72 = arith.addf %66, %71 : vector<16x32xf32>
    %73 = vector.extract_strided_slice %42 {offsets = [0, 5], sizes = [16, 1], strides = [1, 1]} : vector<16x7xf32> to vector<16x1xf32>
    %c5 = arith.constant 5 : index
    %c0_31 = arith.constant 0 : index
    %c0_32 = arith.constant 0 : index
    %74 = vector.load %arg7[%c5, %c0_31, %c0_32] : memref<7x16x32xf32, #tpu.memory_space<vmem>>, vector<1x16x32xf32>
    %75 = vector.shape_cast %74 : vector<1x16x32xf32> to vector<16x32xf32>
    %76 = vector.broadcast %73 : vector<16x1xf32> to vector<16x32xf32>
    %77 = arith.mulf %76, %75 : vector<16x32xf32>
    %78 = arith.addf %72, %77 : vector<16x32xf32>
    %79 = vector.extract_strided_slice %42 {offsets = [0, 6], sizes = [16, 1], strides = [1, 1]} : vector<16x7xf32> to vector<16x1xf32>
    %c6 = arith.constant 6 : index
    %c0_33 = arith.constant 0 : index
    %c0_34 = arith.constant 0 : index
    %80 = vector.load %arg7[%c6, %c0_33, %c0_34] : memref<7x16x32xf32, #tpu.memory_space<vmem>>, vector<1x16x32xf32>
    %81 = vector.shape_cast %80 : vector<1x16x32xf32> to vector<16x32xf32>
    %82 = vector.broadcast %79 : vector<16x1xf32> to vector<16x32xf32>
    %83 = arith.mulf %82, %81 : vector<16x32xf32>
    %84 = arith.addf %78, %83 : vector<16x32xf32>
    %cst_35 = arith.constant 0.000000e+00 : f32
    %85 = vector.broadcast %cst_35 : f32 to vector<16x16xf32>
    %c0_36 = arith.constant 0 : index
    %c0_37 = arith.constant 0 : index
    %86 = vector.load %arg11[%c0_36, %c0_37] : memref<1x16xf32, #tpu.memory_space<vmem>>, vector<1x16xf32>
    %87 = vector.broadcast %86 : vector<1x16xf32> to vector<16x16xf32>
    %88 = arith.addf %85, %87 : vector<16x16xf32>
    %c0_38 = arith.constant 0 : index
    %c0_39 = arith.constant 0 : index
    %c0_40 = arith.constant 0 : index
    %89 = vector.load %arg8[%c0_38, %c0_39, %c0_40] : memref<2x16x16xf32, #tpu.memory_space<vmem>>, vector<1x16x16xf32>
    %90 = vector.shape_cast %89 : vector<1x16x16xf32> to vector<16x16xf32>
    %91 = vector.extract_strided_slice %84 {offsets = [0, 0], sizes = [16, 16], strides = [1, 1]} : vector<16x32xf32> to vector<16x16xf32>
    %cst_41 = arith.constant dense<0.000000e+00> : vector<16x16xf32>
    %92 = tpu.matmul %90, %91, %cst_41 {dimension_numbers = #tpu.dot_dimension_numbers<[1], [0], [0], [1], [0, 0, 1, 1], [], []>, precision = #tpu.contract_precision<fp32>} : vector<16x16xf32>, vector<16x16xf32>, vector<16x16xf32> -> vector<16x16xf32>
    %c0_42 = arith.constant 0 : index
    %c0_43 = arith.constant 0 : index
    %c0_44 = arith.constant 0 : index
    %93 = vector.load %arg9[%c0_42, %c0_43, %c0_44] : memref<2x16x16xf32, #tpu.memory_space<vmem>>, vector<1x16x16xf32>
    %94 = vector.shape_cast %93 : vector<1x16x16xf32> to vector<16x16xf32>
    %95 = arith.addf %92, %94 : vector<16x16xf32>
    %96 = vector.extract_strided_slice %14 {offsets = [0, 0], sizes = [16, 16], strides = [1, 1]} : vector<16x32xf32> to vector<16x16xf32>
    %97 = arith.mulf %95, %96 : vector<16x16xf32>
    %c0_45 = arith.constant 0 : index
    %c0_46 = arith.constant 0 : index
    %c0_47 = arith.constant 0 : index
    %c0_48 = arith.constant 0 : index
    %98 = vector.load %arg10[%c0_45, %c0_46, %c0_47, %c0_48] : memref<2x2x16x16xf32, #tpu.memory_space<vmem>>, vector<1x1x16x16xf32>
    %99 = vector.shape_cast %98 : vector<1x1x16x16xf32> to vector<16x16xf32>
    %cst_49 = arith.constant dense<0.000000e+00> : vector<16x16xf32>
    %100 = tpu.matmul %97, %99, %cst_49 {dimension_numbers = #tpu.dot_dimension_numbers<[1], [0], [0], [1], [0, 0, 1, 1], [], []>, precision = #tpu.contract_precision<fp32>} : vector<16x16xf32>, vector<16x16xf32>, vector<16x16xf32> -> vector<16x16xf32>
    %101 = arith.addf %88, %100 : vector<16x16xf32>
    %c1_50 = arith.constant 1 : index
    %c0_51 = arith.constant 0 : index
    %c0_52 = arith.constant 0 : index
    %c0_53 = arith.constant 0 : index
    %102 = vector.load %arg10[%c1_50, %c0_51, %c0_52, %c0_53] : memref<2x2x16x16xf32, #tpu.memory_space<vmem>>, vector<1x1x16x16xf32>
    %103 = vector.shape_cast %102 : vector<1x1x16x16xf32> to vector<16x16xf32>
    %cst_54 = arith.constant dense<0.000000e+00> : vector<16x16xf32>
    %104 = tpu.matmul %95, %103, %cst_54 {dimension_numbers = #tpu.dot_dimension_numbers<[1], [0], [0], [1], [0, 0, 1, 1], [], []>, precision = #tpu.contract_precision<fp32>} : vector<16x16xf32>, vector<16x16xf32>, vector<16x16xf32> -> vector<16x16xf32>
    %105 = arith.addf %101, %104 : vector<16x16xf32>
    %c1_55 = arith.constant 1 : index
    %c0_56 = arith.constant 0 : index
    %c0_57 = arith.constant 0 : index
    %106 = vector.load %arg8[%c1_55, %c0_56, %c0_57] : memref<2x16x16xf32, #tpu.memory_space<vmem>>, vector<1x16x16xf32>
    %107 = vector.shape_cast %106 : vector<1x16x16xf32> to vector<16x16xf32>
    %108 = vector.extract_strided_slice %84 {offsets = [0, 16], sizes = [16, 16], strides = [1, 1]} : vector<16x32xf32> to vector<16x16xf32>
    %cst_58 = arith.constant dense<0.000000e+00> : vector<16x16xf32>
    %109 = tpu.matmul %107, %108, %cst_58 {dimension_numbers = #tpu.dot_dimension_numbers<[1], [0], [0], [1], [0, 0, 1, 1], [], []>, precision = #tpu.contract_precision<fp32>} : vector<16x16xf32>, vector<16x16xf32>, vector<16x16xf32> -> vector<16x16xf32>
    %c1_59 = arith.constant 1 : index
    %c0_60 = arith.constant 0 : index
    %c0_61 = arith.constant 0 : index
    %110 = vector.load %arg9[%c1_59, %c0_60, %c0_61] : memref<2x16x16xf32, #tpu.memory_space<vmem>>, vector<1x16x16xf32>
    %111 = vector.shape_cast %110 : vector<1x16x16xf32> to vector<16x16xf32>
    %112 = arith.addf %109, %111 : vector<16x16xf32>
    %113 = vector.extract_strided_slice %14 {offsets = [0, 16], sizes = [16, 16], strides = [1, 1]} : vector<16x32xf32> to vector<16x16xf32>
    %114 = arith.mulf %112, %113 : vector<16x16xf32>
    %c0_62 = arith.constant 0 : index
    %c1_63 = arith.constant 1 : index
    %c0_64 = arith.constant 0 : index
    %c0_65 = arith.constant 0 : index
    %115 = vector.load %arg10[%c0_62, %c1_63, %c0_64, %c0_65] : memref<2x2x16x16xf32, #tpu.memory_space<vmem>>, vector<1x1x16x16xf32>
    %116 = vector.shape_cast %115 : vector<1x1x16x16xf32> to vector<16x16xf32>
    %cst_66 = arith.constant dense<0.000000e+00> : vector<16x16xf32>
    %117 = tpu.matmul %114, %116, %cst_66 {dimension_numbers = #tpu.dot_dimension_numbers<[1], [0], [0], [1], [0, 0, 1, 1], [], []>, precision = #tpu.contract_precision<fp32>} : vector<16x16xf32>, vector<16x16xf32>, vector<16x16xf32> -> vector<16x16xf32>
    %118 = arith.addf %105, %117 : vector<16x16xf32>
    %c1_67 = arith.constant 1 : index
    %c1_68 = arith.constant 1 : index
    %c0_69 = arith.constant 0 : index
    %c0_70 = arith.constant 0 : index
    %119 = vector.load %arg10[%c1_67, %c1_68, %c0_69, %c0_70] : memref<2x2x16x16xf32, #tpu.memory_space<vmem>>, vector<1x1x16x16xf32>
    %120 = vector.shape_cast %119 : vector<1x1x16x16xf32> to vector<16x16xf32>
    %cst_71 = arith.constant dense<0.000000e+00> : vector<16x16xf32>
    %121 = tpu.matmul %112, %120, %cst_71 {dimension_numbers = #tpu.dot_dimension_numbers<[1], [0], [0], [1], [0, 0, 1, 1], [], []>, precision = #tpu.contract_precision<fp32>} : vector<16x16xf32>, vector<16x16xf32>, vector<16x16xf32> -> vector<16x16xf32>
    %122 = arith.addf %118, %121 : vector<16x16xf32>
    %c0_72 = arith.constant 0 : index
    %c0_73 = arith.constant 0 : index
    %123 = vector.load %arg12[%c0_72, %c0_73] : memref<16x16xf32, #tpu.memory_space<vmem>>, vector<16x16xf32>
    tpu.vector_store %arg12[%c0_72, %c0_73], %122 {strides = array<i32>} : memref<16x16xf32, #tpu.memory_space<vmem>>, vector<16x16xf32>,
    return
  }
  func.func @transform_0(%arg0: i32) -> (i32, i32) {
    %c0_i32 = arith.constant 0 : i32
    %c0_i32_0 = arith.constant 0 : i32
    return %arg0, %c0_i32 : i32, i32
  }
  func.func @transform_1(%arg0: i32) -> (i32, i32) {
    %c0_i32 = arith.constant 0 : i32
    %c0_i32_0 = arith.constant 0 : i32
    return %arg0, %c0_i32 : i32, i32
  }
  func.func @transform_2(%arg0: i32) -> (i32, i32) {
    %c0_i32 = arith.constant 0 : i32
    %c0_i32_0 = arith.constant 0 : i32
    %c0_i32_1 = arith.constant 0 : i32
    return %c0_i32, %c0_i32_0 : i32, i32
  }
  func.func @transform_3(%arg0: i32) -> (i32, i32) {
    %c0_i32 = arith.constant 0 : i32
    %c0_i32_0 = arith.constant 0 : i32
    %c0_i32_1 = arith.constant 0 : i32
    return %c0_i32, %c0_i32_0 : i32, i32
  }
  func.func @transform_4(%arg0: i32) -> (i32, i32) {
    %c0_i32 = arith.constant 0 : i32
    %c0_i32_0 = arith.constant 0 : i32
    %c0_i32_1 = arith.constant 0 : i32
    return %c0_i32, %c0_i32_0 : i32, i32
  }
  func.func @transform_5(%arg0: i32) -> (i32, i32) {
    %c0_i32 = arith.constant 0 : i32
    %c0_i32_0 = arith.constant 0 : i32
    %c0_i32_1 = arith.constant 0 : i32
    return %c0_i32, %c0_i32_0 : i32, i32
  }
  func.func @transform_6(%arg0: i32) -> (i32, i32, i32) {
    %c0_i32 = arith.constant 0 : i32
    %c0_i32_0 = arith.constant 0 : i32
    %c0_i32_1 = arith.constant 0 : i32
    %c0_i32_2 = arith.constant 0 : i32
    return %c0_i32, %c0_i32_0, %c0_i32_1 : i32, i32, i32
  }
  func.func @transform_7(%arg0: i32) -> (i32, i32, i32) {
    %c0_i32 = arith.constant 0 : i32
    %c0_i32_0 = arith.constant 0 : i32
    %c0_i32_1 = arith.constant 0 : i32
    %c0_i32_2 = arith.constant 0 : i32
    return %c0_i32, %c0_i32_0, %c0_i32_1 : i32, i32, i32
  }
  func.func @transform_8(%arg0: i32) -> (i32, i32, i32) {
    %c0_i32 = arith.constant 0 : i32
    %c0_i32_0 = arith.constant 0 : i32
    %c0_i32_1 = arith.constant 0 : i32
    %c0_i32_2 = arith.constant 0 : i32
    return %c0_i32, %c0_i32_0, %c0_i32_1 : i32, i32, i32
  }
  func.func @transform_9(%arg0: i32) -> (i32, i32, i32, i32) {
    %c0_i32 = arith.constant 0 : i32
    %c0_i32_0 = arith.constant 0 : i32
    %c0_i32_1 = arith.constant 0 : i32
    %c0_i32_2 = arith.constant 0 : i32
    %c0_i32_3 = arith.constant 0 : i32
    return %c0_i32, %c0_i32_0, %c0_i32_1, %c0_i32_2 : i32, i32, i32, i32
  }
  func.func @transform_10(%arg0: i32) -> (i32, i32) {
    %c0_i32 = arith.constant 0 : i32
    %c0_i32_0 = arith.constant 0 : i32
    %c0_i32_1 = arith.constant 0 : i32
    return %c0_i32, %c0_i32_0 : i32, i32
  }
  func.func @transform_11(%arg0: i32) -> (i32, i32) {
    %c0_i32 = arith.constant 0 : i32
    %c0_i32_0 = arith.constant 0 : i32
    return %arg0, %c0_i32 : i32, i32
  }
}

</mosaic_0001>

<llo_original>
// kernel: _mgb_forward.1
$region0: #{_mgb_forward.1}
  #allocation0 [shape = 'u32[]', space=smem, size = 0x4, offset = 0x4, fixed_abs, tag = 'smem constant byte address 0x4 - core index']
  #allocation1 [shape = 'u32[144,128]{1,0:T(1,128)}', space=vmem, size = 0x12000, scoped, tag = 'internal scratch']
  %s0 = inlined_call_operand.vmem [shape: f32[32,16], index: 0, kind: input, shape index: {}]
  %s1 = inlined_call_operand.vmem [shape: f32[32,7], index: 1, kind: input, shape index: {}]
  %s2 = inlined_call_operand.vmem [shape: f32[16,64], index: 2, kind: input, shape index: {}]
  %s3 = inlined_call_operand.vmem [shape: f32[1,64], index: 3, kind: input, shape index: {}]
  %s4 = inlined_call_operand.vmem [shape: f32[1,32], index: 4, kind: input, shape index: {}]
  %s5 = inlined_call_operand.vmem [shape: f32[1,32], index: 5, kind: input, shape index: {}]
  %s6 = inlined_call_operand.vmem [shape: f32[7,16,32], index: 6, kind: input, shape index: {}]
  %s7 = inlined_call_operand.vmem [shape: f32[2,16,16], index: 7, kind: input, shape index: {}]
  %s8 = inlined_call_operand.vmem [shape: f32[2,16,16], index: 8, kind: input, shape index: {}]
  %s9 = inlined_call_operand.vmem [shape: f32[2,2,16,16], index: 9, kind: input, shape index: {}]
  %s10 = inlined_call_operand.vmem [shape: f32[1,16], index: 10, kind: input, shape index: {}]
  %s11 = inlined_call_operand.vmem [shape: f32[32,16], index: 11, kind: output, shape index: {}]
  %s12 = sld [smem:[#allocation0]]
  $region77: #{_mgb_forward.1} parent=0
    _
  %s14 = ssub.s32 1, %s12
  %s15 = scalar_select 0, %s14, %s12
  loop: start=0, step=1, limit=4
  $region2: #{_mgb_forward.1} parent=0 // loop_pre_header
    _
  $region3: #{_mgb_forward.1} parent=0 // loop_header
    %s17 = sphi 0, %s21
    %p18 = scmp.ge.s32.totalorder %s17, 4
    %s27 = sphi 0, %s29
    %s30 = sphi 0, %s27
    %s31 = sphi 0, %s30
    %s47 = sphi 0, %s31
    %s53 = sphi 0, %s55
    %s56 = sphi 0, %s53
    %s57 = sphi 0, %s56
    %s73 = sphi 0, %s57
    %s77 = sphi 0, %s77
    %s79 = sphi 0, %s77
    %s80 = sphi 0, %s79
    %s94 = sphi 0, %s80
    %s98 = sphi 0, %s98
    %s100 = sphi 0, %s98
    %s101 = sphi 0, %s100
    %s115 = sphi 0, %s101
    %s119 = sphi 0, %s119
    %s121 = sphi 0, %s119
    %s122 = sphi 0, %s121
    %s136 = sphi 0, %s122
    %s140 = sphi 0, %s140
    %s142 = sphi 0, %s140
    %s143 = sphi 0, %s142
    %s157 = sphi 0, %s143
    %s161 = sphi 0, %s161
    %s163 = sphi 0, %s161
    %s164 = sphi 0, %s163
    %s178 = sphi 0, %s164
    %s182 = sphi 0, %s182
    %s184 = sphi 0, %s182
    %s185 = sphi 0, %s184
    %s199 = sphi 0, %s185
    %s203 = sphi 0, %s203
    %s205 = sphi 0, %s203
    %s206 = sphi 0, %s205
    %s220 = sphi 0, %s206
    %s224 = sphi 0, %s224
    %s226 = sphi 0, %s224
    %s227 = sphi 0, %s226
    %s241 = sphi 0, %s227
    %s245 = sphi 0, %s245
    %s247 = sphi 0, %s245
    %s248 = sphi 0, %s247
    %s262 = sphi 0, %s248
    %s268 = sphi 0, %s270
    %s271 = sphi 0, %s268
    %s272 = sphi 0, %s271
    %s288 = sphi 0, %s272
  $region4: #{_mgb_forward.1} parent=0 // loop_header_branch
    %20 = sbr.rel (%p18) target = $region8
  $region5: #{_mgb_forward.1} parent=0 // loop_body
    %s22 = ssub.s32 %s17, 1
    %s23 = ssub.s32 %s17, 2
    %s24 = sadd.s32 %s17, 1
    %s25 = ssub.s32 %s17, %s24
    %p26 = scmp.eq.s32.totalorder %s25, 0
    %s28 = sadd.s32 %s27, 1
    %s29 = scalar_select %p26, %s27, %s28
    %p32 = pneg %p26
    %p33 = scmp.eq.s32.totalorder %s17, 1
    %p34 = por %p32, %p33
    %p35 = scmp.ne.s32.totalorder %s27, %s30
    %p36 = scmp.eq.s32.totalorder %s17, 0
    %p37 = por %p35, %p36
    %p38 = scmp.ne.s32.totalorder %s27, %s30
    %p39 = scmp.eq.s32.totalorder %s22, 1
    %p40 = por %p38, %p39
    %p41 = scmp.ne.s32.totalorder %s30, %s31
    %p42 = scmp.eq.s32.totalorder %s22, 0
    %p43 = por %p41, %p42
    %p44 = scmp.ne.s32.totalorder %s30, %s31
    %p45 = scmp.eq.s32.totalorder %s23, 1
    %p46 = por %p44, %p45
    %p48 = scmp.ne.s32.totalorder %s31, %s47
    %p49 = scmp.eq.s32.totalorder %s23, 0
    %p50 = por %p48, %p49
    %s51 = ssub.s32 %s17, %s24
    %p52 = scmp.eq.s32.totalorder %s51, 0
    %s54 = sadd.s32 %s53, 1
    %s55 = scalar_select %p52, %s53, %s54
    %p58 = pneg %p52
    %p59 = scmp.eq.s32.totalorder %s17, 1
    %p60 = por %p58, %p59
    %p61 = scmp.ne.s32.totalorder %s53, %s56
    %p62 = scmp.eq.s32.totalorder %s17, 0
    %p63 = por %p61, %p62
    %p64 = scmp.ne.s32.totalorder %s53, %s56
    %p65 = scmp.eq.s32.totalorder %s22, 1
    %p66 = por %p64, %p65
    %p67 = scmp.ne.s32.totalorder %s56, %s57
    %p68 = scmp.eq.s32.totalorder %s22, 0
    %p69 = por %p67, %p68
    %p70 = scmp.ne.s32.totalorder %s56, %s57
    %p71 = scmp.eq.s32.totalorder %s23, 1
    %p72 = por %p70, %p71
    %p74 = scmp.ne.s32.totalorder %s57, %s73
    %p75 = scmp.eq.s32.totalorder %s23, 0
    %p76 = por %p74, %p75
    %s78 = sadd.s32 %s77, 1
    %p81 = scmp.eq.s32.totalorder %s17, 1
    %p82 = scmp.ne.s32.totalorder %s77, %s79
    %p83 = scmp.eq.s32.totalorder %s17, 0
    %p84 = por %p82, %p83
    %p85 = scmp.ne.s32.totalorder %s77, %s79
    %p86 = scmp.eq.s32.totalorder %s22, 1
    %p87 = por %p85, %p86
    %p88 = scmp.ne.s32.totalorder %s79, %s80
    %p89 = scmp.eq.s32.totalorder %s22, 0
    %p90 = por %p88, %p89
    %p91 = scmp.ne.s32.totalorder %s79, %s80
    %p92 = scmp.eq.s32.totalorder %s23, 1
    %p93 = por %p91, %p92
    %p95 = scmp.ne.s32.totalorder %s80, %s94
    %p96 = scmp.eq.s32.totalorder %s23, 0
    %p97 = por %p95, %p96
    %s99 = sadd.s32 %s98, 1
    %p102 = scmp.eq.s32.totalorder %s17, 1
    %p103 = scmp.ne.s32.totalorder %s98, %s100
    %p104 = scmp.eq.s32.totalorder %s17, 0
    %p105 = por %p103, %p104
    %p106 = scmp.ne.s32.totalorder %s98, %s100
    %p107 = scmp.eq.s32.totalorder %s22, 1
    %p108 = por %p106, %p107
    %p109 = scmp.ne.s32.totalorder %s100, %s101
    %p110 = scmp.eq.s32.totalorder %s22, 0
    %p111 = por %p109, %p110
    %p112 = scmp.ne.s32.totalorder %s100, %s101
    %p113 = scmp.eq.s32.totalorder %s23, 1
    %p114 = por %p112, %p113
    %p116 = scmp.ne.s32.totalorder %s101, %s115
    %p117 = scmp.eq.s32.totalorder %s23, 0
    %p118 = por %p116, %p117
    %s120 = sadd.s32 %s119, 1
    %p123 = scmp.eq.s32.totalorder %s17, 1
    %p124 = scmp.ne.s32.totalorder %s119, %s121
    %p125 = scmp.eq.s32.totalorder %s17, 0
    %p126 = por %p124, %p125
    %p127 = scmp.ne.s32.totalorder %s119, %s121
    %p128 = scmp.eq.s32.totalorder %s22, 1
    %p129 = por %p127, %p128
    %p130 = scmp.ne.s32.totalorder %s121, %s122
    %p131 = scmp.eq.s32.totalorder %s22, 0
    %p132 = por %p130, %p131
    %p133 = scmp.ne.s32.totalorder %s121, %s122
    %p134 = scmp.eq.s32.totalorder %s23, 1
    %p135 = por %p133, %p134
    %p137 = scmp.ne.s32.totalorder %s122, %s136
    %p138 = scmp.eq.s32.totalorder %s23, 0
    %p139 = por %p137, %p138
    %s141 = sadd.s32 %s140, 1
    %p144 = scmp.eq.s32.totalorder %s17, 1
    %p145 = scmp.ne.s32.totalorder %s140, %s142
    %p146 = scmp.eq.s32.totalorder %s17, 0
    %p147 = por %p145, %p146
    %p148 = scmp.ne.s32.totalorder %s140, %s142
    %p149 = scmp.eq.s32.totalorder %s22, 1
    %p150 = por %p148, %p149
    %p151 = scmp.ne.s32.totalorder %s142, %s143
    %p152 = scmp.eq.s32.totalorder %s22, 0
    %p153 = por %p151, %p152
    %p154 = scmp.ne.s32.totalorder %s142, %s143
    %p155 = scmp.eq.s32.totalorder %s23, 1
    %p156 = por %p154, %p155
    %p158 = scmp.ne.s32.totalorder %s143, %s157
    %p159 = scmp.eq.s32.totalorder %s23, 0
    %p160 = por %p158, %p159
    %s162 = sadd.s32 %s161, 1
    %p165 = scmp.eq.s32.totalorder %s17, 1
    %p166 = scmp.ne.s32.totalorder %s161, %s163
    %p167 = scmp.eq.s32.totalorder %s17, 0
    %p168 = por %p166, %p167
    %p169 = scmp.ne.s32.totalorder %s161, %s163
    %p170 = scmp.eq.s32.totalorder %s22, 1
    %p171 = por %p169, %p170
    %p172 = scmp.ne.s32.totalorder %s163, %s164
    %p173 = scmp.eq.s32.totalorder %s22, 0
    %p174 = por %p172, %p173
    %p175 = scmp.ne.s32.totalorder %s163, %s164
    %p176 = scmp.eq.s32.totalorder %s23, 1
    %p177 = por %p175, %p176
    %p179 = scmp.ne.s32.totalorder %s164, %s178
    %p180 = scmp.eq.s32.totalorder %s23, 0
    %p181 = por %p179, %p180
    %s183 = sadd.s32 %s182, 1
    %p186 = scmp.eq.s32.totalorder %s17, 1
    %p187 = scmp.ne.s32.totalorder %s182, %s184
    %p188 = scmp.eq.s32.totalorder %s17, 0
    %p189 = por %p187, %p188
    %p190 = scmp.ne.s32.totalorder %s182, %s184
    %p191 = scmp.eq.s32.totalorder %s22, 1
    %p192 = por %p190, %p191
    %p193 = scmp.ne.s32.totalorder %s184, %s185
    %p194 = scmp.eq.s32.totalorder %s22, 0
    %p195 = por %p193, %p194
    %p196 = scmp.ne.s32.totalorder %s184, %s185
    %p197 = scmp.eq.s32.totalorder %s23, 1
    %p198 = por %p196, %p197
    %p200 = scmp.ne.s32.totalorder %s185, %s199
    %p201 = scmp.eq.s32.totalorder %s23, 0
    %p202 = por %p200, %p201
    %s204 = sadd.s32 %s203, 1
    %p207 = scmp.eq.s32.totalorder %s17, 1
    %p208 = scmp.ne.s32.totalorder %s203, %s205
    %p209 = scmp.eq.s32.totalorder %s17, 0
    %p210 = por %p208, %p209
    %p211 = scmp.ne.s32.totalorder %s203, %s205
    %p212 = scmp.eq.s32.totalorder %s22, 1
    %p213 = por %p211, %p212
    %p214 = scmp.ne.s32.totalorder %s205, %s206
    %p215 = scmp.eq.s32.totalorder %s22, 0
    %p216 = por %p214, %p215
    %p217 = scmp.ne.s32.totalorder %s205, %s206
    %p218 = scmp.eq.s32.totalorder %s23, 1
    %p219 = por %p217, %p218
    %p221 = scmp.ne.s32.totalorder %s206, %s220
    %p222 = scmp.eq.s32.totalorder %s23, 0
    %p223 = por %p221, %p222
    %s225 = sadd.s32 %s224, 1
    %p228 = scmp.eq.s32.totalorder %s17, 1
    %p229 = scmp.ne.s32.totalorder %s224, %s226
    %p230 = scmp.eq.s32.totalorder %s17, 0
    %p231 = por %p229, %p230
    %p232 = scmp.ne.s32.totalorder %s224, %s226
    %p233 = scmp.eq.s32.totalorder %s22, 1
    %p234 = por %p232, %p233
    %p235 = scmp.ne.s32.totalorder %s226, %s227
    %p236 = scmp.eq.s32.totalorder %s22, 0
    %p237 = por %p235, %p236
    %p238 = scmp.ne.s32.totalorder %s226, %s227
    %p239 = scmp.eq.s32.totalorder %s23, 1
    %p240 = por %p238, %p239
    %p242 = scmp.ne.s32.totalorder %s227, %s241
    %p243 = scmp.eq.s32.totalorder %s23, 0
    %p244 = por %p242, %p243
    %s246 = sadd.s32 %s245, 1
    %p249 = scmp.eq.s32.totalorder %s17, 1
    %p250 = scmp.ne.s32.totalorder %s245, %s247
    %p251 = scmp.eq.s32.totalorder %s17, 0
    %p252 = por %p250, %p251
    %p253 = scmp.ne.s32.totalorder %s245, %s247
    %p254 = scmp.eq.s32.totalorder %s22, 1
    %p255 = por %p253, %p254
    %p256 = scmp.ne.s32.totalorder %s247, %s248
    %p257 = scmp.eq.s32.totalorder %s22, 0
    %p258 = por %p256, %p257
    %p259 = scmp.ne.s32.totalorder %s247, %s248
    %p260 = scmp.eq.s32.totalorder %s23, 1
    %p261 = por %p259, %p260
    %p263 = scmp.ne.s32.totalorder %s248, %s262
    %p264 = scmp.eq.s32.totalorder %s23, 0
    %p265 = por %p263, %p264
    %s266 = ssub.s32 %s17, %s24
    %p267 = scmp.eq.s32.totalorder %s266, 0
    %s269 = sadd.s32 %s268, 1
    %s270 = scalar_select %p267, %s268, %s269
    %p273 = pneg %p267
    %p274 = scmp.eq.s32.totalorder %s17, 1
    %p275 = por %p273, %p274
    %p276 = scmp.ne.s32.totalorder %s268, %s271
    %p277 = scmp.eq.s32.totalorder %s17, 0
    %p278 = por %p276, %p277
    %p279 = scmp.ne.s32.totalorder %s268, %s271
    %p280 = scmp.eq.s32.totalorder %s22, 1
    %p281 = por %p279, %p280
    %p282 = scmp.ne.s32.totalorder %s271, %s272
    %p283 = scmp.eq.s32.totalorder %s22, 0
    %p284 = por %p282, %p283
    %p285 = scmp.ne.s32.totalorder %s271, %s272
    %p286 = scmp.eq.s32.totalorder %s23, 1
    %p287 = por %p285, %p286
    %p289 = scmp.ne.s32.totalorder %s272, %s288
    %p290 = scmp.eq.s32.totalorder %s23, 0
    %p291 = por %p289, %p290
    %p292 = scmp.le.s32.totalorder 1, %s17
    %p293 = scmp.lt.s32.totalorder %s17, 3
    %p294 = pnand %p292, %p293
    %p295 = pneg %p294
    // Predicated region
    $region9: #{_mgb_forward.1} parent=5 // pred_check
      _
    $region10: #{_mgb_forward.1} parent=5 // pred_check_branch
      %297 = sbr.rel (%p294) target = $region12
    $region11: #{_mgb_forward.1} parent=5 // pred_region
      %s298 = ssub.s32 %s17, 1
      // Predicated region
      $region13: #{_mgb_forward.1} parent=11 // pred_check
        %p299 = pneg %p90
      $region14: #{_mgb_forward.1} parent=11 // pred_check_branch
        %301 = sbr.rel (%p299) target = $region16
      $region15: #{_mgb_forward.1} parent=11 // pred_region
        _
      $region16: #{_mgb_forward.1} parent=11 // pred_fallthru
        _
      // Predicated region
      $region17: #{_mgb_forward.1} parent=11 // pred_check
        %p302 = pneg %p111
      $region18: #{_mgb_forward.1} parent=11 // pred_check_branch
        %304 = sbr.rel (%p302) target = $region20
      $region19: #{_mgb_forward.1} parent=11 // pred_region
        _
      $region20: #{_mgb_forward.1} parent=11 // pred_fallthru
        _
      // Predicated region
      $region21: #{_mgb_forward.1} parent=11 // pred_check
        %p305 = pneg %p132
      $region22: #{_mgb_forward.1} parent=11 // pred_check_branch
        %307 = sbr.rel (%p305) target = $region24
      $region23: #{_mgb_forward.1} parent=11 // pred_region
        _
      $region24: #{_mgb_forward.1} parent=11 // pred_fallthru
        _
      // Predicated region
      $region25: #{_mgb_forward.1} parent=11 // pred_check
        %p308 = pneg %p153
      $region26: #{_mgb_forward.1} parent=11 // pred_check_branch
        %310 = sbr.rel (%p308) target = $region28
      $region27: #{_mgb_forward.1} parent=11 // pred_region
        _
      $region28: #{_mgb_forward.1} parent=11 // pred_fallthru
        _
      // Predicated region
      $region29: #{_mgb_forward.1} parent=11 // pred_check
        %p311 = pneg %p174
      $region30: #{_mgb_forward.1} parent=11 // pred_check_branch
        %313 = sbr.rel (%p311) target = $region32
      $region31: #{_mgb_forward.1} parent=11 // pred_region
        _
      $region32: #{_mgb_forward.1} parent=11 // pred_fallthru
        _
      // Predicated region
      $region33: #{_mgb_forward.1} parent=11 // pred_check
        %p314 = pneg %p195
      $region34: #{_mgb_forward.1} parent=11 // pred_check_branch
        %316 = sbr.rel (%p314) target = $region36
      $region35: #{_mgb_forward.1} parent=11 // pred_region
        _
      $region36: #{_mgb_forward.1} parent=11 // pred_fallthru
        _
      // Predicated region
      $region37: #{_mgb_forward.1} parent=11 // pred_check
        %p317 = pneg %p216
      $region38: #{_mgb_forward.1} parent=11 // pred_check_branch
        %319 = sbr.rel (%p317) target = $region40
      $region39: #{_mgb_forward.1} parent=11 // pred_region
        _
      $region40: #{_mgb_forward.1} parent=11 // pred_fallthru
        _
      // Predicated region
      $region41: #{_mgb_forward.1} parent=11 // pred_check
        %p320 = pneg %p237
      $region42: #{_mgb_forward.1} parent=11 // pred_check_branch
        %322 = sbr.rel (%p320) target = $region44
      $region43: #{_mgb_forward.1} parent=11 // pred_region
        _
      $region44: #{_mgb_forward.1} parent=11 // pred_fallthru
        _
      // Predicated region
      $region45: #{_mgb_forward.1} parent=11 // pred_check
        %p323 = pneg %p258
      $region46: #{_mgb_forward.1} parent=11 // pred_check_branch
        %325 = sbr.rel (%p323) target = $region48
      $region47: #{_mgb_forward.1} parent=11 // pred_region
        _
      $region48: #{_mgb_forward.1} parent=11 // pred_fallthru
        _
    $region12: #{_mgb_forward.1} parent=5 // pred_fallthru
      _
    %p326 = scmp.lt.s32.totalorder %s17, 2
    // Predicated region
    $region49: #{_mgb_forward.1} parent=5 // pred_check
      %p327 = pneg %p326
    $region50: #{_mgb_forward.1} parent=5 // pred_check_branch
      %329 = sbr.rel (%p327) target = $region52
    $region51: #{_mgb_forward.1} parent=5 // pred_region
      // Predicated region
      $region53: #{_mgb_forward.1} parent=51 // pred_check
        %p330 = pneg %p37
      $region54: #{_mgb_forward.1} parent=51 // pred_check_branch
        %332 = sbr.rel (%p330) target = $region56
      $region55: #{_mgb_forward.1} parent=51 // pred_region
        %s333 = smul.u32 2, %s17
        %p334 = scmp.lt.s32.totalorder %s333, 3
        %s335 = scalar_select %p334, %s333, 3
        %s336 = smul.addr %s335, 8
        %s337 = scalar_lea.vmem %s0, %s336
        %s338 = smul.u32 2, %s17
      $region56: #{_mgb_forward.1} parent=51 // pred_fallthru
        _
      // Predicated region
      $region57: #{_mgb_forward.1} parent=51 // pred_check
        %p339 = pneg %p63
      $region58: #{_mgb_forward.1} parent=51 // pred_check_branch
        %341 = sbr.rel (%p339) target = $region60
      $region59: #{_mgb_forward.1} parent=51 // pred_region
        %s342 = smul.u32 2, %s17
        %p343 = scmp.lt.s32.totalorder %s342, 3
        %s344 = scalar_select %p343, %s342, 3
        %s345 = smul.addr %s344, 8
        %s346 = scalar_lea.vmem %s1, %s345
        %s347 = smul.u32 2, %s17
      $region60: #{_mgb_forward.1} parent=51 // pred_fallthru
        _
    $region52: #{_mgb_forward.1} parent=5 // pred_fallthru
      _
    %p348 = scmp.le.s32.totalorder 1, %s17
    %p349 = scmp.lt.s32.totalorder %s17, 3
    %p350 = pnand %p348, %p349
    %p351 = pneg %p350
    // Predicated region
    $region61: #{_mgb_forward.1} parent=5 // pred_check
      _
    $region62: #{_mgb_forward.1} parent=5 // pred_check_branch
      %353 = sbr.rel (%p350) target = $region64
    $region63: #{_mgb_forward.1} parent=5 // pred_region
      %s354 = ssub.s32 %s17, 1
      %s355 = smul.u32 2, %s22
      %p356 = scmp.lt.s32.totalorder %s355, 3
      %s357 = scalar_select %p356, %s355, 3
      %s358 = smul.addr %s357, 8
      %s359 = scalar_lea.vmem %s0, %s358
      %p360 = pneg %p43
      %p361 = pneg %p40
      %s362 = smul.u32 2, %s22
      %p363 = scmp.lt.s32.totalorder %s362, 3
      %s364 = scalar_select %p363, %s362, 3
      %s365 = smul.addr %s364, 8
      %s366 = scalar_lea.vmem %s1, %s365
      %p367 = pneg %p69
      %p368 = pneg %p66
      %p369 = pneg %p90
      %p370 = pneg %p87
      %p371 = pneg %p111
      %p372 = pneg %p108
      %p373 = pneg %p132
      %p374 = pneg %p129
      %p375 = pneg %p153
      %p376 = pneg %p150
      %p377 = pneg %p174
      %p378 = pneg %p171
      %p379 = pneg %p195
      %p380 = pneg %p192
      %p381 = pneg %p216
      %p382 = pneg %p213
      %p383 = pneg %p237
      %p384 = pneg %p234
      %p385 = pneg %p258
      %p386 = pneg %p255
      %p387 = pneg %p284
      %p388 = pneg %p281
      %s389 = smul.u32 2, %s22
      %p390 = scmp.lt.s32.totalorder %s389, 3
      %s391 = scalar_select %p390, %s389, 3
      %s392 = smul.addr %s391, 8
      %s393 = scalar_lea.vmem %s11, %s392
      %s394 = smul.u32 2, %s22
      %p395 = scmp.lt.s32.totalorder %s394, 3
      %s396 = scalar_select %p395, %s394, 3
      %s397 = smul.addr %s396, 8
      %s398 = scalar_lea.vmem %s0, %s397
      %s399 = smul.u32 2, %s22
      %s400 = smul.u32 2, %s22
      %p401 = scmp.lt.s32.totalorder %s400, 3
      %s402 = scalar_select %p401, %s400, 3
      %s403 = smul.addr %s402, 8
      %s404 = scalar_lea.vmem %s1, %s403
      %s405 = smul.u32 2, %s22
      %s406 = smul.u32 2, %s22
      %p407 = scmp.lt.s32.totalorder %s406, 3
      %s408 = scalar_select %p407, %s406, 3
      %s409 = smul.addr %s408, 8
      %s410 = scalar_lea.vmem %s11, %s409
      %s411 = smul.u32 2, %s22
      %v412 = vld [vmem:[%s398] sm:$0xff]
      %v413 = vld [vmem:[%s398 + $0x8] sm:$0xff]
      %v414 = vld [vmem:[%s2] sm:$0xff]
      %v415 = vld [vmem:[%s2 + $0x8] sm:$0xff]
      %v416 = vld [vmem:[%s3] sm:$0x1]
      %v418 = vlaneseq
      %v419 = vshrl.u32 %v418, 7
      %v420 = vsub.s32 0, %v419
      %v421 = vrot.slane %v416, %v420
      %vm423 = vcmask 130048
      %v425 = vsel %vm423, %v412, 0
      %v428 = vsel %vm423, %v413, 0
      %430 = vmatprep.subr.mxu0 0.0
      %v431 = vand.u32 %v414, 4294901760
      %432 = vmatpush1.msra.mxu0 %v431
      %433 = vmatprep.subr.mxu0 0.0
      %v434 = vand.u32 %v415, 4294901760
      %435 = vmatpush1.msra.mxu0 %v434
      %436 = vmatprep.subr.mxu0 0.0
      %437 = vmatpush1.msra.mxu0 0.0
      %438 = vmatprep.subr.mxu0 0.0
      %439 = vmatpush1.msra.mxu0 0.0
      %440 = vmatprep.subr.mxu0 0.0
      %441 = vmatpush1.msra.mxu0 0.0
      %442 = vmatprep.subr.mxu0 0.0
      %443 = vmatpush1.msra.mxu0 0.0
      %444 = vmatprep.subr.mxu0 0.0
      %445 = vmatpush1.msra.mxu0 0.0
      %446 = vmatprep.subr.mxu0 0.0
      %447 = vmatpush1.msra.mxu0 0.0
      %448 = vmatprep.subr.mxu0 0.0
      %449 = vmatpush1.msra.mxu0 0.0
      %450 = vmatprep.subr.mxu0 0.0
      %451 = vmatpush1.msra.mxu0 0.0
      %452 = vmatprep.subr.mxu0 0.0
      %453 = vmatpush1.msra.mxu0 0.0
      %454 = vmatprep.subr.mxu0 0.0
      %455 = vmatpush1.msra.mxu0 0.0
      %456 = vmatprep.subr.mxu0 0.0
      %457 = vmatpush1.msra.mxu0 0.0
      %458 = vmatprep.subr.mxu0 0.0
      %459 = vmatpush1.msra.mxu0 0.0
      %460 = vmatprep.subr.mxu0 0.0
      %461 = vmatpush1.msra.mxu0 0.0
      %462 = vmatprep.subr.mxu0 0.0
      %463 = vmatpush1.msra.mxu0 0.0
      %464 = vmatprep.subr.mxu0 0.0
      %465 = vmatpush1.msra.mxu0 0.0
      %466 = vmatprep.subr.mxu0 0.0
      %467 = vmatpush1.msra.mxu0 0.0
      %468 = vmatprep.subr.mxu0 0.0
      %469 = vmatpush1.msra.mxu0 0.0
      %470 = vmatprep.subr.mxu0 0.0
      %471 = vmatpush1.msra.mxu0 0.0
      %472 = vmatprep.subr.mxu0 0.0
      %473 = vmatpush1.msra.mxu0 0.0
      %474 = vmatprep.subr.mxu0 0.0
      %475 = vmatpush1.msra.mxu0 0.0
      %476 = vmatprep.subr.mxu0 0.0
      %477 = vmatpush1.msra.mxu0 0.0
      %478 = vmatprep.subr.mxu0 0.0
      %479 = vmatpush1.msra.mxu0 0.0
      %480 = vmatprep.subr.mxu0 0.0
      %481 = vmatpush1.msra.mxu0 0.0
      %482 = vmatprep.subr.mxu0 0.0
      %483 = vmatpush1.msra.mxu0 0.0
      %484 = vmatprep.subr.mxu0 0.0
      %485 = vmatpush1.msra.mxu0 0.0
      %486 = vmatprep.subr.mxu0 0.0
      %487 = vmatpush1.msra.mxu0 0.0
      %488 = vmatprep.subr.mxu0 0.0
      %489 = vmatpush1.msra.mxu0 0.0
      %490 = vmatprep.subr.mxu0 0.0
      %491 = vmatpush1.msra.mxu0 0.0
      %492 = vmatprep.subr.mxu0 0.0
      %493 = vmatpush1.msra.mxu0 0.0
      %494 = vmatprep.subr.mxu0 0.0
      %495 = vmatpush1.msra.mxu0 0.0
      %496 = vmatprep.mubr.f32.mxu0 0.0
      %v497 = vand.u32 %v425, 4294901760
      %v498 = vsub.f32 %v425, %v497
      %v499 = vand.u32 %v498, 4294901760
      %v500 = vsub.f32 %v498, %v499
      %v501 = vand.u32 %v500, 4294901760
      %502 = vmatmul.mubr.f32.gmra.mrb[0].mxu0 %v501
      %v503 = vpop.f32.mrb[0].mxu0
      %v504 = vadd.f32 %v421, %v503
      %v505 = vpop.f32.mrb[0].mxu0
      %506 = vmatprep.mubr.f32.mxu0 0.0
      %v507 = vand.u32 %v428, 4294901760
      %v508 = vsub.f32 %v428, %v507
      %v509 = vand.u32 %v508, 4294901760
      %v510 = vsub.f32 %v508, %v509
      %v511 = vand.u32 %v510, 4294901760
      %512 = vmatmul.mubr.f32.gmra.mrb[0].mxu0 %v511
      %v513 = vpop.f32.mrb[0].mxu0
      %v514 = vadd.f32 %v421, %v513
      %v515 = vpop.f32.mrb[0].mxu0
      %516 = vdwg.mxu0
      %517 = vmatprep.subr.mxu0 0.0
      %v518 = vand.u32 %v414, 4294901760
      %v519 = vsub.f32 %v414, %v518
      %v520 = vand.u32 %v519, 4294901760
      %v521 = vsub.f32 %v519, %v520
      %v522 = vand.u32 %v521, 4294901760
      %523 = vmatpush1.msra.mxu0 %v522
      %524 = vmatprep.subr.mxu0 0.0
      %v525 = vand.u32 %v415, 4294901760
      %v526 = vsub.f32 %v415, %v525
      %v527 = vand.u32 %v526, 4294901760
      %v528 = vsub.f32 %v526, %v527
      %v529 = vand.u32 %v528, 4294901760
      %530 = vmatpush1.msra.mxu0 %v529
      %531 = vmatprep.subr.mxu0 0.0
      %532 = vmatpush1.msra.mxu0 0.0
      %533 = vmatprep.subr.mxu0 0.0
      %534 = vmatpush1.msra.mxu0 0.0
      %535 = vmatprep.subr.mxu0 0.0
      %536 = vmatpush1.msra.mxu0 0.0
      %537 = vmatprep.subr.mxu0 0.0
      %538 = vmatpush1.msra.mxu0 0.0
      %539 = vmatprep.subr.mxu0 0.0
      %540 = vmatpush1.msra.mxu0 0.0
      %541 = vmatprep.subr.mxu0 0.0
      %542 = vmatpush1.msra.mxu0 0.0
      %543 = vmatprep.subr.mxu0 0.0
      %544 = vmatpush1.msra.mxu0 0.0
      %545 = vmatprep.subr.mxu0 0.0
      %546 = vmatpush1.msra.mxu0 0.0
      %547 = vmatprep.subr.mxu0 0.0
      %548 = vmatpush1.msra.mxu0 0.0
      %549 = vmatprep.subr.mxu0 0.0
      %550 = vmatpush1.msra.mxu0 0.0
      %551 = vmatprep.subr.mxu0 0.0
      %552 = vmatpush1.msra.mxu0 0.0
      %553 = vmatprep.subr.mxu0 0.0
      %554 = vmatpush1.msra.mxu0 0.0
      %555 = vmatprep.subr.mxu0 0.0
      %556 = vmatpush1.msra.mxu0 0.0
      %557 = vmatprep.subr.mxu0 0.0
      %558 = vmatpush1.msra.mxu0 0.0
      %559 = vmatprep.subr.mxu0 0.0
      %560 = vmatpush1.msra.mxu0 0.0
      %561 = vmatprep.subr.mxu0 0.0
      %562 = vmatpush1.msra.mxu0 0.0
      %563 = vmatprep.subr.mxu0 0.0
      %564 = vmatpush1.msra.mxu0 0.0
      %565 = vmatprep.subr.mxu0 0.0
      %566 = vmatpush1.msra.mxu0 0.0
      %567 = vmatprep.subr.mxu0 0.0
      %568 = vmatpush1.msra.mxu0 0.0
      %569 = vmatprep.subr.mxu0 0.0
      %570 = vmatpush1.msra.mxu0 0.0
      %571 = vmatprep.subr.mxu0 0.0
      %572 = vmatpush1.msra.mxu0 0.0
      %573 = vmatprep.subr.mxu0 0.0
      %574 = vmatpush1.msra.mxu0 0.0
      %575 = vmatprep.subr.mxu0 0.0
      %576 = vmatpush1.msra.mxu0 0.0
      %577 = vmatprep.subr.mxu0 0.0
      %578 = vmatpush1.msra.mxu0 0.0
      %579 = vmatprep.subr.mxu0 0.0
      %580 = vmatpush1.msra.mxu0 0.0
      %581 = vmatprep.subr.mxu0 0.0
      %582 = vmatpush1.msra.mxu0 0.0
      %583 = vmatprep.subr.mxu0 0.0
      %584 = vmatpush1.msra.mxu0 0.0
      %585 = vmatprep.subr.mxu0 0.0
      %586 = vmatpush1.msra.mxu0 0.0
      %587 = vmatprep.subr.mxu0 0.0
      %588 = vmatpush1.msra.mxu0 0.0
      %589 = vmatprep.subr.mxu0 0.0
      %590 = vmatpush1.msra.mxu0 0.0
      %591 = vmatprep.mubr.f32.mxu0 0.0
      %v592 = vand.u32 %v425, 4294901760
      %593 = vmatmul.mubr.f32.gmra.mrb[0].mxu0 %v592
      %v594 = vpop.f32.mrb[0].mxu0
      %v595 = vadd.f32 %v504, %v594
      %v596 = vpop.f32.mrb[0].mxu0
      %597 = vmatprep.mubr.f32.mxu0 0.0
      %v598 = vand.u32 %v428, 4294901760
      %599 = vmatmul.mubr.f32.gmra.mrb[0].mxu0 %v598
      %v600 = vpop.f32.mrb[0].mxu0
      %v601 = vadd.f32 %v514, %v600
      %v602 = vpop.f32.mrb[0].mxu0
      %603 = vdwg.mxu0
      %604 = vmatprep.subr.mxu0 0.0
      %v605 = vand.u32 %v414, 4294901760
      %v606 = vsub.f32 %v414, %v605
      %607 = vmatpush1.msra.mxu0 %v606
      %608 = vmatprep.subr.mxu0 0.0
      %v609 = vand.u32 %v415, 4294901760
      %v610 = vsub.f32 %v415, %v609
      %611 = vmatpush1.msra.mxu0 %v610
      %612 = vmatprep.subr.mxu0 0.0
      %613 = vmatpush1.msra.mxu0 0.0
      %614 = vmatprep.subr.mxu0 0.0
      %615 = vmatpush1.msra.mxu0 0.0
      %616 = vmatprep.subr.mxu0 0.0
      %617 = vmatpush1.msra.mxu0 0.0
      %618 = vmatprep.subr.mxu0 0.0
      %619 = vmatpush1.msra.mxu0 0.0
      %620 = vmatprep.subr.mxu0 0.0
      %621 = vmatpush1.msra.mxu0 0.0
      %622 = vmatprep.subr.mxu0 0.0
      %623 = vmatpush1.msra.mxu0 0.0
      %624 = vmatprep.subr.mxu0 0.0
      %625 = vmatpush1.msra.mxu0 0.0
      %626 = vmatprep.subr.mxu0 0.0
      %627 = vmatpush1.msra.mxu0 0.0
      %628 = vmatprep.subr.mxu0 0.0
      %629 = vmatpush1.msra.mxu0 0.0
      %630 = vmatprep.subr.mxu0 0.0
      %631 = vmatpush1.msra.mxu0 0.0
      %632 = vmatprep.subr.mxu0 0.0
      %633 = vmatpush1.msra.mxu0 0.0
      %634 = vmatprep.subr.mxu0 0.0
      %635 = vmatpush1.msra.mxu0 0.0
      %636 = vmatprep.subr.mxu0 0.0
      %637 = vmatpush1.msra.mxu0 0.0
      %638 = vmatprep.subr.mxu0 0.0
      %639 = vmatpush1.msra.mxu0 0.0
      %640 = vmatprep.subr.mxu0 0.0
      %641 = vmatpush1.msra.mxu0 0.0
      %642 = vmatprep.subr.mxu0 0.0
      %643 = vmatpush1.msra.mxu0 0.0
      %644 = vmatprep.subr.mxu0 0.0
      %645 = vmatpush1.msra.mxu0 0.0
      %646 = vmatprep.subr.mxu0 0.0
      %647 = vmatpush1.msra.mxu0 0.0
      %648 = vmatprep.subr.mxu0 0.0
      %649 = vmatpush1.msra.mxu0 0.0
      %650 = vmatprep.subr.mxu0 0.0
      %651 = vmatpush1.msra.mxu0 0.0
      %652 = vmatprep.subr.mxu0 0.0
      %653 = vmatpush1.msra.mxu0 0.0
      %654 = vmatprep.subr.mxu0 0.0
      %655 = vmatpush1.msra.mxu0 0.0
      %656 = vmatprep.subr.mxu0 0.0
      %657 = vmatpush1.msra.mxu0 0.0
      %658 = vmatprep.subr.mxu0 0.0
      %659 = vmatpush1.msra.mxu0 0.0
      %660 = vmatprep.subr.mxu0 0.0
      %661 = vmatpush1.msra.mxu0 0.0
      %662 = vmatprep.subr.mxu0 0.0
      %663 = vmatpush1.msra.mxu0 0.0
      %664 = vmatprep.subr.mxu0 0.0
      %665 = vmatpush1.msra.mxu0 0.0
      %666 = vmatprep.subr.mxu0 0.0
      %667 = vmatpush1.msra.mxu0 0.0
      %668 = vmatprep.subr.mxu0 0.0
      %669 = vmatpush1.msra.mxu0 0.0
      %670 = vmatprep.subr.mxu0 0.0
      %671 = vmatpush1.msra.mxu0 0.0
      %672 = vmatprep.mubr.f32.mxu0 0.0
      %v673 = vand.u32 %v425, 4294901760
      %v674 = vsub.f32 %v425, %v673
      %675 = vmatmul.mubr.f32.gmra.mrb[0].mxu0 %v674
      %v676 = vpop.f32.mrb[0].mxu0
      %v677 = vadd.f32 %v595, %v676
      %v678 = vpop.f32.mrb[0].mxu0
      %679 = vmatprep.mubr.f32.mxu0 0.0
      %v680 = vand.u32 %v428, 4294901760
      %v681 = vsub.f32 %v428, %v680
      %682 = vmatmul.mubr.f32.gmra.mrb[0].mxu0 %v681
      %v683 = vpop.f32.mrb[0].mxu0
      %v684 = vadd.f32 %v601, %v683
      %v685 = vpop.f32.mrb[0].mxu0
      %686 = vdwg.mxu0
      %687 = vmatprep.subr.mxu0 0.0
      %v688 = vand.u32 %v414, 4294901760
      %689 = vmatpush1.msra.mxu0 %v688
      %690 = vmatprep.subr.mxu0 0.0
      %v691 = vand.u32 %v415, 4294901760
      %692 = vmatpush1.msra.mxu0 %v691
      %693 = vmatprep.subr.mxu0 0.0
      %694 = vmatpush1.msra.mxu0 0.0
      %695 = vmatprep.subr.mxu0 0.0
      %696 = vmatpush1.msra.mxu0 0.0
      %697 = vmatprep.subr.mxu0 0.0
      %698 = vmatpush1.msra.mxu0 0.0
      %699 = vmatprep.subr.mxu0 0.0
      %700 = vmatpush1.msra.mxu0 0.0
      %701 = vmatprep.subr.mxu0 0.0
      %702 = vmatpush1.msra.mxu0 0.0
      %703 = vmatprep.subr.mxu0 0.0
      %704 = vmatpush1.msra.mxu0 0.0
      %705 = vmatprep.subr.mxu0 0.0
      %706 = vmatpush1.msra.mxu0 0.0
      %707 = vmatprep.subr.mxu0 0.0
      %708 = vmatpush1.msra.mxu0 0.0
      %709 = vmatprep.subr.mxu0 0.0
      %710 = vmatpush1.msra.mxu0 0.0
      %711 = vmatprep.subr.mxu0 0.0
      %712 = vmatpush1.msra.mxu0 0.0
      %713 = vmatprep.subr.mxu0 0.0
      %714 = vmatpush1.msra.mxu0 0.0
      %715 = vmatprep.subr.mxu0 0.0
      %716 = vmatpush1.msra.mxu0 0.0
      %717 = vmatprep.subr.mxu0 0.0
      %718 = vmatpush1.msra.mxu0 0.0
      %719 = vmatprep.subr.mxu0 0.0
      %720 = vmatpush1.msra.mxu0 0.0
      %721 = vmatprep.subr.mxu0 0.0
      %722 = vmatpush1.msra.mxu0 0.0
      %723 = vmatprep.subr.mxu0 0.0
      %724 = vmatpush1.msra.mxu0 0.0
      %725 = vmatprep.subr.mxu0 0.0
      %726 = vmatpush1.msra.mxu0 0.0
      %727 = vmatprep.subr.mxu0 0.0
      %728 = vmatpush1.msra.mxu0 0.0
      %729 = vmatprep.subr.mxu0 0.0
      %730 = vmatpush1.msra.mxu0 0.0
      %731 = vmatprep.subr.mxu0 0.0
      %732 = vmatpush1.msra.mxu0 0.0
      %733 = vmatprep.subr.mxu0 0.0
      %734 = vmatpush1.msra.mxu0 0.0
      %735 = vmatprep.subr.mxu0 0.0
      %736 = vmatpush1.msra.mxu0 0.0
      %737 = vmatprep.subr.mxu0 0.0
      %738 = vmatpush1.msra.mxu0 0.0
      %739 = vmatprep.subr.mxu0 0.0
      %740 = vmatpush1.msra.mxu0 0.0
      %741 = vmatprep.subr.mxu0 0.0
      %742 = vmatpush1.msra.mxu0 0.0
      %743 = vmatprep.subr.mxu0 0.0
      %744 = vmatpush1.msra.mxu0 0.0
      %745 = vmatprep.subr.mxu0 0.0
      %746 = vmatpush1.msra.mxu0 0.0
      %747 = vmatprep.subr.mxu0 0.0
      %748 = vmatpush1.msra.mxu0 0.0
      %749 = vmatprep.subr.mxu0 0.0
      %750 = vmatpush1.msra.mxu0 0.0
      %751 = vmatprep.subr.mxu0 0.0
      %752 = vmatpush1.msra.mxu0 0.0
      %753 = vmatprep.mubr.f32.mxu0 0.0
      %v754 = vand.u32 %v425, 4294901760
      %v755 = vsub.f32 %v425, %v754
      %v756 = vand.u32 %v755, 4294901760
      %757 = vmatmul.mubr.f32.gmra.mrb[0].mxu0 %v756
      %v758 = vpop.f32.mrb[0].mxu0
      %v759 = vadd.f32 %v677, %v758
      %v760 = vpop.f32.mrb[0].mxu0
      %761 = vmatprep.mubr.f32.mxu0 0.0
      %v762 = vand.u32 %v428, 4294901760
      %v763 = vsub.f32 %v428, %v762
      %v764 = vand.u32 %v763, 4294901760
      %765 = vmatmul.mubr.f32.gmra.mrb[0].mxu0 %v764
      %v766 = vpop.f32.mrb[0].mxu0
      %v767 = vadd.f32 %v684, %v766
      %v768 = vpop.f32.mrb[0].mxu0
      %769 = vdwg.mxu0
      %770 = vmatprep.subr.mxu0 0.0
      %v771 = vand.u32 %v414, 4294901760
      %v772 = vsub.f32 %v414, %v771
      %v773 = vand.u32 %v772, 4294901760
      %774 = vmatpush1.msra.mxu0 %v773
      %775 = vmatprep.subr.mxu0 0.0
      %v776 = vand.u32 %v415, 4294901760
      %v777 = vsub.f32 %v415, %v776
      %v778 = vand.u32 %v777, 4294901760
      %779 = vmatpush1.msra.mxu0 %v778
      %780 = vmatprep.subr.mxu0 0.0
      %781 = vmatpush1.msra.mxu0 0.0
      %782 = vmatprep.subr.mxu0 0.0
      %783 = vmatpush1.msra.mxu0 0.0
      %784 = vmatprep.subr.mxu0 0.0
      %785 = vmatpush1.msra.mxu0 0.0
      %786 = vmatprep.subr.mxu0 0.0
      %787 = vmatpush1.msra.mxu0 0.0
      %788 = vmatprep.subr.mxu0 0.0
      %789 = vmatpush1.msra.mxu0 0.0
      %790 = vmatprep.subr.mxu0 0.0
      %791 = vmatpush1.msra.mxu0 0.0
      %792 = vmatprep.subr.mxu0 0.0
      %793 = vmatpush1.msra.mxu0 0.0
      %794 = vmatprep.subr.mxu0 0.0
      %795 = vmatpush1.msra.mxu0 0.0
      %796 = vmatprep.subr.mxu0 0.0
      %797 = vmatpush1.msra.mxu0 0.0
      %798 = vmatprep.subr.mxu0 0.0
      %799 = vmatpush1.msra.mxu0 0.0
      %800 = vmatprep.subr.mxu0 0.0
      %801 = vmatpush1.msra.mxu0 0.0
      %802 = vmatprep.subr.mxu0 0.0
      %803 = vmatpush1.msra.mxu0 0.0
      %804 = vmatprep.subr.mxu0 0.0
      %805 = vmatpush1.msra.mxu0 0.0
      %806 = vmatprep.subr.mxu0 0.0
      %807 = vmatpush1.msra.mxu0 0.0
      %808 = vmatprep.subr.mxu0 0.0
      %809 = vmatpush1.msra.mxu0 0.0
      %810 = vmatprep.subr.mxu0 0.0
      %811 = vmatpush1.msra.mxu0 0.0
      %812 = vmatprep.subr.mxu0 0.0
      %813 = vmatpush1.msra.mxu0 0.0
      %814 = vmatprep.subr.mxu0 0.0
      %815 = vmatpush1.msra.mxu0 0.0
      %816 = vmatprep.subr.mxu0 0.0
      %817 = vmatpush1.msra.mxu0 0.0
      %818 = vmatprep.subr.mxu0 0.0
      %819 = vmatpush1.msra.mxu0 0.0
      %820 = vmatprep.subr.mxu0 0.0
      %821 = vmatpush1.msra.mxu0 0.0
      %822 = vmatprep.subr.mxu0 0.0
      %823 = vmatpush1.msra.mxu0 0.0
      %824 = vmatprep.subr.mxu0 0.0
      %825 = vmatpush1.msra.mxu0 0.0
      %826 = vmatprep.subr.mxu0 0.0
      %827 = vmatpush1.msra.mxu0 0.0
      %828 = vmatprep.subr.mxu0 0.0
      %829 = vmatpush1.msra.mxu0 0.0
      %830 = vmatprep.subr.mxu0 0.0
      %831 = vmatpush1.msra.mxu0 0.0
      %832 = vmatprep.subr.mxu0 0.0
      %833 = vmatpush1.msra.mxu0 0.0
      %834 = vmatprep.subr.mxu0 0.0
      %835 = vmatpush1.msra.mxu0 0.0
      %836 = vmatprep.subr.mxu0 0.0
      %837 = vmatpush1.msra.mxu0 0.0
      %838 = vmatprep.subr.mxu0 0.0
      %839 = vmatpush1.msra.mxu0 0.0
      %840 = vmatprep.mubr.f32.mxu0 0.0
      %v841 = vand.u32 %v425, 4294901760
      %842 = vmatmul.mubr.f32.gmra.mrb[0].mxu0 %v841
      %v843 = vpop.f32.mrb[0].mxu0
      %v844 = vadd.f32 %v759, %v843
      %v845 = vpop.f32.mrb[0].mxu0
      %846 = vmatprep.mubr.f32.mxu0 0.0
      %v847 = vand.u32 %v428, 4294901760
      %848 = vmatmul.mubr.f32.gmra.mrb[0].mxu0 %v847
      %v849 = vpop.f32.mrb[0].mxu0
      %v850 = vadd.f32 %v767, %v849
      %v851 = vpop.f32.mrb[0].mxu0
      %852 = vdwg.mxu0
      %853 = vmatprep.subr.mxu0 0.0
      %v854 = vand.u32 %v414, 4294901760
      %855 = vmatpush1.msra.mxu0 %v854
      %856 = vmatprep.subr.mxu0 0.0
      %v857 = vand.u32 %v415, 4294901760
      %858 = vmatpush1.msra.mxu0 %v857
      %859 = vmatprep.subr.mxu0 0.0
      %860 = vmatpush1.msra.mxu0 0.0
      %861 = vmatprep.subr.mxu0 0.0
      %862 = vmatpush1.msra.mxu0 0.0
      %863 = vmatprep.subr.mxu0 0.0
      %864 = vmatpush1.msra.mxu0 0.0
      %865 = vmatprep.subr.mxu0 0.0
      %866 = vmatpush1.msra.mxu0 0.0
      %867 = vmatprep.subr.mxu0 0.0
      %868 = vmatpush1.msra.mxu0 0.0
      %869 = vmatprep.subr.mxu0 0.0
      %870 = vmatpush1.msra.mxu0 0.0
      %871 = vmatprep.subr.mxu0 0.0
      %872 = vmatpush1.msra.mxu0 0.0
      %873 = vmatprep.subr.mxu0 0.0
      %874 = vmatpush1.msra.mxu0 0.0
      %875 = vmatprep.subr.mxu0 0.0
      %876 = vmatpush1.msra.mxu0 0.0
      %877 = vmatprep.subr.mxu0 0.0
      %878 = vmatpush1.msra.mxu0 0.0
      %879 = vmatprep.subr.mxu0 0.0
      %880 = vmatpush1.msra.mxu0 0.0
      %881 = vmatprep.subr.mxu0 0.0
      %882 = vmatpush1.msra.mxu0 0.0
      %883 = vmatprep.subr.mxu0 0.0
      %884 = vmatpush1.msra.mxu0 0.0
      %885 = vmatprep.subr.mxu0 0.0
      %886 = vmatpush1.msra.mxu0 0.0
      %887 = vmatprep.subr.mxu0 0.0
      %888 = vmatpush1.msra.mxu0 0.0
      %889 = vmatprep.subr.mxu0 0.0
      %890 = vmatpush1.msra.mxu0 0.0
      %891 = vmatprep.subr.mxu0 0.0
      %892 = vmatpush1.msra.mxu0 0.0
      %893 = vmatprep.subr.mxu0 0.0
      %894 = vmatpush1.msra.mxu0 0.0
      %895 = vmatprep.subr.mxu0 0.0
      %896 = vmatpush1.msra.mxu0 0.0
      %897 = vmatprep.subr.mxu0 0.0
      %898 = vmatpush1.msra.mxu0 0.0
      %899 = vmatprep.subr.mxu0 0.0
      %900 = vmatpush1.msra.mxu0 0.0
      %901 = vmatprep.subr.mxu0 0.0
      %902 = vmatpush1.msra.mxu0 0.0
      %903 = vmatprep.subr.mxu0 0.0
      %904 = vmatpush1.msra.mxu0 0.0
      %905 = vmatprep.subr.mxu0 0.0
      %906 = vmatpush1.msra.mxu0 0.0
      %907 = vmatprep.subr.mxu0 0.0
      %908 = vmatpush1.msra.mxu0 0.0
      %909 = vmatprep.subr.mxu0 0.0
      %910 = vmatpush1.msra.mxu0 0.0
      %911 = vmatprep.subr.mxu0 0.0
      %912 = vmatpush1.msra.mxu0 0.0
      %913 = vmatprep.subr.mxu0 0.0
      %914 = vmatpush1.msra.mxu0 0.0
      %915 = vmatprep.subr.mxu0 0.0
      %916 = vmatpush1.msra.mxu0 0.0
      %917 = vmatprep.subr.mxu0 0.0
      %918 = vmatpush1.msra.mxu0 0.0
      %919 = vmatprep.mubr.f32.mxu0 0.0
      %v920 = vand.u32 %v425, 4294901760
      %921 = vmatmul.mubr.f32.gmra.mrb[0].mxu0 %v920
      %v922 = vpop.f32.mrb[0].mxu0
      %v923 = vadd.f32 %v844, %v922
      %v924 = vpop.f32.mrb[0].mxu0
      %925 = vmatprep.mubr.f32.mxu0 0.0
      %v926 = vand.u32 %v428, 4294901760
      %927 = vmatmul.mubr.f32.gmra.mrb[0].mxu0 %v926
      %v928 = vpop.f32.mrb[0].mxu0
      %v929 = vadd.f32 %v850, %v928
      %v930 = vpop.f32.mrb[0].mxu0
      %931 = vdwg.mxu0
      %v932 = vmul.f32 %v923, 0.5
      %v933 = vmul.f32 %v929, 0.5
      %v934 = vmul.f32 %v923, 0.70710677
      %v935 = vmul.f32 %v929, 0.70710677
      %v936 = verf.f32.pop %v934
      %v937 = verf.f32.pop %v935
      %v938 = vadd.f32 %v936, 1.0
      %v939 = vadd.f32 %v937, 1.0
      %v940 = vmul.f32 %v932, %v938
      %v941 = vmul.f32 %v933, %v939
      %944 = vrot.lane.b32.xlu0 %v940, 96
      %v945 = vpop.permute.xlu0 %944
      %946 = vrot.lane.b32.xlu0 %v941, 96
      %v947 = vpop.permute.xlu0 %946
      %vm950 = vcmask 261120
      %v951 = vsel %vm950, %v945, 0.0
      %952 = vadd.xlane.f32.xlu0 %v951
      %v953 = vpop.xlane.xlu0 %952
      %v954 = vsel %vm950, %v947, 0.0
      %955 = vadd.xlane.f32.xlu0 %v954
      %v956 = vpop.xlane.xlu0 %955
      %v957 = vrcp.pop 32.0
      %v958 = vmul.f32 %v953, %v957
      %v959 = vmul.f32 %v956, %v957
      %v960 = vsub.f32 %v940, %v958
      %v961 = vsub.f32 %v941, %v959
      %v962 = vmul.f32 %v960, %v960
      %v963 = vmul.f32 %v961, %v961
      %966 = vrot.lane.b32.xlu0 %v962, 96
      %v967 = vpop.permute.xlu0 %966
      %968 = vrot.lane.b32.xlu0 %v963, 96
      %v969 = vpop.permute.xlu0 %968
      %v972 = vsel %vm950, %v967, 0.0
      %973 = vadd.xlane.f32.xlu0 %v972
      %v974 = vpop.xlane.xlu0 %973
      %v975 = vsel %vm950, %v969, 0.0
      %976 = vadd.xlane.f32.xlu0 %v975
      %v977 = vpop.xlane.xlu0 %976
      %v978 = vmul.f32 %v974, %v957
      %v979 = vmul.f32 %v977, %v957
      %v980 = vadd.f32 %v978, 1e-05
      %v981 = vadd.f32 %v979, 1e-05
      %v982 = vrsqrt.pop %v980
      %v983 = vrsqrt.pop %v981
      %v984 = vmul.f32 %v960, %v982
      %v985 = vmul.f32 %v961, %v983
      %v986 = vld [vmem:[%s4] sm:$0x1]
      %v988 = vlaneseq
      %v989 = vshrl.u32 %v988, 7
      %v990 = vsub.s32 0, %v989
      %v991 = vrot.slane %v986, %v990
      %992 = vrot.lane.b32.xlu0 %v991, 32
      %v993 = vpop.permute.xlu0 %992
      %v995 = vmul.f32 %v984, %v993
      %v996 = vmul.f32 %v985, %v993
      %v997 = vld [vmem:[%s5] sm:$0x1]
      %v999 = vlaneseq
      %v1000 = vshrl.u32 %v999, 7
      %v1001 = vsub.s32 0, %v1000
      %v1002 = vrot.slane %v997, %v1001
      %1003 = vrot.lane.b32.xlu0 %v1002, 32
      %v1004 = vpop.permute.xlu0 %1003
      %v1006 = vadd.f32 %v995, %v1004
      %v1007 = vadd.f32 %v996, %v1004
      %v1008 = vld [vmem:[%s404] sm:$0xff]
      %v1009 = vld [vmem:[%s404 + $0x8] sm:$0xff]
      %v1010 = vsub.f32 1.0, %v1008
      %v1011 = vsub.f32 1.0, %v1009
      %v1012 = vld [vmem:[%s6] sm:$0xff]
      %v1013 = vld [vmem:[%s6 + $0x8] sm:$0xff]
      %1015 = vset.pattern.permute.xlu0 0
      %1016 = vperm.xlu0 %1015, %v1010
      %v1017 = vpop.permute.xlu0 %1016
      %1020 = vset.pattern.permute.xlu0 0
      %1021 = vperm.xlu0 %1020, %v1011
      %v1022 = vpop.permute.xlu0 %1021
      %v1024 = vmul.f32 %v1017, %v1012
      %v1025 = vmul.f32 %v1022, %v1013
      %1028 = vrot.lane.b32.xlu0 %v1024, 32
      %v1029 = vpop.permute.xlu0 %1028
      %1030 = vrot.lane.b32.xlu0 %v1025, 32
      %v1031 = vpop.permute.xlu0 %1030
      %v1034 = vadd.f32 %v1006, %v1029
      %v1035 = vadd.f32 %v1007, %v1031
      %s1036 = scalar_lea.vmem %s6, 16
      %v1037 = vld [vmem:[%s1036] sm:$0xff]
      %v1038 = vld [vmem:[%s1036 + $0x8] sm:$0xff]
      %1039 = vset.pattern.permute.xlu0 1
      %1040 = vperm.xlu0 %1039, %v1010
      %v1041 = vpop.permute.xlu0 %1040
      %1043 = vset.pattern.permute.xlu0 1
      %1044 = vperm.xlu0 %1043, %v1011
      %v1045 = vpop.permute.xlu0 %1044
      %v1047 = vmul.f32 %v1041, %v1037
      %v1048 = vmul.f32 %v1045, %v1038
      %1051 = vrot.lane.b32.xlu0 %v1047, 32
      %v1052 = vpop.permute.xlu0 %1051
      %1053 = vrot.lane.b32.xlu0 %v1048, 32
      %v1054 = vpop.permute.xlu0 %1053
      %v1057 = vadd.f32 %v1034, %v1052
      %v1058 = vadd.f32 %v1035, %v1054
      %s1059 = scalar_lea.vmem %s6, 32
      %v1060 = vld [vmem:[%s1059] sm:$0xff]
      %v1061 = vld [vmem:[%s1059 + $0x8] sm:$0xff]
      %1062 = vset.pattern.permute.xlu0 2
      %1063 = vperm.xlu0 %1062, %v1010
      %v1064 = vpop.permute.xlu0 %1063
      %1066 = vset.pattern.permute.xlu0 2
      %1067 = vperm.xlu0 %1066, %v1011
      %v1068 = vpop.permute.xlu0 %1067
      %v1070 = vmul.f32 %v1064, %v1060
      %v1071 = vmul.f32 %v1068, %v1061
      %1074 = vrot.lane.b32.xlu0 %v1070, 32
      %v1075 = vpop.permute.xlu0 %1074
      %1076 = vrot.lane.b32.xlu0 %v1071, 32
      %v1077 = vpop.permute.xlu0 %1076
      %v1080 = vadd.f32 %v1057, %v1075
      %v1081 = vadd.f32 %v1058, %v1077
      %s1082 = scalar_lea.vmem %s6, 48
      %v1083 = vld [vmem:[%s1082] sm:$0xff]
      %v1084 = vld [vmem:[%s1082 + $0x8] sm:$0xff]
      %1085 = vset.pattern.permute.xlu0 3
      %1086 = vperm.xlu0 %1085, %v1010
      %v1087 = vpop.permute.xlu0 %1086
      %1089 = vset.pattern.permute.xlu0 3
      %1090 = vperm.xlu0 %1089, %v1011
      %v1091 = vpop.permute.xlu0 %1090
      %v1093 = vmul.f32 %v1087, %v1083
      %v1094 = vmul.f32 %v1091, %v1084
      %1097 = vrot.lane.b32.xlu0 %v1093, 32
      %v1098 = vpop.permute.xlu0 %1097
      %1099 = vrot.lane.b32.xlu0 %v1094, 32
      %v1100 = vpop.permute.xlu0 %1099
      %v1103 = vadd.f32 %v1080, %v1098
      %v1104 = vadd.f32 %v1081, %v1100
      %s1105 = scalar_lea.vmem %s6, 64
      %v1106 = vld [vmem:[%s1105] sm:$0xff]
      %v1107 = vld [vmem:[%s1105 + $0x8] sm:$0xff]
      %1108 = vset.pattern.permute.xlu0 4
      %1109 = vperm.xlu0 %1108, %v1010
      %v1110 = vpop.permute.xlu0 %1109
      %1112 = vset.pattern.permute.xlu0 4
      %1113 = vperm.xlu0 %1112, %v1011
      %v1114 = vpop.permute.xlu0 %1113
      %v1116 = vmul.f32 %v1110, %v1106
      %v1117 = vmul.f32 %v1114, %v1107
      %1120 = vrot.lane.b32.xlu0 %v1116, 32
      %v1121 = vpop.permute.xlu0 %1120
      %1122 = vrot.lane.b32.xlu0 %v1117, 32
      %v1123 = vpop.permute.xlu0 %1122
      %v1126 = vadd.f32 %v1103, %v1121
      %v1127 = vadd.f32 %v1104, %v1123
      %s1128 = scalar_lea.vmem %s6, 80
      %v1129 = vld [vmem:[%s1128] sm:$0xff]
      %v1130 = vld [vmem:[%s1128 + $0x8] sm:$0xff]
      %1131 = vset.pattern.permute.xlu0 5
      %1132 = vperm.xlu0 %1131, %v1010
      %v1133 = vpop.permute.xlu0 %1132
      %1135 = vset.pattern.permute.xlu0 5
      %1136 = vperm.xlu0 %1135, %v1011
      %v1137 = vpop.permute.xlu0 %1136
      %v1139 = vmul.f32 %v1133, %v1129
      %v1140 = vmul.f32 %v1137, %v1130
      %1143 = vrot.lane.b32.xlu0 %v1139, 32
      %v1144 = vpop.permute.xlu0 %1143
      %1145 = vrot.lane.b32.xlu0 %v1140, 32
      %v1146 = vpop.permute.xlu0 %1145
      %v1149 = vadd.f32 %v1126, %v1144
      %v1150 = vadd.f32 %v1127, %v1146
      %s1151 = scalar_lea.vmem %s6, 96
      %v1152 = vld [vmem:[%s1151] sm:$0xff]
      %v1153 = vld [vmem:[%s1151 + $0x8] sm:$0xff]
      %1154 = vset.pattern.permute.xlu0 6
      %1155 = vperm.xlu0 %1154, %v1010
      %v1156 = vpop.permute.xlu0 %1155
      %1158 = vset.pattern.permute.xlu0 6
      %1159 = vperm.xlu0 %1158, %v1011
      %v1160 = vpop.permute.xlu0 %1159
      %v1162 = vmul.f32 %v1156, %v1152
      %v1163 = vmul.f32 %v1160, %v1153
      %1166 = vrot.lane.b32.xlu0 %v1162, 32
      %v1167 = vpop.permute.xlu0 %1166
      %1168 = vrot.lane.b32.xlu0 %v1163, 32
      %v1169 = vpop.permute.xlu0 %1168
      %v1172 = vadd.f32 %v1149, %v1167
      %v1173 = vadd.f32 %v1150, %v1169
      %v1174 = vld [vmem:[%s10] sm:$0x1]
      %v1176 = vlaneseq
      %v1177 = vshrl.u32 %v1176, 7
      %v1178 = vsub.s32 0, %v1177
      %v1179 = vrot.slane %v1174, %v1178
      %v1181 = vadd.f32 %v1179, 0.0
      %v1182 = vld [vmem:[%s7] sm:$0xff]
      %v1183 = vld [vmem:[%s7 + $0x8] sm:$0xff]
      %v1184 = vld [vmem:[%s8] sm:$0xff]
      %v1185 = vld [vmem:[%s8 + $0x8] sm:$0xff]
      %1188 = vrot.lane.b32.xlu0 %v1172, 96
      %v1189 = vpop.permute.xlu0 %1188
      %1190 = vrot.lane.b32.xlu0 %v1173, 96
      %v1191 = vpop.permute.xlu0 %1190
      %v1195 = vsel %vm423, %v1182, 0
      %v1198 = vsel %vm423, %v1183, 0
      %1200 = vmatprep.subr.mxu0 0.0
      %v1201 = vand.u32 %v1189, 4294901760
      %1202 = vmatpush1.msra.mxu0 %v1201
      %1203 = vmatprep.subr.mxu0 0.0
      %v1204 = vand.u32 %v1191, 4294901760
      %1205 = vmatpush1.msra.mxu0 %v1204
      %1206 = vmatprep.subr.mxu0 0.0
      %1207 = vmatpush1.msra.mxu0 0.0
      %1208 = vmatprep.subr.mxu0 0.0
      %1209 = vmatpush1.msra.mxu0 0.0
      %1210 = vmatprep.subr.mxu0 0.0
      %1211 = vmatpush1.msra.mxu0 0.0
      %1212 = vmatprep.subr.mxu0 0.0
      %1213 = vmatpush1.msra.mxu0 0.0
      %1214 = vmatprep.subr.mxu0 0.0
      %1215 = vmatpush1.msra.mxu0 0.0
      %1216 = vmatprep.subr.mxu0 0.0
      %1217 = vmatpush1.msra.mxu0 0.0
      %1218 = vmatprep.subr.mxu0 0.0
      %1219 = vmatpush1.msra.mxu0 0.0
      %1220 = vmatprep.subr.mxu0 0.0
      %1221 = vmatpush1.msra.mxu0 0.0
      %1222 = vmatprep.subr.mxu0 0.0
      %1223 = vmatpush1.msra.mxu0 0.0
      %1224 = vmatprep.subr.mxu0 0.0
      %1225 = vmatpush1.msra.mxu0 0.0
      %1226 = vmatprep.subr.mxu0 0.0
      %1227 = vmatpush1.msra.mxu0 0.0
      %1228 = vmatprep.subr.mxu0 0.0
      %1229 = vmatpush1.msra.mxu0 0.0
      %1230 = vmatprep.subr.mxu0 0.0
      %1231 = vmatpush1.msra.mxu0 0.0
      %1232 = vmatprep.subr.mxu0 0.0
      %1233 = vmatpush1.msra.mxu0 0.0
      %1234 = vmatprep.subr.mxu0 0.0
      %1235 = vmatpush1.msra.mxu0 0.0
      %1236 = vmatprep.subr.mxu0 0.0
      %1237 = vmatpush1.msra.mxu0 0.0
      %1238 = vmatprep.subr.mxu0 0.0
      %1239 = vmatpush1.msra.mxu0 0.0
      %1240 = vmatprep.subr.mxu0 0.0
      %1241 = vmatpush1.msra.mxu0 0.0
      %1242 = vmatprep.subr.mxu0 0.0
      %1243 = vmatpush1.msra.mxu0 0.0
      %1244 = vmatprep.subr.mxu0 0.0
      %1245 = vmatpush1.msra.mxu0 0.0
      %1246 = vmatprep.subr.mxu0 0.0
      %1247 = vmatpush1.msra.mxu0 0.0
      %1248 = vmatprep.subr.mxu0 0.0
      %1249 = vmatpush1.msra.mxu0 0.0
      %1250 = vmatprep.subr.mxu0 0.0
      %1251 = vmatpush1.msra.mxu0 0.0
      %1252 = vmatprep.subr.mxu0 0.0
      %1253 = vmatpush1.msra.mxu0 0.0
      %1254 = vmatprep.subr.mxu0 0.0
      %1255 = vmatpush1.msra.mxu0 0.0
      %1256 = vmatprep.subr.mxu0 0.0
      %1257 = vmatpush1.msra.mxu0 0.0
      %1258 = vmatprep.subr.mxu0 0.0
      %1259 = vmatpush1.msra.mxu0 0.0
      %1260 = vmatprep.subr.mxu0 0.0
      %1261 = vmatpush1.msra.mxu0 0.0
      %1262 = vmatprep.subr.mxu0 0.0
      %1263 = vmatpush1.msra.mxu0 0.0
      %1264 = vmatprep.subr.mxu0 0.0
      %1265 = vmatpush1.msra.mxu0 0.0
      %1266 = vmatprep.mubr.f32.mxu0 0.0
      %v1267 = vand.u32 %v1195, 4294901760
      %v1268 = vsub.f32 %v1195, %v1267
      %v1269 = vand.u32 %v1268, 4294901760
      %v1270 = vsub.f32 %v1268, %v1269
      %v1271 = vand.u32 %v1270, 4294901760
      %1272 = vmatmul.mubr.f32.gmra.mrb[0].mxu0 %v1271
      %v1273 = vpop.f32.mrb[0].mxu0
      %v1274 = vadd.f32 %v1184, %v1273
      %v1275 = vpop.f32.mrb[0].mxu0
      %1276 = vmatprep.mubr.f32.mxu0 0.0
      %v1277 = vand.u32 %v1198, 4294901760
      %v1278 = vsub.f32 %v1198, %v1277
      %v1279 = vand.u32 %v1278, 4294901760
      %v1280 = vsub.f32 %v1278, %v1279
      %v1281 = vand.u32 %v1280, 4294901760
      %1282 = vmatmul.mubr.f32.gmra.mrb[0].mxu0 %v1281
      %v1283 = vpop.f32.mrb[0].mxu0
      %v1284 = vadd.f32 %v1185, %v1283
      %v1285 = vpop.f32.mrb[0].mxu0
      %1286 = vdwg.mxu0
      %1287 = vmatprep.subr.mxu0 0.0
      %v1288 = vand.u32 %v1189, 4294901760
      %v1289 = vsub.f32 %v1189, %v1288
      %v1290 = vand.u32 %v1289, 4294901760
      %v1291 = vsub.f32 %v1289, %v1290
      %v1292 = vand.u32 %v1291, 4294901760
      %1293 = vmatpush1.msra.mxu0 %v1292
      %1294 = vmatprep.subr.mxu0 0.0
      %v1295 = vand.u32 %v1191, 4294901760
      %v1296 = vsub.f32 %v1191, %v1295
      %v1297 = vand.u32 %v1296, 4294901760
      %v1298 = vsub.f32 %v1296, %v1297
      %v1299 = vand.u32 %v1298, 4294901760
      %1300 = vmatpush1.msra.mxu0 %v1299
      %1301 = vmatprep.subr.mxu0 0.0
      %1302 = vmatpush1.msra.mxu0 0.0
      %1303 = vmatprep.subr.mxu0 0.0
      %1304 = vmatpush1.msra.mxu0 0.0
      %1305 = vmatprep.subr.mxu0 0.0
      %1306 = vmatpush1.msra.mxu0 0.0
      %1307 = vmatprep.subr.mxu0 0.0
      %1308 = vmatpush1.msra.mxu0 0.0
      %1309 = vmatprep.subr.mxu0 0.0
      %1310 = vmatpush1.msra.mxu0 0.0
      %1311 = vmatprep.subr.mxu0 0.0
      %1312 = vmatpush1.msra.mxu0 0.0
      %1313 = vmatprep.subr.mxu0 0.0
      %1314 = vmatpush1.msra.mxu0 0.0
      %1315 = vmatprep.subr.mxu0 0.0
      %1316 = vmatpush1.msra.mxu0 0.0
      %1317 = vmatprep.subr.mxu0 0.0
      %1318 = vmatpush1.msra.mxu0 0.0
      %1319 = vmatprep.subr.mxu0 0.0
      %1320 = vmatpush1.msra.mxu0 0.0
      %1321 = vmatprep.subr.mxu0 0.0
      %1322 = vmatpush1.msra.mxu0 0.0
      %1323 = vmatprep.subr.mxu0 0.0
      %1324 = vmatpush1.msra.mxu0 0.0
      %1325 = vmatprep.subr.mxu0 0.0
      %1326 = vmatpush1.msra.mxu0 0.0
      %1327 = vmatprep.subr.mxu0 0.0
      %1328 = vmatpush1.msra.mxu0 0.0
      %1329 = vmatprep.subr.mxu0 0.0
      %1330 = vmatpush1.msra.mxu0 0.0
      %1331 = vmatprep.subr.mxu0 0.0
      %1332 = vmatpush1.msra.mxu0 0.0
      %1333 = vmatprep.subr.mxu0 0.0
      %1334 = vmatpush1.msra.mxu0 0.0
      %1335 = vmatprep.subr.mxu0 0.0
      %1336 = vmatpush1.msra.mxu0 0.0
      %1337 = vmatprep.subr.mxu0 0.0
      %1338 = vmatpush1.msra.mxu0 0.0
      %1339 = vmatprep.subr.mxu0 0.0
      %1340 = vmatpush1.msra.mxu0 0.0
      %1341 = vmatprep.subr.mxu0 0.0
      %1342 = vmatpush1.msra.mxu0 0.0
      %1343 = vmatprep.subr.mxu0 0.0
      %1344 = vmatpush1.msra.mxu0 0.0
      %1345 = vmatprep.subr.mxu0 0.0
      %1346 = vmatpush1.msra.mxu0 0.0
      %1347 = vmatprep.subr.mxu0 0.0
      %1348 = vmatpush1.msra.mxu0 0.0
      %1349 = vmatprep.subr.mxu0 0.0
      %1350 = vmatpush1.msra.mxu0 0.0
      %1351 = vmatprep.subr.mxu0 0.0
      %1352 = vmatpush1.msra.mxu0 0.0
      %1353 = vmatprep.subr.mxu0 0.0
      %1354 = vmatpush1.msra.mxu0 0.0
      %1355 = vmatprep.subr.mxu0 0.0
      %1356 = vmatpush1.msra.mxu0 0.0
      %1357 = vmatprep.subr.mxu0 0.0
      %1358 = vmatpush1.msra.mxu0 0.0
      %1359 = vmatprep.subr.mxu0 0.0
      %1360 = vmatpush1.msra.mxu0 0.0
      %1361 = vmatprep.mubr.f32.mxu0 0.0
      %v1362 = vand.u32 %v1195, 4294901760
      %1363 = vmatmul.mubr.f32.gmra.mrb[0].mxu0 %v1362
      %v1364 = vpop.f32.mrb[0].mxu0
      %v1365 = vadd.f32 %v1274, %v1364
      %v1366 = vpop.f32.mrb[0].mxu0
      %1367 = vmatprep.mubr.f32.mxu0 0.0
      %v1368 = vand.u32 %v1198, 4294901760
      %1369 = vmatmul.mubr.f32.gmra.mrb[0].mxu0 %v1368
      %v1370 = vpop.f32.mrb[0].mxu0
      %v1371 = vadd.f32 %v1284, %v1370
      %v1372 = vpop.f32.mrb[0].mxu0
      %1373 = vdwg.mxu0
      %1374 = vmatprep.subr.mxu0 0.0
      %v1375 = vand.u32 %v1189, 4294901760
      %v1376 = vsub.f32 %v1189, %v1375
      %1377 = vmatpush1.msra.mxu0 %v1376
      %1378 = vmatprep.subr.mxu0 0.0
      %v1379 = vand.u32 %v1191, 4294901760
      %v1380 = vsub.f32 %v1191, %v1379
      %1381 = vmatpush1.msra.mxu0 %v1380
      %1382 = vmatprep.subr.mxu0 0.0
      %1383 = vmatpush1.msra.mxu0 0.0
      %1384 = vmatprep.subr.mxu0 0.0
      %1385 = vmatpush1.msra.mxu0 0.0
      %1386 = vmatprep.subr.mxu0 0.0
      %1387 = vmatpush1.msra.mxu0 0.0
      %1388 = vmatprep.subr.mxu0 0.0
      %1389 = vmatpush1.msra.mxu0 0.0
      %1390 = vmatprep.subr.mxu0 0.0
      %1391 = vmatpush1.msra.mxu0 0.0
      %1392 = vmatprep.subr.mxu0 0.0
      %1393 = vmatpush1.msra.mxu0 0.0
      %1394 = vmatprep.subr.mxu0 0.0
      %1395 = vmatpush1.msra.mxu0 0.0
      %1396 = vmatprep.subr.mxu0 0.0
      %1397 = vmatpush1.msra.mxu0 0.0
      %1398 = vmatprep.subr.mxu0 0.0
      %1399 = vmatpush1.msra.mxu0 0.0
      %1400 = vmatprep.subr.mxu0 0.0
      %1401 = vmatpush1.msra.mxu0 0.0
      %1402 = vmatprep.subr.mxu0 0.0
      %1403 = vmatpush1.msra.mxu0 0.0
      %1404 = vmatprep.subr.mxu0 0.0
      %1405 = vmatpush1.msra.mxu0 0.0
      %1406 = vmatprep.subr.mxu0 0.0
      %1407 = vmatpush1.msra.mxu0 0.0
      %1408 = vmatprep.subr.mxu0 0.0
      %1409 = vmatpush1.msra.mxu0 0.0
      %1410 = vmatprep.subr.mxu0 0.0
      %1411 = vmatpush1.msra.mxu0 0.0
      %1412 = vmatprep.subr.mxu0 0.0
      %1413 = vmatpush1.msra.mxu0 0.0
      %1414 = vmatprep.subr.mxu0 0.0
      %1415 = vmatpush1.msra.mxu0 0.0
      %1416 = vmatprep.subr.mxu0 0.0
      %1417 = vmatpush1.msra.mxu0 0.0
      %1418 = vmatprep.subr.mxu0 0.0
      %1419 = vmatpush1.msra.mxu0 0.0
      %1420 = vmatprep.subr.mxu0 0.0
      %1421 = vmatpush1.msra.mxu0 0.0
      %1422 = vmatprep.subr.mxu0 0.0
      %1423 = vmatpush1.msra.mxu0 0.0
      %1424 = vmatprep.subr.mxu0 0.0
      %1425 = vmatpush1.msra.mxu0 0.0
      %1426 = vmatprep.subr.mxu0 0.0
      %1427 = vmatpush1.msra.mxu0 0.0
      %1428 = vmatprep.subr.mxu0 0.0
      %1429 = vmatpush1.msra.mxu0 0.0
      %1430 = vmatprep.subr.mxu0 0.0
      %1431 = vmatpush1.msra.mxu0 0.0
      %1432 = vmatprep.subr.mxu0 0.0
      %1433 = vmatpush1.msra.mxu0 0.0
      %1434 = vmatprep.subr.mxu0 0.0
      %1435 = vmatpush1.msra.mxu0 0.0
      %1436 = vmatprep.subr.mxu0 0.0
      %1437 = vmatpush1.msra.mxu0 0.0
      %1438 = vmatprep.subr.mxu0 0.0
      %1439 = vmatpush1.msra.mxu0 0.0
      %1440 = vmatprep.subr.mxu0 0.0
      %1441 = vmatpush1.msra.mxu0 0.0
      %1442 = vmatprep.mubr.f32.mxu0 0.0
      %v1443 = vand.u32 %v1195, 4294901760
      %v1444 = vsub.f32 %v1195, %v1443
      %1445 = vmatmul.mubr.f32.gmra.mrb[0].mxu0 %v1444
      %v1446 = vpop.f32.mrb[0].mxu0
      %v1447 = vadd.f32 %v1365, %v1446
      %v1448 = vpop.f32.mrb[0].mxu0
      %1449 = vmatprep.mubr.f32.mxu0 0.0
      %v1450 = vand.u32 %v1198, 4294901760
      %v1451 = vsub.f32 %v1198, %v1450
      %1452 = vmatmul.mubr.f32.gmra.mrb[0].mxu0 %v1451
      %v1453 = vpop.f32.mrb[0].mxu0
      %v1454 = vadd.f32 %v1371, %v1453
      %v1455 = vpop.f32.mrb[0].mxu0
      %1456 = vdwg.mxu0
      %1457 = vmatprep.subr.mxu0 0.0
      %v1458 = vand.u32 %v1189, 4294901760
      %1459 = vmatpush1.msra.mxu0 %v1458
      %1460 = vmatprep.subr.mxu0 0.0
      %v1461 = vand.u32 %v1191, 4294901760
      %1462 = vmatpush1.msra.mxu0 %v1461
      %1463 = vmatprep.subr.mxu0 0.0
      %1464 = vmatpush1.msra.mxu0 0.0
      %1465 = vmatprep.subr.mxu0 0.0
      %1466 = vmatpush1.msra.mxu0 0.0
      %1467 = vmatprep.subr.mxu0 0.0
      %1468 = vmatpush1.msra.mxu0 0.0
      %1469 = vmatprep.subr.mxu0 0.0
      %1470 = vmatpush1.msra.mxu0 0.0
      %1471 = vmatprep.subr.mxu0 0.0
      %1472 = vmatpush1.msra.mxu0 0.0
      %1473 = vmatprep.subr.mxu0 0.0
      %1474 = vmatpush1.msra.mxu0 0.0
      %1475 = vmatprep.subr.mxu0 0.0
      %1476 = vmatpush1.msra.mxu0 0.0
      %1477 = vmatprep.subr.mxu0 0.0
      %1478 = vmatpush1.msra.mxu0 0.0
      %1479 = vmatprep.subr.mxu0 0.0
      %1480 = vmatpush1.msra.mxu0 0.0
      %1481 = vmatprep.subr.mxu0 0.0
      %1482 = vmatpush1.msra.mxu0 0.0
      %1483 = vmatprep.subr.mxu0 0.0
      %1484 = vmatpush1.msra.mxu0 0.0
      %1485 = vmatprep.subr.mxu0 0.0
      %1486 = vmatpush1.msra.mxu0 0.0
      %1487 = vmatprep.subr.mxu0 0.0
      %1488 = vmatpush1.msra.mxu0 0.0
      %1489 = vmatprep.subr.mxu0 0.0
      %1490 = vmatpush1.msra.mxu0 0.0
      %1491 = vmatprep.subr.mxu0 0.0
      %1492 = vmatpush1.msra.mxu0 0.0
      %1493 = vmatprep.subr.mxu0 0.0
      %1494 = vmatpush1.msra.mxu0 0.0
      %1495 = vmatprep.subr.mxu0 0.0
      %1496 = vmatpush1.msra.mxu0 0.0
      %1497 = vmatprep.subr.mxu0 0.0
      %1498 = vmatpush1.msra.mxu0 0.0
      %1499 = vmatprep.subr.mxu0 0.0
      %1500 = vmatpush1.msra.mxu0 0.0
      %1501 = vmatprep.subr.mxu0 0.0
      %1502 = vmatpush1.msra.mxu0 0.0
      %1503 = vmatprep.subr.mxu0 0.0
      %1504 = vmatpush1.msra.mxu0 0.0
      %1505 = vmatprep.subr.mxu0 0.0
      %1506 = vmatpush1.msra.mxu0 0.0
      %1507 = vmatprep.subr.mxu0 0.0
      %1508 = vmatpush1.msra.mxu0 0.0
      %1509 = vmatprep.subr.mxu0 0.0
      %1510 = vmatpush1.msra.mxu0 0.0
      %1511 = vmatprep.subr.mxu0 0.0
      %1512 = vmatpush1.msra.mxu0 0.0
      %1513 = vmatprep.subr.mxu0 0.0
      %1514 = vmatpush1.msra.mxu0 0.0
      %1515 = vmatprep.subr.mxu0 0.0
      %1516 = vmatpush1.msra.mxu0 0.0
      %1517 = vmatprep.subr.mxu0 0.0
      %1518 = vmatpush1.msra.mxu0 0.0
      %1519 = vmatprep.subr.mxu0 0.0
      %1520 = vmatpush1.msra.mxu0 0.0
      %1521 = vmatprep.subr.mxu0 0.0
      %1522 = vmatpush1.msra.mxu0 0.0
      %1523 = vmatprep.mubr.f32.mxu0 0.0
      %v1524 = vand.u32 %v1195, 4294901760
      %v1525 = vsub.f32 %v1195, %v1524
      %v1526 = vand.u32 %v1525, 4294901760
      %1527 = vmatmul.mubr.f32.gmra.mrb[0].mxu0 %v1526
      %v1528 = vpop.f32.mrb[0].mxu0
      %v1529 = vadd.f32 %v1447, %v1528
      %v1530 = vpop.f32.mrb[0].mxu0
      %1531 = vmatprep.mubr.f32.mxu0 0.0
      %v1532 = vand.u32 %v1198, 4294901760
      %v1533 = vsub.f32 %v1198, %v1532
      %v1534 = vand.u32 %v1533, 4294901760
      %1535 = vmatmul.mubr.f32.gmra.mrb[0].mxu0 %v1534
      %v1536 = vpop.f32.mrb[0].mxu0
      %v1537 = vadd.f32 %v1454, %v1536
      %v1538 = vpop.f32.mrb[0].mxu0
      %1539 = vdwg.mxu0
      %1540 = vmatprep.subr.mxu0 0.0
      %v1541 = vand.u32 %v1189, 4294901760
      %v1542 = vsub.f32 %v1189, %v1541
      %v1543 = vand.u32 %v1542, 4294901760
      %1544 = vmatpush1.msra.mxu0 %v1543
      %1545 = vmatprep.subr.mxu0 0.0
      %v1546 = vand.u32 %v1191, 4294901760
      %v1547 = vsub.f32 %v1191, %v1546
      %v1548 = vand.u32 %v1547, 4294901760
      %1549 = vmatpush1.msra.mxu0 %v1548
      %1550 = vmatprep.subr.mxu0 0.0
      %1551 = vmatpush1.msra.mxu0 0.0
      %1552 = vmatprep.subr.mxu0 0.0
      %1553 = vmatpush1.msra.mxu0 0.0
      %1554 = vmatprep.subr.mxu0 0.0
      %1555 = vmatpush1.msra.mxu0 0.0
      %1556 = vmatprep.subr.mxu0 0.0
      %1557 = vmatpush1.msra.mxu0 0.0
      %1558 = vmatprep.subr.mxu0 0.0
      %1559 = vmatpush1.msra.mxu0 0.0
      %1560 = vmatprep.subr.mxu0 0.0
      %1561 = vmatpush1.msra.mxu0 0.0
      %1562 = vmatprep.subr.mxu0 0.0
      %1563 = vmatpush1.msra.mxu0 0.0
      %1564 = vmatprep.subr.mxu0 0.0
      %1565 = vmatpush1.msra.mxu0 0.0
      %1566 = vmatprep.subr.mxu0 0.0
      %1567 = vmatpush1.msra.mxu0 0.0
      %1568 = vmatprep.subr.mxu0 0.0
      %1569 = vmatpush1.msra.mxu0 0.0
      %1570 = vmatprep.subr.mxu0 0.0
      %1571 = vmatpush1.msra.mxu0 0.0
      %1572 = vmatprep.subr.mxu0 0.0
      %1573 = vmatpush1.msra.mxu0 0.0
      %1574 = vmatprep.subr.mxu0 0.0
      %1575 = vmatpush1.msra.mxu0 0.0
      %1576 = vmatprep.subr.mxu0 0.0
      %1577 = vmatpush1.msra.mxu0 0.0
      %1578 = vmatprep.subr.mxu0 0.0
      %1579 = vmatpush1.msra.mxu0 0.0
      %1580 = vmatprep.subr.mxu0 0.0
      %1581 = vmatpush1.msra.mxu0 0.0
      %1582 = vmatprep.subr.mxu0 0.0
      %1583 = vmatpush1.msra.mxu0 0.0
      %1584 = vmatprep.subr.mxu0 0.0
      %1585 = vmatpush1.msra.mxu0 0.0
      %1586 = vmatprep.subr.mxu0 0.0
      %1587 = vmatpush1.msra.mxu0 0.0
      %1588 = vmatprep.subr.mxu0 0.0
      %1589 = vmatpush1.msra.mxu0 0.0
      %1590 = vmatprep.subr.mxu0 0.0
      %1591 = vmatpush1.msra.mxu0 0.0
      %1592 = vmatprep.subr.mxu0 0.0
      %1593 = vmatpush1.msra.mxu0 0.0
      %1594 = vmatprep.subr.mxu0 0.0
      %1595 = vmatpush1.msra.mxu0 0.0
      %1596 = vmatprep.subr.mxu0 0.0
      %1597 = vmatpush1.msra.mxu0 0.0
      %1598 = vmatprep.subr.mxu0 0.0
      %1599 = vmatpush1.msra.mxu0 0.0
      %1600 = vmatprep.subr.mxu0 0.0
      %1601 = vmatpush1.msra.mxu0 0.0
      %1602 = vmatprep.subr.mxu0 0.0
      %1603 = vmatpush1.msra.mxu0 0.0
      %1604 = vmatprep.subr.mxu0 0.0
      %1605 = vmatpush1.msra.mxu0 0.0
      %1606 = vmatprep.subr.mxu0 0.0
      %1607 = vmatpush1.msra.mxu0 0.0
      %1608 = vmatprep.subr.mxu0 0.0
      %1609 = vmatpush1.msra.mxu0 0.0
      %1610 = vmatprep.mubr.f32.mxu0 0.0
      %v1611 = vand.u32 %v1195, 4294901760
      %1612 = vmatmul.mubr.f32.gmra.mrb[0].mxu0 %v1611
      %v1613 = vpop.f32.mrb[0].mxu0
      %v1614 = vadd.f32 %v1529, %v1613
      %v1615 = vpop.f32.mrb[0].mxu0
      %1616 = vmatprep.mubr.f32.mxu0 0.0
      %v1617 = vand.u32 %v1198, 4294901760
      %1618 = vmatmul.mubr.f32.gmra.mrb[0].mxu0 %v1617
      %v1619 = vpop.f32.mrb[0].mxu0
      %v1620 = vadd.f32 %v1537, %v1619
      %v1621 = vpop.f32.mrb[0].mxu0
      %1622 = vdwg.mxu0
      %1623 = vmatprep.subr.mxu0 0.0
      %v1624 = vand.u32 %v1189, 4294901760
      %1625 = vmatpush1.msra.mxu0 %v1624
      %1626 = vmatprep.subr.mxu0 0.0
      %v1627 = vand.u32 %v1191, 4294901760
      %1628 = vmatpush1.msra.mxu0 %v1627
      %1629 = vmatprep.subr.mxu0 0.0
      %1630 = vmatpush1.msra.mxu0 0.0
      %1631 = vmatprep.subr.mxu0 0.0
      %1632 = vmatpush1.msra.mxu0 0.0
      %1633 = vmatprep.subr.mxu0 0.0
      %1634 = vmatpush1.msra.mxu0 0.0
      %1635 = vmatprep.subr.mxu0 0.0
      %1636 = vmatpush1.msra.mxu0 0.0
      %1637 = vmatprep.subr.mxu0 0.0
      %1638 = vmatpush1.msra.mxu0 0.0
      %1639 = vmatprep.subr.mxu0 0.0
      %1640 = vmatpush1.msra.mxu0 0.0
      %1641 = vmatprep.subr.mxu0 0.0
      %1642 = vmatpush1.msra.mxu0 0.0
      %1643 = vmatprep.subr.mxu0 0.0
      %1644 = vmatpush1.msra.mxu0 0.0
      %1645 = vmatprep.subr.mxu0 0.0
      %1646 = vmatpush1.msra.mxu0 0.0
      %1647 = vmatprep.subr.mxu0 0.0
      %1648 = vmatpush1.msra.mxu0 0.0
      %1649 = vmatprep.subr.mxu0 0.0
      %1650 = vmatpush1.msra.mxu0 0.0
      %1651 = vmatprep.subr.mxu0 0.0
      %1652 = vmatpush1.msra.mxu0 0.0
      %1653 = vmatprep.subr.mxu0 0.0
      %1654 = vmatpush1.msra.mxu0 0.0
      %1655 = vmatprep.subr.mxu0 0.0
      %1656 = vmatpush1.msra.mxu0 0.0
      %1657 = vmatprep.subr.mxu0 0.0
      %1658 = vmatpush1.msra.mxu0 0.0
      %1659 = vmatprep.subr.mxu0 0.0
      %1660 = vmatpush1.msra.mxu0 0.0
      %1661 = vmatprep.subr.mxu0 0.0
      %1662 = vmatpush1.msra.mxu0 0.0
      %1663 = vmatprep.subr.mxu0 0.0
      %1664 = vmatpush1.msra.mxu0 0.0
      %1665 = vmatprep.subr.mxu0 0.0
      %1666 = vmatpush1.msra.mxu0 0.0
      %1667 = vmatprep.subr.mxu0 0.0
      %1668 = vmatpush1.msra.mxu0 0.0
      %1669 = vmatprep.subr.mxu0 0.0
      %1670 = vmatpush1.msra.mxu0 0.0
      %1671 = vmatprep.subr.mxu0 0.0
      %1672 = vmatpush1.msra.mxu0 0.0
      %1673 = vmatprep.subr.mxu0 0.0
      %1674 = vmatpush1.msra.mxu0 0.0
      %1675 = vmatprep.subr.mxu0 0.0
      %1676 = vmatpush1.msra.mxu0 0.0
      %1677 = vmatprep.subr.mxu0 0.0
      %1678 = vmatpush1.msra.mxu0 0.0
      %1679 = vmatprep.subr.mxu0 0.0
      %1680 = vmatpush1.msra.mxu0 0.0
      %1681 = vmatprep.subr.mxu0 0.0
      %1682 = vmatpush1.msra.mxu0 0.0
      %1683 = vmatprep.subr.mxu0 0.0
      %1684 = vmatpush1.msra.mxu0 0.0
      %1685 = vmatprep.subr.mxu0 0.0
      %1686 = vmatpush1.msra.mxu0 0.0
      %1687 = vmatprep.subr.mxu0 0.0
      %1688 = vmatpush1.msra.mxu0 0.0
      %1689 = vmatprep.mubr.f32.mxu0 0.0
      %v1690 = vand.u32 %v1195, 4294901760
      %1691 = vmatmul.mubr.f32.gmra.mrb[0].mxu0 %v1690
      %v1692 = vpop.f32.mrb[0].mxu0
      %v1693 = vadd.f32 %v1614, %v1692
      %v1694 = vpop.f32.mrb[0].mxu0
      %1695 = vmatprep.mubr.f32.mxu0 0.0
      %v1696 = vand.u32 %v1198, 4294901760
      %1697 = vmatmul.mubr.f32.gmra.mrb[0].mxu0 %v1696
      %v1698 = vpop.f32.mrb[0].mxu0
      %v1699 = vadd.f32 %v1620, %v1698
      %v1700 = vpop.f32.mrb[0].mxu0
      %1701 = vdwg.mxu0
      %v1702 = vmul.f32 %v1693, %v940
      %v1703 = vmul.f32 %v1699, %v941
      %v1704 = vld [vmem:[%s9] sm:$0xff]
      %v1705 = vld [vmem:[%s9 + $0x8] sm:$0xff]
      %v1707 = vsel %vm423, %v1702, 0
      %v1710 = vsel %vm423, %v1703, 0
      %1712 = vmatprep.subr.mxu0 0.0
      %v1713 = vand.u32 %v1704, 4294901760
      %1714 = vmatpush1.msra.mxu0 %v1713
      %1715 = vmatprep.subr.mxu0 0.0
      %v1716 = vand.u32 %v1705, 4294901760
      %1717 = vmatpush1.msra.mxu0 %v1716
      %1718 = vmatprep.subr.mxu0 0.0
      %1719 = vmatpush1.msra.mxu0 0.0
      %1720 = vmatprep.subr.mxu0 0.0
      %1721 = vmatpush1.msra.mxu0 0.0
      %1722 = vmatprep.subr.mxu0 0.0
      %1723 = vmatpush1.msra.mxu0 0.0
      %1724 = vmatprep.subr.mxu0 0.0
      %1725 = vmatpush1.msra.mxu0 0.0
      %1726 = vmatprep.subr.mxu0 0.0
      %1727 = vmatpush1.msra.mxu0 0.0
      %1728 = vmatprep.subr.mxu0 0.0
      %1729 = vmatpush1.msra.mxu0 0.0
      %1730 = vmatprep.subr.mxu0 0.0
      %1731 = vmatpush1.msra.mxu0 0.0
      %1732 = vmatprep.subr.mxu0 0.0
      %1733 = vmatpush1.msra.mxu0 0.0
      %1734 = vmatprep.subr.mxu0 0.0
      %1735 = vmatpush1.msra.mxu0 0.0
      %1736 = vmatprep.subr.mxu0 0.0
      %1737 = vmatpush1.msra.mxu0 0.0
      %1738 = vmatprep.subr.mxu0 0.0
      %1739 = vmatpush1.msra.mxu0 0.0
      %1740 = vmatprep.subr.mxu0 0.0
      %1741 = vmatpush1.msra.mxu0 0.0
      %1742 = vmatprep.subr.mxu0 0.0
      %1743 = vmatpush1.msra.mxu0 0.0
      %1744 = vmatprep.subr.mxu0 0.0
      %1745 = vmatpush1.msra.mxu0 0.0
      %1746 = vmatprep.subr.mxu0 0.0
      %1747 = vmatpush1.msra.mxu0 0.0
      %1748 = vmatprep.subr.mxu0 0.0
      %1749 = vmatpush1.msra.mxu0 0.0
      %1750 = vmatprep.subr.mxu0 0.0
      %1751 = vmatpush1.msra.mxu0 0.0
      %1752 = vmatprep.subr.mxu0 0.0
      %1753 = vmatpush1.msra.mxu0 0.0
      %1754 = vmatprep.subr.mxu0 0.0
      %1755 = vmatpush1.msra.mxu0 0.0
      %1756 = vmatprep.subr.mxu0 0.0
      %1757 = vmatpush1.msra.mxu0 0.0
      %1758 = vmatprep.subr.mxu0 0.0
      %1759 = vmatpush1.msra.mxu0 0.0
      %1760 = vmatprep.subr.mxu0 0.0
      %1761 = vmatpush1.msra.mxu0 0.0
      %1762 = vmatprep.subr.mxu0 0.0
      %1763 = vmatpush1.msra.mxu0 0.0
      %1764 = vmatprep.subr.mxu0 0.0
      %1765 = vmatpush1.msra.mxu0 0.0
      %1766 = vmatprep.subr.mxu0 0.0
      %1767 = vmatpush1.msra.mxu0 0.0
      %1768 = vmatprep.subr.mxu0 0.0
      %1769 = vmatpush1.msra.mxu0 0.0
      %1770 = vmatprep.subr.mxu0 0.0
      %1771 = vmatpush1.msra.mxu0 0.0
      %1772 = vmatprep.subr.mxu0 0.0
      %1773 = vmatpush1.msra.mxu0 0.0
      %1774 = vmatprep.subr.mxu0 0.0
      %1775 = vmatpush1.msra.mxu0 0.0
      %1776 = vmatprep.subr.mxu0 0.0
      %1777 = vmatpush1.msra.mxu0 0.0
      %1778 = vmatprep.mubr.f32.mxu0 0.0
      %v1779 = vand.u32 %v1707, 4294901760
      %v1780 = vsub.f32 %v1707, %v1779
      %v1781 = vand.u32 %v1780, 4294901760
      %v1782 = vsub.f32 %v1780, %v1781
      %v1783 = vand.u32 %v1782, 4294901760
      %1784 = vmatmul.mubr.f32.gmra.mrb[0].mxu0 %v1783
      %v1785 = vpop.f32.mrb[0].mxu0
      %v1786 = vadd.f32 0.0, %v1785
      %v1787 = vpop.f32.mrb[0].mxu0
      %1788 = vmatprep.mubr.f32.mxu0 0.0
      %v1789 = vand.u32 %v1710, 4294901760
      %v1790 = vsub.f32 %v1710, %v1789
      %v1791 = vand.u32 %v1790, 4294901760
      %v1792 = vsub.f32 %v1790, %v1791
      %v1793 = vand.u32 %v1792, 4294901760
      %1794 = vmatmul.mubr.f32.gmra.mrb[0].mxu0 %v1793
      %v1795 = vpop.f32.mrb[0].mxu0
      %v1796 = vadd.f32 0.0, %v1795
      %v1797 = vpop.f32.mrb[0].mxu0
      %1798 = vdwg.mxu0
      %1799 = vmatprep.subr.mxu0 0.0
      %v1800 = vand.u32 %v1704, 4294901760
      %v1801 = vsub.f32 %v1704, %v1800
      %v1802 = vand.u32 %v1801, 4294901760
      %v1803 = vsub.f32 %v1801, %v1802
      %v1804 = vand.u32 %v1803, 4294901760
      %1805 = vmatpush1.msra.mxu0 %v1804
      %1806 = vmatprep.subr.mxu0 0.0
      %v1807 = vand.u32 %v1705, 4294901760
      %v1808 = vsub.f32 %v1705, %v1807
      %v1809 = vand.u32 %v1808, 4294901760
      %v1810 = vsub.f32 %v1808, %v1809
      %v1811 = vand.u32 %v1810, 4294901760
      %1812 = vmatpush1.msra.mxu0 %v1811
      %1813 = vmatprep.subr.mxu0 0.0
      %1814 = vmatpush1.msra.mxu0 0.0
      %1815 = vmatprep.subr.mxu0 0.0
      %1816 = vmatpush1.msra.mxu0 0.0
      %1817 = vmatprep.subr.mxu0 0.0
      %1818 = vmatpush1.msra.mxu0 0.0
      %1819 = vmatprep.subr.mxu0 0.0
      %1820 = vmatpush1.msra.mxu0 0.0
      %1821 = vmatprep.subr.mxu0 0.0
      %1822 = vmatpush1.msra.mxu0 0.0
      %1823 = vmatprep.subr.mxu0 0.0
      %1824 = vmatpush1.msra.mxu0 0.0
      %1825 = vmatprep.subr.mxu0 0.0
      %1826 = vmatpush1.msra.mxu0 0.0
      %1827 = vmatprep.subr.mxu0 0.0
      %1828 = vmatpush1.msra.mxu0 0.0
      %1829 = vmatprep.subr.mxu0 0.0
      %1830 = vmatpush1.msra.mxu0 0.0
      %1831 = vmatprep.subr.mxu0 0.0
      %1832 = vmatpush1.msra.mxu0 0.0
      %1833 = vmatprep.subr.mxu0 0.0
      %1834 = vmatpush1.msra.mxu0 0.0
      %1835 = vmatprep.subr.mxu0 0.0
      %1836 = vmatpush1.msra.mxu0 0.0
      %1837 = vmatprep.subr.mxu0 0.0
      %1838 = vmatpush1.msra.mxu0 0.0
      %1839 = vmatprep.subr.mxu0 0.0
      %1840 = vmatpush1.msra.mxu0 0.0
      %1841 = vmatprep.subr.mxu0 0.0
      %1842 = vmatpush1.msra.mxu0 0.0
      %1843 = vmatprep.subr.mxu0 0.0
      %1844 = vmatpush1.msra.mxu0 0.0
      %1845 = vmatprep.subr.mxu0 0.0
      %1846 = vmatpush1.msra.mxu0 0.0
      %1847 = vmatprep.subr.mxu0 0.0
      %1848 = vmatpush1.msra.mxu0 0.0
      %1849 = vmatprep.subr.mxu0 0.0
      %1850 = vmatpush1.msra.mxu0 0.0
      %1851 = vmatprep.subr.mxu0 0.0
      %1852 = vmatpush1.msra.mxu0 0.0
      %1853 = vmatprep.subr.mxu0 0.0
      %1854 = vmatpush1.msra.mxu0 0.0
      %1855 = vmatprep.subr.mxu0 0.0
      %1856 = vmatpush1.msra.mxu0 0.0
      %1857 = vmatprep.subr.mxu0 0.0
      %1858 = vmatpush1.msra.mxu0 0.0
      %1859 = vmatprep.subr.mxu0 0.0
      %1860 = vmatpush1.msra.mxu0 0.0
      %1861 = vmatprep.subr.mxu0 0.0
      %1862 = vmatpush1.msra.mxu0 0.0
      %1863 = vmatprep.subr.mxu0 0.0
      %1864 = vmatpush1.msra.mxu0 0.0
      %1865 = vmatprep.subr.mxu0 0.0
      %1866 = vmatpush1.msra.mxu0 0.0
      %1867 = vmatprep.subr.mxu0 0.0
      %1868 = vmatpush1.msra.mxu0 0.0
      %1869 = vmatprep.subr.mxu0 0.0
      %1870 = vmatpush1.msra.mxu0 0.0
      %1871 = vmatprep.subr.mxu0 0.0
      %1872 = vmatpush1.msra.mxu0 0.0
      %1873 = vmatprep.mubr.f32.mxu0 0.0
      %v1874 = vand.u32 %v1707, 4294901760
      %1875 = vmatmul.mubr.f32.gmra.mrb[0].mxu0 %v1874
      %v1876 = vpop.f32.mrb[0].mxu0
      %v1877 = vadd.f32 %v1786, %v1876
      %v1878 = vpop.f32.mrb[0].mxu0
      %1879 = vmatprep.mubr.f32.mxu0 0.0
      %v1880 = vand.u32 %v1710, 4294901760
      %1881 = vmatmul.mubr.f32.gmra.mrb[0].mxu0 %v1880
      %v1882 = vpop.f32.mrb[0].mxu0
      %v1883 = vadd.f32 %v1796, %v1882
      %v1884 = vpop.f32.mrb[0].mxu0
      %1885 = vdwg.mxu0
      %1886 = vmatprep.subr.mxu0 0.0
      %v1887 = vand.u32 %v1704, 4294901760
      %v1888 = vsub.f32 %v1704, %v1887
      %1889 = vmatpush1.msra.mxu0 %v1888
      %1890 = vmatprep.subr.mxu0 0.0
      %v1891 = vand.u32 %v1705, 4294901760
      %v1892 = vsub.f32 %v1705, %v1891
      %1893 = vmatpush1.msra.mxu0 %v1892
      %1894 = vmatprep.subr.mxu0 0.0
      %1895 = vmatpush1.msra.mxu0 0.0
      %1896 = vmatprep.subr.mxu0 0.0
      %1897 = vmatpush1.msra.mxu0 0.0
      %1898 = vmatprep.subr.mxu0 0.0
      %1899 = vmatpush1.msra.mxu0 0.0
      %1900 = vmatprep.subr.mxu0 0.0
      %1901 = vmatpush1.msra.mxu0 0.0
      %1902 = vmatprep.subr.mxu0 0.0
      %1903 = vmatpush1.msra.mxu0 0.0
      %1904 = vmatprep.subr.mxu0 0.0
      %1905 = vmatpush1.msra.mxu0 0.0
      %1906 = vmatprep.subr.mxu0 0.0
      %1907 = vmatpush1.msra.mxu0 0.0
      %1908 = vmatprep.subr.mxu0 0.0
      %1909 = vmatpush1.msra.mxu0 0.0
      %1910 = vmatprep.subr.mxu0 0.0
      %1911 = vmatpush1.msra.mxu0 0.0
      %1912 = vmatprep.subr.mxu0 0.0
      %1913 = vmatpush1.msra.mxu0 0.0
      %1914 = vmatprep.subr.mxu0 0.0
      %1915 = vmatpush1.msra.mxu0 0.0
      %1916 = vmatprep.subr.mxu0 0.0
      %1917 = vmatpush1.msra.mxu0 0.0
      %1918 = vmatprep.subr.mxu0 0.0
      %1919 = vmatpush1.msra.mxu0 0.0
      %1920 = vmatprep.subr.mxu0 0.0
      %1921 = vmatpush1.msra.mxu0 0.0
      %1922 = vmatprep.subr.mxu0 0.0
      %1923 = vmatpush1.msra.mxu0 0.0
      %1924 = vmatprep.subr.mxu0 0.0
      %1925 = vmatpush1.msra.mxu0 0.0
      %1926 = vmatprep.subr.mxu0 0.0
      %1927 = vmatpush1.msra.mxu0 0.0
      %1928 = vmatprep.subr.mxu0 0.0
      %1929 = vmatpush1.msra.mxu0 0.0
      %1930 = vmatprep.subr.mxu0 0.0
      %1931 = vmatpush1.msra.mxu0 0.0
      %1932 = vmatprep.subr.mxu0 0.0
      %1933 = vmatpush1.msra.mxu0 0.0
      %1934 = vmatprep.subr.mxu0 0.0
      %1935 = vmatpush1.msra.mxu0 0.0
      %1936 = vmatprep.subr.mxu0 0.0
      %1937 = vmatpush1.msra.mxu0 0.0
      %1938 = vmatprep.subr.mxu0 0.0
      %1939 = vmatpush1.msra.mxu0 0.0
      %1940 = vmatprep.subr.mxu0 0.0
      %1941 = vmatpush1.msra.mxu0 0.0
      %1942 = vmatprep.subr.mxu0 0.0
      %1943 = vmatpush1.msra.mxu0 0.0
      %1944 = vmatprep.subr.mxu0 0.0
      %1945 = vmatpush1.msra.mxu0 0.0
      %1946 = vmatprep.subr.mxu0 0.0
      %1947 = vmatpush1.msra.mxu0 0.0
      %1948 = vmatprep.subr.mxu0 0.0
      %1949 = vmatpush1.msra.mxu0 0.0
      %1950 = vmatprep.subr.mxu0 0.0
      %1951 = vmatpush1.msra.mxu0 0.0
      %1952 = vmatprep.subr.mxu0 0.0
      %1953 = vmatpush1.msra.mxu0 0.0
      %1954 = vmatprep.mubr.f32.mxu0 0.0
      %v1955 = vand.u32 %v1707, 4294901760
      %v1956 = vsub.f32 %v1707, %v1955
      %1957 = vmatmul.mubr.f32.gmra.mrb[0].mxu0 %v1956
      %v1958 = vpop.f32.mrb[0].mxu0
      %v1959 = vadd.f32 %v1877, %v1958
      %v1960 = vpop.f32.mrb[0].mxu0
      %1961 = vmatprep.mubr.f32.mxu0 0.0
      %v1962 = vand.u32 %v1710, 4294901760
      %v1963 = vsub.f32 %v1710, %v1962
      %1964 = vmatmul.mubr.f32.gmra.mrb[0].mxu0 %v1963
      %v1965 = vpop.f32.mrb[0].mxu0
      %v1966 = vadd.f32 %v1883, %v1965
      %v1967 = vpop.f32.mrb[0].mxu0
      %1968 = vdwg.mxu0
      %1969 = vmatprep.subr.mxu0 0.0
      %v1970 = vand.u32 %v1704, 4294901760
      %1971 = vmatpush1.msra.mxu0 %v1970
      %1972 = vmatprep.subr.mxu0 0.0
      %v1973 = vand.u32 %v1705, 4294901760
      %1974 = vmatpush1.msra.mxu0 %v1973
      %1975 = vmatprep.subr.mxu0 0.0
      %1976 = vmatpush1.msra.mxu0 0.0
      %1977 = vmatprep.subr.mxu0 0.0
      %1978 = vmatpush1.msra.mxu0 0.0
      %1979 = vmatprep.subr.mxu0 0.0
      %1980 = vmatpush1.msra.mxu0 0.0
      %1981 = vmatprep.subr.mxu0 0.0
      %1982 = vmatpush1.msra.mxu0 0.0
      %1983 = vmatprep.subr.mxu0 0.0
      %1984 = vmatpush1.msra.mxu0 0.0
      %1985 = vmatprep.subr.mxu0 0.0
      %1986 = vmatpush1.msra.mxu0 0.0
      %1987 = vmatprep.subr.mxu0 0.0
      %1988 = vmatpush1.msra.mxu0 0.0
      %1989 = vmatprep.subr.mxu0 0.0
      %1990 = vmatpush1.msra.mxu0 0.0
      %1991 = vmatprep.subr.mxu0 0.0
      %1992 = vmatpush1.msra.mxu0 0.0
      %1993 = vmatprep.subr.mxu0 0.0
      %1994 = vmatpush1.msra.mxu0 0.0
      %1995 = vmatprep.subr.mxu0 0.0
      %1996 = vmatpush1.msra.mxu0 0.0
      %1997 = vmatprep.subr.mxu0 0.0
      %1998 = vmatpush1.msra.mxu0 0.0
      %1999 = vmatprep.subr.mxu0 0.0
      %2000 = vmatpush1.msra.mxu0 0.0
      %2001 = vmatprep.subr.mxu0 0.0
      %2002 = vmatpush1.msra.mxu0 0.0
      %2003 = vmatprep.subr.mxu0 0.0
      %2004 = vmatpush1.msra.mxu0 0.0
      %2005 = vmatprep.subr.mxu0 0.0
      %2006 = vmatpush1.msra.mxu0 0.0
      %2007 = vmatprep.subr.mxu0 0.0
      %2008 = vmatpush1.msra.mxu0 0.0
      %2009 = vmatprep.subr.mxu0 0.0
      %2010 = vmatpush1.msra.mxu0 0.0
      %2011 = vmatprep.subr.mxu0 0.0
      %2012 = vmatpush1.msra.mxu0 0.0
      %2013 = vmatprep.subr.mxu0 0.0
      %2014 = vmatpush1.msra.mxu0 0.0
      %2015 = vmatprep.subr.mxu0 0.0
      %2016 = vmatpush1.msra.mxu0 0.0
      %2017 = vmatprep.subr.mxu0 0.0
      %2018 = vmatpush1.msra.mxu0 0.0
      %2019 = vmatprep.subr.mxu0 0.0
      %2020 = vmatpush1.msra.mxu0 0.0
      %2021 = vmatprep.subr.mxu0 0.0
      %2022 = vmatpush1.msra.mxu0 0.0
      %2023 = vmatprep.subr.mxu0 0.0
      %2024 = vmatpush1.msra.mxu0 0.0
      %2025 = vmatprep.subr.mxu0 0.0
      %2026 = vmatpush1.msra.mxu0 0.0
      %2027 = vmatprep.subr.mxu0 0.0
      %2028 = vmatpush1.msra.mxu0 0.0
      %2029 = vmatprep.subr.mxu0 0.0
      %2030 = vmatpush1.msra.mxu0 0.0
      %2031 = vmatprep.subr.mxu0 0.0
      %2032 = vmatpush1.msra.mxu0 0.0
      %2033 = vmatprep.subr.mxu0 0.0
      %2034 = vmatpush1.msra.mxu0 0.0
      %2035 = vmatprep.mubr.f32.mxu0 0.0
      %v2036 = vand.u32 %v1707, 4294901760
      %v2037 = vsub.f32 %v1707, %v2036
      %v2038 = vand.u32 %v2037, 4294901760
      %2039 = vmatmul.mubr.f32.gmra.mrb[0].mxu0 %v2038
      %v2040 = vpop.f32.mrb[0].mxu0
      %v2041 = vadd.f32 %v1959, %v2040
      %v2042 = vpop.f32.mrb[0].mxu0
      %2043 = vmatprep.mubr.f32.mxu0 0.0
      %v2044 = vand.u32 %v1710, 4294901760
      %v2045 = vsub.f32 %v1710, %v2044
      %v2046 = vand.u32 %v2045, 4294901760
      %2047 = vmatmul.mubr.f32.gmra.mrb[0].mxu0 %v2046
      %v2048 = vpop.f32.mrb[0].mxu0
      %v2049 = vadd.f32 %v1966, %v2048
      %v2050 = vpop.f32.mrb[0].mxu0
      %2051 = vdwg.mxu0
      %2052 = vmatprep.subr.mxu0 0.0
      %v2053 = vand.u32 %v1704, 4294901760
      %v2054 = vsub.f32 %v1704, %v2053
      %v2055 = vand.u32 %v2054, 4294901760
      %2056 = vmatpush1.msra.mxu0 %v2055
      %2057 = vmatprep.subr.mxu0 0.0
      %v2058 = vand.u32 %v1705, 4294901760
      %v2059 = vsub.f32 %v1705, %v2058
      %v2060 = vand.u32 %v2059, 4294901760
      %2061 = vmatpush1.msra.mxu0 %v2060
      %2062 = vmatprep.subr.mxu0 0.0
      %2063 = vmatpush1.msra.mxu0 0.0
      %2064 = vmatprep.subr.mxu0 0.0
      %2065 = vmatpush1.msra.mxu0 0.0
      %2066 = vmatprep.subr.mxu0 0.0
      %2067 = vmatpush1.msra.mxu0 0.0
      %2068 = vmatprep.subr.mxu0 0.0
      %2069 = vmatpush1.msra.mxu0 0.0
      %2070 = vmatprep.subr.mxu0 0.0
      %2071 = vmatpush1.msra.mxu0 0.0
      %2072 = vmatprep.subr.mxu0 0.0
      %2073 = vmatpush1.msra.mxu0 0.0
      %2074 = vmatprep.subr.mxu0 0.0
      %2075 = vmatpush1.msra.mxu0 0.0
      %2076 = vmatprep.subr.mxu0 0.0
      %2077 = vmatpush1.msra.mxu0 0.0
      %2078 = vmatprep.subr.mxu0 0.0
      %2079 = vmatpush1.msra.mxu0 0.0
      %2080 = vmatprep.subr.mxu0 0.0
      %2081 = vmatpush1.msra.mxu0 0.0
      %2082 = vmatprep.subr.mxu0 0.0
      %2083 = vmatpush1.msra.mxu0 0.0
      %2084 = vmatprep.subr.mxu0 0.0
      %2085 = vmatpush1.msra.mxu0 0.0
      %2086 = vmatprep.subr.mxu0 0.0
      %2087 = vmatpush1.msra.mxu0 0.0
      %2088 = vmatprep.subr.mxu0 0.0
      %2089 = vmatpush1.msra.mxu0 0.0
      %2090 = vmatprep.subr.mxu0 0.0
      %2091 = vmatpush1.msra.mxu0 0.0
      %2092 = vmatprep.subr.mxu0 0.0
      %2093 = vmatpush1.msra.mxu0 0.0
      %2094 = vmatprep.subr.mxu0 0.0
      %2095 = vmatpush1.msra.mxu0 0.0
      %2096 = vmatprep.subr.mxu0 0.0
      %2097 = vmatpush1.msra.mxu0 0.0
      %2098 = vmatprep.subr.mxu0 0.0
      %2099 = vmatpush1.msra.mxu0 0.0
      %2100 = vmatprep.subr.mxu0 0.0
      %2101 = vmatpush1.msra.mxu0 0.0
      %2102 = vmatprep.subr.mxu0 0.0
      %2103 = vmatpush1.msra.mxu0 0.0
      %2104 = vmatprep.subr.mxu0 0.0
      %2105 = vmatpush1.msra.mxu0 0.0
      %2106 = vmatprep.subr.mxu0 0.0
      %2107 = vmatpush1.msra.mxu0 0.0
      %2108 = vmatprep.subr.mxu0 0.0
      %2109 = vmatpush1.msra.mxu0 0.0
      %2110 = vmatprep.subr.mxu0 0.0
      %2111 = vmatpush1.msra.mxu0 0.0
      %2112 = vmatprep.subr.mxu0 0.0
      %2113 = vmatpush1.msra.mxu0 0.0
      %2114 = vmatprep.subr.mxu0 0.0
      %2115 = vmatpush1.msra.mxu0 0.0
      %2116 = vmatprep.subr.mxu0 0.0
      %2117 = vmatpush1.msra.mxu0 0.0
      %2118 = vmatprep.subr.mxu0 0.0
      %2119 = vmatpush1.msra.mxu0 0.0
      %2120 = vmatprep.subr.mxu0 0.0
      %2121 = vmatpush1.msra.mxu0 0.0
      %2122 = vmatprep.mubr.f32.mxu0 0.0
      %v2123 = vand.u32 %v1707, 4294901760
      %2124 = vmatmul.mubr.f32.gmra.mrb[0].mxu0 %v2123
      %v2125 = vpop.f32.mrb[0].mxu0
      %v2126 = vadd.f32 %v2041, %v2125
      %v2127 = vpop.f32.mrb[0].mxu0
      %2128 = vmatprep.mubr.f32.mxu0 0.0
      %v2129 = vand.u32 %v1710, 4294901760
      %2130 = vmatmul.mubr.f32.gmra.mrb[0].mxu0 %v2129
      %v2131 = vpop.f32.mrb[0].mxu0
      %v2132 = vadd.f32 %v2049, %v2131
      %v2133 = vpop.f32.mrb[0].mxu0
      %2134 = vdwg.mxu0
      %2135 = vmatprep.subr.mxu0 0.0
      %v2136 = vand.u32 %v1704, 4294901760
      %2137 = vmatpush1.msra.mxu0 %v2136
      %2138 = vmatprep.subr.mxu0 0.0
      %v2139 = vand.u32 %v1705, 4294901760
      %2140 = vmatpush1.msra.mxu0 %v2139
      %2141 = vmatprep.subr.mxu0 0.0
      %2142 = vmatpush1.msra.mxu0 0.0
      %2143 = vmatprep.subr.mxu0 0.0
      %2144 = vmatpush1.msra.mxu0 0.0
      %2145 = vmatprep.subr.mxu0 0.0
      %2146 = vmatpush1.msra.mxu0 0.0
      %2147 = vmatprep.subr.mxu0 0.0
      %2148 = vmatpush1.msra.mxu0 0.0
      %2149 = vmatprep.subr.mxu0 0.0
      %2150 = vmatpush1.msra.mxu0 0.0
      %2151 = vmatprep.subr.mxu0 0.0
      %2152 = vmatpush1.msra.mxu0 0.0
      %2153 = vmatprep.subr.mxu0 0.0
      %2154 = vmatpush1.msra.mxu0 0.0
      %2155 = vmatprep.subr.mxu0 0.0
      %2156 = vmatpush1.msra.mxu0 0.0
      %2157 = vmatprep.subr.mxu0 0.0
      %2158 = vmatpush1.msra.mxu0 0.0
      %2159 = vmatprep.subr.mxu0 0.0
      %2160 = vmatpush1.msra.mxu0 0.0
      %2161 = vmatprep.subr.mxu0 0.0
      %2162 = vmatpush1.msra.mxu0 0.0
      %2163 = vmatprep.subr.mxu0 0.0
      %2164 = vmatpush1.msra.mxu0 0.0
      %2165 = vmatprep.subr.mxu0 0.0
      %2166 = vmatpush1.msra.mxu0 0.0
      %2167 = vmatprep.subr.mxu0 0.0
      %2168 = vmatpush1.msra.mxu0 0.0
      %2169 = vmatprep.subr.mxu0 0.0
      %2170 = vmatpush1.msra.mxu0 0.0
      %2171 = vmatprep.subr.mxu0 0.0
      %2172 = vmatpush1.msra.mxu0 0.0
      %2173 = vmatprep.subr.mxu0 0.0
      %2174 = vmatpush1.msra.mxu0 0.0
      %2175 = vmatprep.subr.mxu0 0.0
      %2176 = vmatpush1.msra.mxu0 0.0
      %2177 = vmatprep.subr.mxu0 0.0
      %2178 = vmatpush1.msra.mxu0 0.0
      %2179 = vmatprep.subr.mxu0 0.0
      %2180 = vmatpush1.msra.mxu0 0.0
      %2181 = vmatprep.subr.mxu0 0.0
      %2182 = vmatpush1.msra.mxu0 0.0
      %2183 = vmatprep.subr.mxu0 0.0
      %2184 = vmatpush1.msra.mxu0 0.0
      %2185 = vmatprep.subr.mxu0 0.0
      %2186 = vmatpush1.msra.mxu0 0.0
      %2187 = vmatprep.subr.mxu0 0.0
      %2188 = vmatpush1.msra.mxu0 0.0
      %2189 = vmatprep.subr.mxu0 0.0
      %2190 = vmatpush1.msra.mxu0 0.0
      %2191 = vmatprep.subr.mxu0 0.0
      %2192 = vmatpush1.msra.mxu0 0.0
      %2193 = vmatprep.subr.mxu0 0.0
      %2194 = vmatpush1.msra.mxu0 0.0
      %2195 = vmatprep.subr.mxu0 0.0
      %2196 = vmatpush1.msra.mxu0 0.0
      %2197 = vmatprep.subr.mxu0 0.0
      %2198 = vmatpush1.msra.mxu0 0.0
      %2199 = vmatprep.subr.mxu0 0.0
      %2200 = vmatpush1.msra.mxu0 0.0
      %2201 = vmatprep.mubr.f32.mxu0 0.0
      %v2202 = vand.u32 %v1707, 4294901760
      %2203 = vmatmul.mubr.f32.gmra.mrb[0].mxu0 %v2202
      %v2204 = vpop.f32.mrb[0].mxu0
      %v2205 = vadd.f32 %v2126, %v2204
      %v2206 = vpop.f32.mrb[0].mxu0
      %2207 = vmatprep.mubr.f32.mxu0 0.0
      %v2208 = vand.u32 %v1710, 4294901760
      %2209 = vmatmul.mubr.f32.gmra.mrb[0].mxu0 %v2208
      %v2210 = vpop.f32.mrb[0].mxu0
      %v2211 = vadd.f32 %v2132, %v2210
      %v2212 = vpop.f32.mrb[0].mxu0
      %2213 = vdwg.mxu0
      %v2214 = vadd.f32 %v1181, %v2205
      %v2215 = vadd.f32 %v1181, %v2211
      %s2216 = scalar_lea.vmem %s9, 32
      %v2217 = vld [vmem:[%s2216] sm:$0xff]
      %v2218 = vld [vmem:[%s2216 + $0x8] sm:$0xff]
      %v2220 = vsel %vm423, %v1693, 0
      %v2223 = vsel %vm423, %v1699, 0
      %2225 = vmatprep.subr.mxu0 0.0
      %v2226 = vand.u32 %v2217, 4294901760
      %2227 = vmatpush1.msra.mxu0 %v2226
      %2228 = vmatprep.subr.mxu0 0.0
      %v2229 = vand.u32 %v2218, 4294901760
      %2230 = vmatpush1.msra.mxu0 %v2229
      %2231 = vmatprep.subr.mxu0 0.0
      %2232 = vmatpush1.msra.mxu0 0.0
      %2233 = vmatprep.subr.mxu0 0.0
      %2234 = vmatpush1.msra.mxu0 0.0
      %2235 = vmatprep.subr.mxu0 0.0
      %2236 = vmatpush1.msra.mxu0 0.0
      %2237 = vmatprep.subr.mxu0 0.0
      %2238 = vmatpush1.msra.mxu0 0.0
      %2239 = vmatprep.subr.mxu0 0.0
      %2240 = vmatpush1.msra.mxu0 0.0
      %2241 = vmatprep.subr.mxu0 0.0
      %2242 = vmatpush1.msra.mxu0 0.0
      %2243 = vmatprep.subr.mxu0 0.0
      %2244 = vmatpush1.msra.mxu0 0.0
      %2245 = vmatprep.subr.mxu0 0.0
      %2246 = vmatpush1.msra.mxu0 0.0
      %2247 = vmatprep.subr.mxu0 0.0
      %2248 = vmatpush1.msra.mxu0 0.0
      %2249 = vmatprep.subr.mxu0 0.0
      %2250 = vmatpush1.msra.mxu0 0.0
      %2251 = vmatprep.subr.mxu0 0.0
      %2252 = vmatpush1.msra.mxu0 0.0
      %2253 = vmatprep.subr.mxu0 0.0
      %2254 = vmatpush1.msra.mxu0 0.0
      %2255 = vmatprep.subr.mxu0 0.0
      %2256 = vmatpush1.msra.mxu0 0.0
      %2257 = vmatprep.subr.mxu0 0.0
      %2258 = vmatpush1.msra.mxu0 0.0
      %2259 = vmatprep.subr.mxu0 0.0
      %2260 = vmatpush1.msra.mxu0 0.0
      %2261 = vmatprep.subr.mxu0 0.0
      %2262 = vmatpush1.msra.mxu0 0.0
      %2263 = vmatprep.subr.mxu0 0.0
      %2264 = vmatpush1.msra.mxu0 0.0
      %2265 = vmatprep.subr.mxu0 0.0
      %2266 = vmatpush1.msra.mxu0 0.0
      %2267 = vmatprep.subr.mxu0 0.0
      %2268 = vmatpush1.msra.mxu0 0.0
      %2269 = vmatprep.subr.mxu0 0.0
      %2270 = vmatpush1.msra.mxu0 0.0
      %2271 = vmatprep.subr.mxu0 0.0
      %2272 = vmatpush1.msra.mxu0 0.0
      %2273 = vmatprep.subr.mxu0 0.0
      %2274 = vmatpush1.msra.mxu0 0.0
      %2275 = vmatprep.subr.mxu0 0.0
      %2276 = vmatpush1.msra.mxu0 0.0
      %2277 = vmatprep.subr.mxu0 0.0
      %2278 = vmatpush1.msra.mxu0 0.0
      %2279 = vmatprep.subr.mxu0 0.0
      %2280 = vmatpush1.msra.mxu0 0.0
      %2281 = vmatprep.subr.mxu0 0.0
      %2282 = vmatpush1.msra.mxu0 0.0
      %2283 = vmatprep.subr.mxu0 0.0
      %2284 = vmatpush1.msra.mxu0 0.0
      %2285 = vmatprep.subr.mxu0 0.0
      %2286 = vmatpush1.msra.mxu0 0.0
      %2287 = vmatprep.subr.mxu0 0.0
      %2288 = vmatpush1.msra.mxu0 0.0
      %2289 = vmatprep.subr.mxu0 0.0
      %2290 = vmatpush1.msra.mxu0 0.0
      %2291 = vmatprep.mubr.f32.mxu0 0.0
      %v2292 = vand.u32 %v2220, 4294901760
      %v2293 = vsub.f32 %v2220, %v2292
      %v2294 = vand.u32 %v2293, 4294901760
      %v2295 = vsub.f32 %v2293, %v2294
      %v2296 = vand.u32 %v2295, 4294901760
      %2297 = vmatmul.mubr.f32.gmra.mrb[0].mxu0 %v2296
      %v2298 = vpop.f32.mrb[0].mxu0
      %v2299 = vadd.f32 0.0, %v2298
      %v2300 = vpop.f32.mrb[0].mxu0
      %2301 = vmatprep.mubr.f32.mxu0 0.0
      %v2302 = vand.u32 %v2223, 4294901760
      %v2303 = vsub.f32 %v2223, %v2302
      %v2304 = vand.u32 %v2303, 4294901760
      %v2305 = vsub.f32 %v2303, %v2304
      %v2306 = vand.u32 %v2305, 4294901760
      %2307 = vmatmul.mubr.f32.gmra.mrb[0].mxu0 %v2306
      %v2308 = vpop.f32.mrb[0].mxu0
      %v2309 = vadd.f32 0.0, %v2308
      %v2310 = vpop.f32.mrb[0].mxu0
      %2311 = vdwg.mxu0
      %2312 = vmatprep.subr.mxu0 0.0
      %v2313 = vand.u32 %v2217, 4294901760
      %v2314 = vsub.f32 %v2217, %v2313
      %v2315 = vand.u32 %v2314, 4294901760
      %v2316 = vsub.f32 %v2314, %v2315
      %v2317 = vand.u32 %v2316, 4294901760
      %2318 = vmatpush1.msra.mxu0 %v2317
      %2319 = vmatprep.subr.mxu0 0.0
      %v2320 = vand.u32 %v2218, 4294901760
      %v2321 = vsub.f32 %v2218, %v2320
      %v2322 = vand.u32 %v2321, 4294901760
      %v2323 = vsub.f32 %v2321, %v2322
      %v2324 = vand.u32 %v2323, 4294901760
      %2325 = vmatpush1.msra.mxu0 %v2324
      %2326 = vmatprep.subr.mxu0 0.0
      %2327 = vmatpush1.msra.mxu0 0.0
      %2328 = vmatprep.subr.mxu0 0.0
      %2329 = vmatpush1.msra.mxu0 0.0
      %2330 = vmatprep.subr.mxu0 0.0
      %2331 = vmatpush1.msra.mxu0 0.0
      %2332 = vmatprep.subr.mxu0 0.0
      %2333 = vmatpush1.msra.mxu0 0.0
      %2334 = vmatprep.subr.mxu0 0.0
      %2335 = vmatpush1.msra.mxu0 0.0
      %2336 = vmatprep.subr.mxu0 0.0
      %2337 = vmatpush1.msra.mxu0 0.0
      %2338 = vmatprep.subr.mxu0 0.0
      %2339 = vmatpush1.msra.mxu0 0.0
      %2340 = vmatprep.subr.mxu0 0.0
      %2341 = vmatpush1.msra.mxu0 0.0
      %2342 = vmatprep.subr.mxu0 0.0
      %2343 = vmatpush1.msra.mxu0 0.0
      %2344 = vmatprep.subr.mxu0 0.0
      %2345 = vmatpush1.msra.mxu0 0.0
      %2346 = vmatprep.subr.mxu0 0.0
      %2347 = vmatpush1.msra.mxu0 0.0
      %2348 = vmatprep.subr.mxu0 0.0
      %2349 = vmatpush1.msra.mxu0 0.0
      %2350 = vmatprep.subr.mxu0 0.0
      %2351 = vmatpush1.msra.mxu0 0.0
      %2352 = vmatprep.subr.mxu0 0.0
      %2353 = vmatpush1.msra.mxu0 0.0
      %2354 = vmatprep.subr.mxu0 0.0
      %2355 = vmatpush1.msra.mxu0 0.0
      %2356 = vmatprep.subr.mxu0 0.0
      %2357 = vmatpush1.msra.mxu0 0.0
      %2358 = vmatprep.subr.mxu0 0.0
      %2359 = vmatpush1.msra.mxu0 0.0
      %2360 = vmatprep.subr.mxu0 0.0
      %2361 = vmatpush1.msra.mxu0 0.0
      %2362 = vmatprep.subr.mxu0 0.0
      %2363 = vmatpush1.msra.mxu0 0.0
      %2364 = vmatprep.subr.mxu0 0.0
      %2365 = vmatpush1.msra.mxu0 0.0
      %2366 = vmatprep.subr.mxu0 0.0
      %2367 = vmatpush1.msra.mxu0 0.0
      %2368 = vmatprep.subr.mxu0 0.0
      %2369 = vmatpush1.msra.mxu0 0.0
      %2370 = vmatprep.subr.mxu0 0.0
      %2371 = vmatpush1.msra.mxu0 0.0
      %2372 = vmatprep.subr.mxu0 0.0
      %2373 = vmatpush1.msra.mxu0 0.0
      %2374 = vmatprep.subr.mxu0 0.0
      %2375 = vmatpush1.msra.mxu0 0.0
      %2376 = vmatprep.subr.mxu0 0.0
      %2377 = vmatpush1.msra.mxu0 0.0
      %2378 = vmatprep.subr.mxu0 0.0
      %2379 = vmatpush1.msra.mxu0 0.0
      %2380 = vmatprep.subr.mxu0 0.0
      %2381 = vmatpush1.msra.mxu0 0.0
      %2382 = vmatprep.subr.mxu0 0.0
      %2383 = vmatpush1.msra.mxu0 0.0
      %2384 = vmatprep.subr.mxu0 0.0
      %2385 = vmatpush1.msra.mxu0 0.0
      %2386 = vmatprep.mubr.f32.mxu0 0.0
      %v2387 = vand.u32 %v2220, 4294901760
      %2388 = vmatmul.mubr.f32.gmra.mrb[0].mxu0 %v2387
      %v2389 = vpop.f32.mrb[0].mxu0
      %v2390 = vadd.f32 %v2299, %v2389
      %v2391 = vpop.f32.mrb[0].mxu0
      %2392 = vmatprep.mubr.f32.mxu0 0.0
      %v2393 = vand.u32 %v2223, 4294901760
      %2394 = vmatmul.mubr.f32.gmra.mrb[0].mxu0 %v2393
      %v2395 = vpop.f32.mrb[0].mxu0
      %v2396 = vadd.f32 %v2309, %v2395
      %v2397 = vpop.f32.mrb[0].mxu0
      %2398 = vdwg.mxu0
      %2399 = vmatprep.subr.mxu0 0.0
      %v2400 = vand.u32 %v2217, 4294901760
      %v2401 = vsub.f32 %v2217, %v2400
      %2402 = vmatpush1.msra.mxu0 %v2401
      %2403 = vmatprep.subr.mxu0 0.0
      %v2404 = vand.u32 %v2218, 4294901760
      %v2405 = vsub.f32 %v2218, %v2404
      %2406 = vmatpush1.msra.mxu0 %v2405
      %2407 = vmatprep.subr.mxu0 0.0
      %2408 = vmatpush1.msra.mxu0 0.0
      %2409 = vmatprep.subr.mxu0 0.0
      %2410 = vmatpush1.msra.mxu0 0.0
      %2411 = vmatprep.subr.mxu0 0.0
      %2412 = vmatpush1.msra.mxu0 0.0
      %2413 = vmatprep.subr.mxu0 0.0
      %2414 = vmatpush1.msra.mxu0 0.0
      %2415 = vmatprep.subr.mxu0 0.0
      %2416 = vmatpush1.msra.mxu0 0.0
      %2417 = vmatprep.subr.mxu0 0.0
      %2418 = vmatpush1.msra.mxu0 0.0
      %2419 = vmatprep.subr.mxu0 0.0
      %2420 = vmatpush1.msra.mxu0 0.0
      %2421 = vmatprep.subr.mxu0 0.0
      %2422 = vmatpush1.msra.mxu0 0.0
      %2423 = vmatprep.subr.mxu0 0.0
      %2424 = vmatpush1.msra.mxu0 0.0
      %2425 = vmatprep.subr.mxu0 0.0
      %2426 = vmatpush1.msra.mxu0 0.0
      %2427 = vmatprep.subr.mxu0 0.0
      %2428 = vmatpush1.msra.mxu0 0.0
      %2429 = vmatprep.subr.mxu0 0.0
      %2430 = vmatpush1.msra.mxu0 0.0
      %2431 = vmatprep.subr.mxu0 0.0
      %2432 = vmatpush1.msra.mxu0 0.0
      %2433 = vmatprep.subr.mxu0 0.0
      %2434 = vmatpush1.msra.mxu0 0.0
      %2435 = vmatprep.subr.mxu0 0.0
      %2436 = vmatpush1.msra.mxu0 0.0
      %2437 = vmatprep.subr.mxu0 0.0
      %2438 = vmatpush1.msra.mxu0 0.0
      %2439 = vmatprep.subr.mxu0 0.0
      %2440 = vmatpush1.msra.mxu0 0.0
      %2441 = vmatprep.subr.mxu0 0.0
      %2442 = vmatpush1.msra.mxu0 0.0
      %2443 = vmatprep.subr.mxu0 0.0
      %2444 = vmatpush1.msra.mxu0 0.0
      %2445 = vmatprep.subr.mxu0 0.0
      %2446 = vmatpush1.msra.mxu0 0.0
      %2447 = vmatprep.subr.mxu0 0.0
      %2448 = vmatpush1.msra.mxu0 0.0
      %2449 = vmatprep.subr.mxu0 0.0
      %2450 = vmatpush1.msra.mxu0 0.0
      %2451 = vmatprep.subr.mxu0 0.0
      %2452 = vmatpush1.msra.mxu0 0.0
      %2453 = vmatprep.subr.mxu0 0.0
      %2454 = vmatpush1.msra.mxu0 0.0
      %2455 = vmatprep.subr.mxu0 0.0
      %2456 = vmatpush1.msra.mxu0 0.0
      %2457 = vmatprep.subr.mxu0 0.0
      %2458 = vmatpush1.msra.mxu0 0.0
      %2459 = vmatprep.subr.mxu0 0.0
      %2460 = vmatpush1.msra.mxu0 0.0
      %2461 = vmatprep.subr.mxu0 0.0
      %2462 = vmatpush1.msra.mxu0 0.0
      %2463 = vmatprep.subr.mxu0 0.0
      %2464 = vmatpush1.msra.mxu0 0.0
      %2465 = vmatprep.subr.mxu0 0.0
      %2466 = vmatpush1.msra.mxu0 0.0
      %2467 = vmatprep.mubr.f32.mxu0 0.0
      %v2468 = vand.u32 %v2220, 4294901760
      %v2469 = vsub.f32 %v2220, %v2468
      %2470 = vmatmul.mubr.f32.gmra.mrb[0].mxu0 %v2469
      %v2471 = vpop.f32.mrb[0].mxu0
      %v2472 = vadd.f32 %v2390, %v2471
      %v2473 = vpop.f32.mrb[0].mxu0
      %2474 = vmatprep.mubr.f32.mxu0 0.0
      %v2475 = vand.u32 %v2223, 4294901760
      %v2476 = vsub.f32 %v2223, %v2475
      %2477 = vmatmul.mubr.f32.gmra.mrb[0].mxu0 %v2476
      %v2478 = vpop.f32.mrb[0].mxu0
      %v2479 = vadd.f32 %v2396, %v2478
      %v2480 = vpop.f32.mrb[0].mxu0
      %2481 = vdwg.mxu0
      %2482 = vmatprep.subr.mxu0 0.0
      %v2483 = vand.u32 %v2217, 4294901760
      %2484 = vmatpush1.msra.mxu0 %v2483
      %2485 = vmatprep.subr.mxu0 0.0
      %v2486 = vand.u32 %v2218, 4294901760
      %2487 = vmatpush1.msra.mxu0 %v2486
      %2488 = vmatprep.subr.mxu0 0.0
      %2489 = vmatpush1.msra.mxu0 0.0
      %2490 = vmatprep.subr.mxu0 0.0
      %2491 = vmatpush1.msra.mxu0 0.0
      %2492 = vmatprep.subr.mxu0 0.0
      %2493 = vmatpush1.msra.mxu0 0.0
      %2494 = vmatprep.subr.mxu0 0.0
      %2495 = vmatpush1.msra.mxu0 0.0
      %2496 = vmatprep.subr.mxu0 0.0
      %2497 = vmatpush1.msra.mxu0 0.0
      %2498 = vmatprep.subr.mxu0 0.0
      %2499 = vmatpush1.msra.mxu0 0.0
      %2500 = vmatprep.subr.mxu0 0.0
      %2501 = vmatpush1.msra.mxu0 0.0
      %2502 = vmatprep.subr.mxu0 0.0
      %2503 = vmatpush1.msra.mxu0 0.0
      %2504 = vmatprep.subr.mxu0 0.0
      %2505 = vmatpush1.msra.mxu0 0.0
      %2506 = vmatprep.subr.mxu0 0.0
      %2507 = vmatpush1.msra.mxu0 0.0
      %2508 = vmatprep.subr.mxu0 0.0
      %2509 = vmatpush1.msra.mxu0 0.0
      %2510 = vmatprep.subr.mxu0 0.0
      %2511 = vmatpush1.msra.mxu0 0.0
      %2512 = vmatprep.subr.mxu0 0.0
      %2513 = vmatpush1.msra.mxu0 0.0
      %2514 = vmatprep.subr.mxu0 0.0
      %2515 = vmatpush1.msra.mxu0 0.0
      %2516 = vmatprep.subr.mxu0 0.0
      %2517 = vmatpush1.msra.mxu0 0.0
      %2518 = vmatprep.subr.mxu0 0.0
      %2519 = vmatpush1.msra.mxu0 0.0
      %2520 = vmatprep.subr.mxu0 0.0
      %2521 = vmatpush1.msra.mxu0 0.0
      %2522 = vmatprep.subr.mxu0 0.0
      %2523 = vmatpush1.msra.mxu0 0.0
      %2524 = vmatprep.subr.mxu0 0.0
      %2525 = vmatpush1.msra.mxu0 0.0
      %2526 = vmatprep.subr.mxu0 0.0
      %2527 = vmatpush1.msra.mxu0 0.0
      %2528 = vmatprep.subr.mxu0 0.0
      %2529 = vmatpush1.msra.mxu0 0.0
      %2530 = vmatprep.subr.mxu0 0.0
      %2531 = vmatpush1.msra.mxu0 0.0
      %2532 = vmatprep.subr.mxu0 0.0
      %2533 = vmatpush1.msra.mxu0 0.0
      %2534 = vmatprep.subr.mxu0 0.0
      %2535 = vmatpush1.msra.mxu0 0.0
      %2536 = vmatprep.subr.mxu0 0.0
      %2537 = vmatpush1.msra.mxu0 0.0
      %2538 = vmatprep.subr.mxu0 0.0
      %2539 = vmatpush1.msra.mxu0 0.0
      %2540 = vmatprep.subr.mxu0 0.0
      %2541 = vmatpush1.msra.mxu0 0.0
      %2542 = vmatprep.subr.mxu0 0.0
      %2543 = vmatpush1.msra.mxu0 0.0
      %2544 = vmatprep.subr.mxu0 0.0
      %2545 = vmatpush1.msra.mxu0 0.0
      %2546 = vmatprep.subr.mxu0 0.0
      %2547 = vmatpush1.msra.mxu0 0.0
      %2548 = vmatprep.mubr.f32.mxu0 0.0
      %v2549 = vand.u32 %v2220, 4294901760
      %v2550 = vsub.f32 %v2220, %v2549
      %v2551 = vand.u32 %v2550, 4294901760
      %2552 = vmatmul.mubr.f32.gmra.mrb[0].mxu0 %v2551
      %v2553 = vpop.f32.mrb[0].mxu0
      %v2554 = vadd.f32 %v2472, %v2553
      %v2555 = vpop.f32.mrb[0].mxu0
      %2556 = vmatprep.mubr.f32.mxu0 0.0
      %v2557 = vand.u32 %v2223, 4294901760
      %v2558 = vsub.f32 %v2223, %v2557
      %v2559 = vand.u32 %v2558, 4294901760
      %2560 = vmatmul.mubr.f32.gmra.mrb[0].mxu0 %v2559
      %v2561 = vpop.f32.mrb[0].mxu0
      %v2562 = vadd.f32 %v2479, %v2561
      %v2563 = vpop.f32.mrb[0].mxu0
      %2564 = vdwg.mxu0
      %2565 = vmatprep.subr.mxu0 0.0
      %v2566 = vand.u32 %v2217, 4294901760
      %v2567 = vsub.f32 %v2217, %v2566
      %v2568 = vand.u32 %v2567, 4294901760
      %2569 = vmatpush1.msra.mxu0 %v2568
      %2570 = vmatprep.subr.mxu0 0.0
      %v2571 = vand.u32 %v2218, 4294901760
      %v2572 = vsub.f32 %v2218, %v2571
      %v2573 = vand.u32 %v2572, 4294901760
      %2574 = vmatpush1.msra.mxu0 %v2573
      %2575 = vmatprep.subr.mxu0 0.0
      %2576 = vmatpush1.msra.mxu0 0.0
      %2577 = vmatprep.subr.mxu0 0.0
      %2578 = vmatpush1.msra.mxu0 0.0
      %2579 = vmatprep.subr.mxu0 0.0
      %2580 = vmatpush1.msra.mxu0 0.0
      %2581 = vmatprep.subr.mxu0 0.0
      %2582 = vmatpush1.msra.mxu0 0.0
      %2583 = vmatprep.subr.mxu0 0.0
      %2584 = vmatpush1.msra.mxu0 0.0
      %2585 = vmatprep.subr.mxu0 0.0
      %2586 = vmatpush1.msra.mxu0 0.0
      %2587 = vmatprep.subr.mxu0 0.0
      %2588 = vmatpush1.msra.mxu0 0.0
      %2589 = vmatprep.subr.mxu0 0.0
      %2590 = vmatpush1.msra.mxu0 0.0
      %2591 = vmatprep.subr.mxu0 0.0
      %2592 = vmatpush1.msra.mxu0 0.0
      %2593 = vmatprep.subr.mxu0 0.0
      %2594 = vmatpush1.msra.mxu0 0.0
      %2595 = vmatprep.subr.mxu0 0.0
      %2596 = vmatpush1.msra.mxu0 0.0
      %2597 = vmatprep.subr.mxu0 0.0
      %2598 = vmatpush1.msra.mxu0 0.0
      %2599 = vmatprep.subr.mxu0 0.0
      %2600 = vmatpush1.msra.mxu0 0.0
      %2601 = vmatprep.subr.mxu0 0.0
      %2602 = vmatpush1.msra.mxu0 0.0
      %2603 = vmatprep.subr.mxu0 0.0
      %2604 = vmatpush1.msra.mxu0 0.0
      %2605 = vmatprep.subr.mxu0 0.0
      %2606 = vmatpush1.msra.mxu0 0.0
      %2607 = vmatprep.subr.mxu0 0.0
      %2608 = vmatpush1.msra.mxu0 0.0
      %2609 = vmatprep.subr.mxu0 0.0
      %2610 = vmatpush1.msra.mxu0 0.0
      %2611 = vmatprep.subr.mxu0 0.0
      %2612 = vmatpush1.msra.mxu0 0.0
      %2613 = vmatprep.subr.mxu0 0.0
      %2614 = vmatpush1.msra.mxu0 0.0
      %2615 = vmatprep.subr.mxu0 0.0
      %2616 = vmatpush1.msra.mxu0 0.0
      %2617 = vmatprep.subr.mxu0 0.0
      %2618 = vmatpush1.msra.mxu0 0.0
      %2619 = vmatprep.subr.mxu0 0.0
      %2620 = vmatpush1.msra.mxu0 0.0
      %2621 = vmatprep.subr.mxu0 0.0
      %2622 = vmatpush1.msra.mxu0 0.0
      %2623 = vmatprep.subr.mxu0 0.0
      %2624 = vmatpush1.msra.mxu0 0.0
      %2625 = vmatprep.subr.mxu0 0.0
      %2626 = vmatpush1.msra.mxu0 0.0
      %2627 = vmatprep.subr.mxu0 0.0
      %2628 = vmatpush1.msra.mxu0 0.0
      %2629 = vmatprep.subr.mxu0 0.0
      %2630 = vmatpush1.msra.mxu0 0.0
      %2631 = vmatprep.subr.mxu0 0.0
      %2632 = vmatpush1.msra.mxu0 0.0
      %2633 = vmatprep.subr.mxu0 0.0
      %2634 = vmatpush1.msra.mxu0 0.0
      %2635 = vmatprep.mubr.f32.mxu0 0.0
      %v2636 = vand.u32 %v2220, 4294901760
      %2637 = vmatmul.mubr.f32.gmra.mrb[0].mxu0 %v2636
      %v2638 = vpop.f32.mrb[0].mxu0
      %v2639 = vadd.f32 %v2554, %v2638
      %v2640 = vpop.f32.mrb[0].mxu0
      %2641 = vmatprep.mubr.f32.mxu0 0.0
      %v2642 = vand.u32 %v2223, 4294901760
      %2643 = vmatmul.mubr.f32.gmra.mrb[0].mxu0 %v2642
      %v2644 = vpop.f32.mrb[0].mxu0
      %v2645 = vadd.f32 %v2562, %v2644
      %v2646 = vpop.f32.mrb[0].mxu0
      %2647 = vdwg.mxu0
      %2648 = vmatprep.subr.mxu0 0.0
      %v2649 = vand.u32 %v2217, 4294901760
      %2650 = vmatpush1.msra.mxu0 %v2649
      %2651 = vmatprep.subr.mxu0 0.0
      %v2652 = vand.u32 %v2218, 4294901760
      %2653 = vmatpush1.msra.mxu0 %v2652
      %2654 = vmatprep.subr.mxu0 0.0
      %2655 = vmatpush1.msra.mxu0 0.0
      %2656 = vmatprep.subr.mxu0 0.0
      %2657 = vmatpush1.msra.mxu0 0.0
      %2658 = vmatprep.subr.mxu0 0.0
      %2659 = vmatpush1.msra.mxu0 0.0
      %2660 = vmatprep.subr.mxu0 0.0
      %2661 = vmatpush1.msra.mxu0 0.0
      %2662 = vmatprep.subr.mxu0 0.0
      %2663 = vmatpush1.msra.mxu0 0.0
      %2664 = vmatprep.subr.mxu0 0.0
      %2665 = vmatpush1.msra.mxu0 0.0
      %2666 = vmatprep.subr.mxu0 0.0
      %2667 = vmatpush1.msra.mxu0 0.0
      %2668 = vmatprep.subr.mxu0 0.0
      %2669 = vmatpush1.msra.mxu0 0.0
      %2670 = vmatprep.subr.mxu0 0.0
      %2671 = vmatpush1.msra.mxu0 0.0
      %2672 = vmatprep.subr.mxu0 0.0
      %2673 = vmatpush1.msra.mxu0 0.0
      %2674 = vmatprep.subr.mxu0 0.0
      %2675 = vmatpush1.msra.mxu0 0.0
      %2676 = vmatprep.subr.mxu0 0.0
      %2677 = vmatpush1.msra.mxu0 0.0
      %2678 = vmatprep.subr.mxu0 0.0
      %2679 = vmatpush1.msra.mxu0 0.0
      %2680 = vmatprep.subr.mxu0 0.0
      %2681 = vmatpush1.msra.mxu0 0.0
      %2682 = vmatprep.subr.mxu0 0.0
      %2683 = vmatpush1.msra.mxu0 0.0
      %2684 = vmatprep.subr.mxu0 0.0
      %2685 = vmatpush1.msra.mxu0 0.0
      %2686 = vmatprep.subr.mxu0 0.0
      %2687 = vmatpush1.msra.mxu0 0.0
      %2688 = vmatprep.subr.mxu0 0.0
      %2689 = vmatpush1.msra.mxu0 0.0
      %2690 = vmatprep.subr.mxu0 0.0
      %2691 = vmatpush1.msra.mxu0 0.0
      %2692 = vmatprep.subr.mxu0 0.0
      %2693 = vmatpush1.msra.mxu0 0.0
      %2694 = vmatprep.subr.mxu0 0.0
      %2695 = vmatpush1.msra.mxu0 0.0
      %2696 = vmatprep.subr.mxu0 0.0
      %2697 = vmatpush1.msra.mxu0 0.0
      %2698 = vmatprep.subr.mxu0 0.0
      %2699 = vmatpush1.msra.mxu0 0.0
      %2700 = vmatprep.subr.mxu0 0.0
      %2701 = vmatpush1.msra.mxu0 0.0
      %2702 = vmatprep.subr.mxu0 0.0
      %2703 = vmatpush1.msra.mxu0 0.0
      %2704 = vmatprep.subr.mxu0 0.0
      %2705 = vmatpush1.msra.mxu0 0.0
      %2706 = vmatprep.subr.mxu0 0.0
      %2707 = vmatpush1.msra.mxu0 0.0
      %2708 = vmatprep.subr.mxu0 0.0
      %2709 = vmatpush1.msra.mxu0 0.0
      %2710 = vmatprep.subr.mxu0 0.0
      %2711 = vmatpush1.msra.mxu0 0.0
      %2712 = vmatprep.subr.mxu0 0.0
      %2713 = vmatpush1.msra.mxu0 0.0
      %2714 = vmatprep.mubr.f32.mxu0 0.0
      %v2715 = vand.u32 %v2220, 4294901760
      %2716 = vmatmul.mubr.f32.gmra.mrb[0].mxu0 %v2715
      %v2717 = vpop.f32.mrb[0].mxu0
      %v2718 = vadd.f32 %v2639, %v2717
      %v2719 = vpop.f32.mrb[0].mxu0
      %2720 = vmatprep.mubr.f32.mxu0 0.0
      %v2721 = vand.u32 %v2223, 4294901760
      %2722 = vmatmul.mubr.f32.gmra.mrb[0].mxu0 %v2721
      %v2723 = vpop.f32.mrb[0].mxu0
      %v2724 = vadd.f32 %v2645, %v2723
      %v2725 = vpop.f32.mrb[0].mxu0
      %2726 = vdwg.mxu0
      %v2727 = vadd.f32 %v2214, %v2718
      %v2728 = vadd.f32 %v2215, %v2724
      %s2729 = scalar_lea.vmem %s7, 16
      %v2730 = vld [vmem:[%s2729] sm:$0xff]
      %v2731 = vld [vmem:[%s2729 + $0x8] sm:$0xff]
      %s2732 = scalar_lea.vmem %s8, 16
      %v2733 = vld [vmem:[%s2732] sm:$0xff]
      %v2734 = vld [vmem:[%s2732 + $0x8] sm:$0xff]
      %2735 = vrot.lane.b32.xlu0 %v1172, 80
      %v2736 = vpop.permute.xlu0 %2735
      %2737 = vrot.lane.b32.xlu0 %v1173, 80
      %v2738 = vpop.permute.xlu0 %2737
      %v2742 = vsel %vm423, %v2730, 0
      %v2745 = vsel %vm423, %v2731, 0
      %2747 = vmatprep.subr.mxu0 0.0
      %v2748 = vand.u32 %v2736, 4294901760
      %2749 = vmatpush1.msra.mxu0 %v2748
      %2750 = vmatprep.subr.mxu0 0.0
      %v2751 = vand.u32 %v2738, 4294901760
      %2752 = vmatpush1.msra.mxu0 %v2751
      %2753 = vmatprep.subr.mxu0 0.0
      %2754 = vmatpush1.msra.mxu0 0.0
      %2755 = vmatprep.subr.mxu0 0.0
      %2756 = vmatpush1.msra.mxu0 0.0
      %2757 = vmatprep.subr.mxu0 0.0
      %2758 = vmatpush1.msra.mxu0 0.0
      %2759 = vmatprep.subr.mxu0 0.0
      %2760 = vmatpush1.msra.mxu0 0.0
      %2761 = vmatprep.subr.mxu0 0.0
      %2762 = vmatpush1.msra.mxu0 0.0
      %2763 = vmatprep.subr.mxu0 0.0
      %2764 = vmatpush1.msra.mxu0 0.0
      %2765 = vmatprep.subr.mxu0 0.0
      %2766 = vmatpush1.msra.mxu0 0.0
      %2767 = vmatprep.subr.mxu0 0.0
      %2768 = vmatpush1.msra.mxu0 0.0
      %2769 = vmatprep.subr.mxu0 0.0
      %2770 = vmatpush1.msra.mxu0 0.0
      %2771 = vmatprep.subr.mxu0 0.0
      %2772 = vmatpush1.msra.mxu0 0.0
      %2773 = vmatprep.subr.mxu0 0.0
      %2774 = vmatpush1.msra.mxu0 0.0
      %2775 = vmatprep.subr.mxu0 0.0
      %2776 = vmatpush1.msra.mxu0 0.0
      %2777 = vmatprep.subr.mxu0 0.0
      %2778 = vmatpush1.msra.mxu0 0.0
      %2779 = vmatprep.subr.mxu0 0.0
      %2780 = vmatpush1.msra.mxu0 0.0
      %2781 = vmatprep.subr.mxu0 0.0
      %2782 = vmatpush1.msra.mxu0 0.0
      %2783 = vmatprep.subr.mxu0 0.0
      %2784 = vmatpush1.msra.mxu0 0.0
      %2785 = vmatprep.subr.mxu0 0.0
      %2786 = vmatpush1.msra.mxu0 0.0
      %2787 = vmatprep.subr.mxu0 0.0
      %2788 = vmatpush1.msra.mxu0 0.0
      %2789 = vmatprep.subr.mxu0 0.0
      %2790 = vmatpush1.msra.mxu0 0.0
      %2791 = vmatprep.subr.mxu0 0.0
      %2792 = vmatpush1.msra.mxu0 0.0
      %2793 = vmatprep.subr.mxu0 0.0
      %2794 = vmatpush1.msra.mxu0 0.0
      %2795 = vmatprep.subr.mxu0 0.0
      %2796 = vmatpush1.msra.mxu0 0.0
      %2797 = vmatprep.subr.mxu0 0.0
      %2798 = vmatpush1.msra.mxu0 0.0
      %2799 = vmatprep.subr.mxu0 0.0
      %2800 = vmatpush1.msra.mxu0 0.0
      %2801 = vmatprep.subr.mxu0 0.0
      %2802 = vmatpush1.msra.mxu0 0.0
      %2803 = vmatprep.subr.mxu0 0.0
      %2804 = vmatpush1.msra.mxu0 0.0
      %2805 = vmatprep.subr.mxu0 0.0
      %2806 = vmatpush1.msra.mxu0 0.0
      %2807 = vmatprep.subr.mxu0 0.0
      %2808 = vmatpush1.msra.mxu0 0.0
      %2809 = vmatprep.subr.mxu0 0.0
      %2810 = vmatpush1.msra.mxu0 0.0
      %2811 = vmatprep.subr.mxu0 0.0
      %2812 = vmatpush1.msra.mxu0 0.0
      %2813 = vmatprep.mubr.f32.mxu0 0.0
      %v2814 = vand.u32 %v2742, 4294901760
      %v2815 = vsub.f32 %v2742, %v2814
      %v2816 = vand.u32 %v2815, 4294901760
      %v2817 = vsub.f32 %v2815, %v2816
      %v2818 = vand.u32 %v2817, 4294901760
      %2819 = vmatmul.mubr.f32.gmra.mrb[0].mxu0 %v2818
      %v2820 = vpop.f32.mrb[0].mxu0
      %v2821 = vadd.f32 %v2733, %v2820
      %v2822 = vpop.f32.mrb[0].mxu0
      %2823 = vmatprep.mubr.f32.mxu0 0.0
      %v2824 = vand.u32 %v2745, 4294901760
      %v2825 = vsub.f32 %v2745, %v2824
      %v2826 = vand.u32 %v2825, 4294901760
      %v2827 = vsub.f32 %v2825, %v2826
      %v2828 = vand.u32 %v2827, 4294901760
      %2829 = vmatmul.mubr.f32.gmra.mrb[0].mxu0 %v2828
      %v2830 = vpop.f32.mrb[0].mxu0
      %v2831 = vadd.f32 %v2734, %v2830
      %v2832 = vpop.f32.mrb[0].mxu0
      %2833 = vdwg.mxu0
      %2834 = vmatprep.subr.mxu0 0.0
      %v2835 = vand.u32 %v2736, 4294901760
      %v2836 = vsub.f32 %v2736, %v2835
      %v2837 = vand.u32 %v2836, 4294901760
      %v2838 = vsub.f32 %v2836, %v2837
      %v2839 = vand.u32 %v2838, 4294901760
      %2840 = vmatpush1.msra.mxu0 %v2839
      %2841 = vmatprep.subr.mxu0 0.0
      %v2842 = vand.u32 %v2738, 4294901760
      %v2843 = vsub.f32 %v2738, %v2842
      %v2844 = vand.u32 %v2843, 4294901760
      %v2845 = vsub.f32 %v2843, %v2844
      %v2846 = vand.u32 %v2845, 4294901760
      %2847 = vmatpush1.msra.mxu0 %v2846
      %2848 = vmatprep.subr.mxu0 0.0
      %2849 = vmatpush1.msra.mxu0 0.0
      %2850 = vmatprep.subr.mxu0 0.0
      %2851 = vmatpush1.msra.mxu0 0.0
      %2852 = vmatprep.subr.mxu0 0.0
      %2853 = vmatpush1.msra.mxu0 0.0
      %2854 = vmatprep.subr.mxu0 0.0
      %2855 = vmatpush1.msra.mxu0 0.0
      %2856 = vmatprep.subr.mxu0 0.0
      %2857 = vmatpush1.msra.mxu0 0.0
      %2858 = vmatprep.subr.mxu0 0.0
      %2859 = vmatpush1.msra.mxu0 0.0
      %2860 = vmatprep.subr.mxu0 0.0
      %2861 = vmatpush1.msra.mxu0 0.0
      %2862 = vmatprep.subr.mxu0 0.0
      %2863 = vmatpush1.msra.mxu0 0.0
      %2864 = vmatprep.subr.mxu0 0.0
      %2865 = vmatpush1.msra.mxu0 0.0
      %2866 = vmatprep.subr.mxu0 0.0
      %2867 = vmatpush1.msra.mxu0 0.0
      %2868 = vmatprep.subr.mxu0 0.0
      %2869 = vmatpush1.msra.mxu0 0.0
      %2870 = vmatprep.subr.mxu0 0.0
      %2871 = vmatpush1.msra.mxu0 0.0
      %2872 = vmatprep.subr.mxu0 0.0
      %2873 = vmatpush1.msra.mxu0 0.0
      %2874 = vmatprep.subr.mxu0 0.0
      %2875 = vmatpush1.msra.mxu0 0.0
      %2876 = vmatprep.subr.mxu0 0.0
      %2877 = vmatpush1.msra.mxu0 0.0
      %2878 = vmatprep.subr.mxu0 0.0
      %2879 = vmatpush1.msra.mxu0 0.0
      %2880 = vmatprep.subr.mxu0 0.0
      %2881 = vmatpush1.msra.mxu0 0.0
      %2882 = vmatprep.subr.mxu0 0.0
      %2883 = vmatpush1.msra.mxu0 0.0
      %2884 = vmatprep.subr.mxu0 0.0
      %2885 = vmatpush1.msra.mxu0 0.0
      %2886 = vmatprep.subr.mxu0 0.0
      %2887 = vmatpush1.msra.mxu0 0.0
      %2888 = vmatprep.subr.mxu0 0.0
      %2889 = vmatpush1.msra.mxu0 0.0
      %2890 = vmatprep.subr.mxu0 0.0
      %2891 = vmatpush1.msra.mxu0 0.0
      %2892 = vmatprep.subr.mxu0 0.0
      %2893 = vmatpush1.msra.mxu0 0.0
      %2894 = vmatprep.subr.mxu0 0.0
      %2895 = vmatpush1.msra.mxu0 0.0
      %2896 = vmatprep.subr.mxu0 0.0
      %2897 = vmatpush1.msra.mxu0 0.0
      %2898 = vmatprep.subr.mxu0 0.0
      %2899 = vmatpush1.msra.mxu0 0.0
      %2900 = vmatprep.subr.mxu0 0.0
      %2901 = vmatpush1.msra.mxu0 0.0
      %2902 = vmatprep.subr.mxu0 0.0
      %2903 = vmatpush1.msra.mxu0 0.0
      %2904 = vmatprep.subr.mxu0 0.0
      %2905 = vmatpush1.msra.mxu0 0.0
      %2906 = vmatprep.subr.mxu0 0.0
      %2907 = vmatpush1.msra.mxu0 0.0
      %2908 = vmatprep.mubr.f32.mxu0 0.0
      %v2909 = vand.u32 %v2742, 4294901760
      %2910 = vmatmul.mubr.f32.gmra.mrb[0].mxu0 %v2909
      %v2911 = vpop.f32.mrb[0].mxu0
      %v2912 = vadd.f32 %v2821, %v2911
      %v2913 = vpop.f32.mrb[0].mxu0
      %2914 = vmatprep.mubr.f32.mxu0 0.0
      %v2915 = vand.u32 %v2745, 4294901760
      %2916 = vmatmul.mubr.f32.gmra.mrb[0].mxu0 %v2915
      %v2917 = vpop.f32.mrb[0].mxu0
      %v2918 = vadd.f32 %v2831, %v2917
      %v2919 = vpop.f32.mrb[0].mxu0
      %2920 = vdwg.mxu0
      %2921 = vmatprep.subr.mxu0 0.0
      %v2922 = vand.u32 %v2736, 4294901760
      %v2923 = vsub.f32 %v2736, %v2922
      %2924 = vmatpush1.msra.mxu0 %v2923
      %2925 = vmatprep.subr.mxu0 0.0
      %v2926 = vand.u32 %v2738, 4294901760
      %v2927 = vsub.f32 %v2738, %v2926
      %2928 = vmatpush1.msra.mxu0 %v2927
      %2929 = vmatprep.subr.mxu0 0.0
      %2930 = vmatpush1.msra.mxu0 0.0
      %2931 = vmatprep.subr.mxu0 0.0
      %2932 = vmatpush1.msra.mxu0 0.0
      %2933 = vmatprep.subr.mxu0 0.0
      %2934 = vmatpush1.msra.mxu0 0.0
      %2935 = vmatprep.subr.mxu0 0.0
      %2936 = vmatpush1.msra.mxu0 0.0
      %2937 = vmatprep.subr.mxu0 0.0
      %2938 = vmatpush1.msra.mxu0 0.0
      %2939 = vmatprep.subr.mxu0 0.0
      %2940 = vmatpush1.msra.mxu0 0.0
      %2941 = vmatprep.subr.mxu0 0.0
      %2942 = vmatpush1.msra.mxu0 0.0
      %2943 = vmatprep.subr.mxu0 0.0
      %2944 = vmatpush1.msra.mxu0 0.0
      %2945 = vmatprep.subr.mxu0 0.0
      %2946 = vmatpush1.msra.mxu0 0.0
      %2947 = vmatprep.subr.mxu0 0.0
      %2948 = vmatpush1.msra.mxu0 0.0
      %2949 = vmatprep.subr.mxu0 0.0
      %2950 = vmatpush1.msra.mxu0 0.0
      %2951 = vmatprep.subr.mxu0 0.0
      %2952 = vmatpush1.msra.mxu0 0.0
      %2953 = vmatprep.subr.mxu0 0.0
      %2954 = vmatpush1.msra.mxu0 0.0
      %2955 = vmatprep.subr.mxu0 0.0
      %2956 = vmatpush1.msra.mxu0 0.0
      %2957 = vmatprep.subr.mxu0 0.0
      %2958 = vmatpush1.msra.mxu0 0.0
      %2959 = vmatprep.subr.mxu0 0.0
      %2960 = vmatpush1.msra.mxu0 0.0
      %2961 = vmatprep.subr.mxu0 0.0
      %2962 = vmatpush1.msra.mxu0 0.0
      %2963 = vmatprep.subr.mxu0 0.0
      %2964 = vmatpush1.msra.mxu0 0.0
      %2965 = vmatprep.subr.mxu0 0.0
      %2966 = vmatpush1.msra.mxu0 0.0
      %2967 = vmatprep.subr.mxu0 0.0
      %2968 = vmatpush1.msra.mxu0 0.0
      %2969 = vmatprep.subr.mxu0 0.0
      %2970 = vmatpush1.msra.mxu0 0.0
      %2971 = vmatprep.subr.mxu0 0.0
      %2972 = vmatpush1.msra.mxu0 0.0
      %2973 = vmatprep.subr.mxu0 0.0
      %2974 = vmatpush1.msra.mxu0 0.0
      %2975 = vmatprep.subr.mxu0 0.0
      %2976 = vmatpush1.msra.mxu0 0.0
      %2977 = vmatprep.subr.mxu0 0.0
      %2978 = vmatpush1.msra.mxu0 0.0
      %2979 = vmatprep.subr.mxu0 0.0
      %2980 = vmatpush1.msra.mxu0 0.0
      %2981 = vmatprep.subr.mxu0 0.0
      %2982 = vmatpush1.msra.mxu0 0.0
      %2983 = vmatprep.subr.mxu0 0.0
      %2984 = vmatpush1.msra.mxu0 0.0
      %2985 = vmatprep.subr.mxu0 0.0
      %2986 = vmatpush1.msra.mxu0 0.0
      %2987 = vmatprep.subr.mxu0 0.0
      %2988 = vmatpush1.msra.mxu0 0.0
      %2989 = vmatprep.mubr.f32.mxu0 0.0
      %v2990 = vand.u32 %v2742, 4294901760
      %v2991 = vsub.f32 %v2742, %v2990
      %2992 = vmatmul.mubr.f32.gmra.mrb[0].mxu0 %v2991
      %v2993 = vpop.f32.mrb[0].mxu0
      %v2994 = vadd.f32 %v2912, %v2993
      %v2995 = vpop.f32.mrb[0].mxu0
      %2996 = vmatprep.mubr.f32.mxu0 0.0
      %v2997 = vand.u32 %v2745, 4294901760
      %v2998 = vsub.f32 %v2745, %v2997
      %2999 = vmatmul.mubr.f32.gmra.mrb[0].mxu0 %v2998
      %v3000 = vpop.f32.mrb[0].mxu0
      %v3001 = vadd.f32 %v2918, %v3000
      %v3002 = vpop.f32.mrb[0].mxu0
      %3003 = vdwg.mxu0
      %3004 = vmatprep.subr.mxu0 0.0
      %v3005 = vand.u32 %v2736, 4294901760
      %3006 = vmatpush1.msra.mxu0 %v3005
      %3007 = vmatprep.subr.mxu0 0.0
      %v3008 = vand.u32 %v2738, 4294901760
      %3009 = vmatpush1.msra.mxu0 %v3008
      %3010 = vmatprep.subr.mxu0 0.0
      %3011 = vmatpush1.msra.mxu0 0.0
      %3012 = vmatprep.subr.mxu0 0.0
      %3013 = vmatpush1.msra.mxu0 0.0
      %3014 = vmatprep.subr.mxu0 0.0
      %3015 = vmatpush1.msra.mxu0 0.0
      %3016 = vmatprep.subr.mxu0 0.0
      %3017 = vmatpush1.msra.mxu0 0.0
      %3018 = vmatprep.subr.mxu0 0.0
      %3019 = vmatpush1.msra.mxu0 0.0
      %3020 = vmatprep.subr.mxu0 0.0
      %3021 = vmatpush1.msra.mxu0 0.0
      %3022 = vmatprep.subr.mxu0 0.0
      %3023 = vmatpush1.msra.mxu0 0.0
      %3024 = vmatprep.subr.mxu0 0.0
      %3025 = vmatpush1.msra.mxu0 0.0
      %3026 = vmatprep.subr.mxu0 0.0
      %3027 = vmatpush1.msra.mxu0 0.0
      %3028 = vmatprep.subr.mxu0 0.0
      %3029 = vmatpush1.msra.mxu0 0.0
      %3030 = vmatprep.subr.mxu0 0.0
      %3031 = vmatpush1.msra.mxu0 0.0
      %3032 = vmatprep.subr.mxu0 0.0
      %3033 = vmatpush1.msra.mxu0 0.0
      %3034 = vmatprep.subr.mxu0 0.0
      %3035 = vmatpush1.msra.mxu0 0.0
      %3036 = vmatprep.subr.mxu0 0.0
      %3037 = vmatpush1.msra.mxu0 0.0
      %3038 = vmatprep.subr.mxu0 0.0
      %3039 = vmatpush1.msra.mxu0 0.0
      %3040 = vmatprep.subr.mxu0 0.0
      %3041 = vmatpush1.msra.mxu0 0.0
      %3042 = vmatprep.subr.mxu0 0.0
      %3043 = vmatpush1.msra.mxu0 0.0
      %3044 = vmatprep.subr.mxu0 0.0
      %3045 = vmatpush1.msra.mxu0 0.0
      %3046 = vmatprep.subr.mxu0 0.0
      %3047 = vmatpush1.msra.mxu0 0.0
      %3048 = vmatprep.subr.mxu0 0.0
      %3049 = vmatpush1.msra.mxu0 0.0
      %3050 = vmatprep.subr.mxu0 0.0
      %3051 = vmatpush1.msra.mxu0 0.0
      %3052 = vmatprep.subr.mxu0 0.0
      %3053 = vmatpush1.msra.mxu0 0.0
      %3054 = vmatprep.subr.mxu0 0.0
      %3055 = vmatpush1.msra.mxu0 0.0
      %3056 = vmatprep.subr.mxu0 0.0
      %3057 = vmatpush1.msra.mxu0 0.0
      %3058 = vmatprep.subr.mxu0 0.0
      %3059 = vmatpush1.msra.mxu0 0.0
      %3060 = vmatprep.subr.mxu0 0.0
      %3061 = vmatpush1.msra.mxu0 0.0
      %3062 = vmatprep.subr.mxu0 0.0
      %3063 = vmatpush1.msra.mxu0 0.0
      %3064 = vmatprep.subr.mxu0 0.0
      %3065 = vmatpush1.msra.mxu0 0.0
      %3066 = vmatprep.subr.mxu0 0.0
      %3067 = vmatpush1.msra.mxu0 0.0
      %3068 = vmatprep.subr.mxu0 0.0
      %3069 = vmatpush1.msra.mxu0 0.0
      %3070 = vmatprep.mubr.f32.mxu0 0.0
      %v3071 = vand.u32 %v2742, 4294901760
      %v3072 = vsub.f32 %v2742, %v3071
      %v3073 = vand.u32 %v3072, 4294901760
      %3074 = vmatmul.mubr.f32.gmra.mrb[0].mxu0 %v3073
      %v3075 = vpop.f32.mrb[0].mxu0
      %v3076 = vadd.f32 %v2994, %v3075
      %v3077 = vpop.f32.mrb[0].mxu0
      %3078 = vmatprep.mubr.f32.mxu0 0.0
      %v3079 = vand.u32 %v2745, 4294901760
      %v3080 = vsub.f32 %v2745, %v3079
      %v3081 = vand.u32 %v3080, 4294901760
      %3082 = vmatmul.mubr.f32.gmra.mrb[0].mxu0 %v3081
      %v3083 = vpop.f32.mrb[0].mxu0
      %v3084 = vadd.f32 %v3001, %v3083
      %v3085 = vpop.f32.mrb[0].mxu0
      %3086 = vdwg.mxu0
      %3087 = vmatprep.subr.mxu0 0.0
      %v3088 = vand.u32 %v2736, 4294901760
      %v3089 = vsub.f32 %v2736, %v3088
      %v3090 = vand.u32 %v3089, 4294901760
      %3091 = vmatpush1.msra.mxu0 %v3090
      %3092 = vmatprep.subr.mxu0 0.0
      %v3093 = vand.u32 %v2738, 4294901760
      %v3094 = vsub.f32 %v2738, %v3093
      %v3095 = vand.u32 %v3094, 4294901760
      %3096 = vmatpush1.msra.mxu0 %v3095
      %3097 = vmatprep.subr.mxu0 0.0
      %3098 = vmatpush1.msra.mxu0 0.0
      %3099 = vmatprep.subr.mxu0 0.0
      %3100 = vmatpush1.msra.mxu0 0.0
      %3101 = vmatprep.subr.mxu0 0.0
      %3102 = vmatpush1.msra.mxu0 0.0
      %3103 = vmatprep.subr.mxu0 0.0
      %3104 = vmatpush1.msra.mxu0 0.0
      %3105 = vmatprep.subr.mxu0 0.0
      %3106 = vmatpush1.msra.mxu0 0.0
      %3107 = vmatprep.subr.mxu0 0.0
      %3108 = vmatpush1.msra.mxu0 0.0
      %3109 = vmatprep.subr.mxu0 0.0
      %3110 = vmatpush1.msra.mxu0 0.0
      %3111 = vmatprep.subr.mxu0 0.0
      %3112 = vmatpush1.msra.mxu0 0.0
      %3113 = vmatprep.subr.mxu0 0.0
      %3114 = vmatpush1.msra.mxu0 0.0
      %3115 = vmatprep.subr.mxu0 0.0
      %3116 = vmatpush1.msra.mxu0 0.0
      %3117 = vmatprep.subr.mxu0 0.0
      %3118 = vmatpush1.msra.mxu0 0.0
      %3119 = vmatprep.subr.mxu0 0.0
      %3120 = vmatpush1.msra.mxu0 0.0
      %3121 = vmatprep.subr.mxu0 0.0
      %3122 = vmatpush1.msra.mxu0 0.0
      %3123 = vmatprep.subr.mxu0 0.0
      %3124 = vmatpush1.msra.mxu0 0.0
      %3125 = vmatprep.subr.mxu0 0.0
      %3126 = vmatpush1.msra.mxu0 0.0
      %3127 = vmatprep.subr.mxu0 0.0
      %3128 = vmatpush1.msra.mxu0 0.0
      %3129 = vmatprep.subr.mxu0 0.0
      %3130 = vmatpush1.msra.mxu0 0.0
      %3131 = vmatprep.subr.mxu0 0.0
      %3132 = vmatpush1.msra.mxu0 0.0
      %3133 = vmatprep.subr.mxu0 0.0
      %3134 = vmatpush1.msra.mxu0 0.0
      %3135 = vmatprep.subr.mxu0 0.0
      %3136 = vmatpush1.msra.mxu0 0.0
      %3137 = vmatprep.subr.mxu0 0.0
      %3138 = vmatpush1.msra.mxu0 0.0
      %3139 = vmatprep.subr.mxu0 0.0
      %3140 = vmatpush1.msra.mxu0 0.0
      %3141 = vmatprep.subr.mxu0 0.0
      %3142 = vmatpush1.msra.mxu0 0.0
      %3143 = vmatprep.subr.mxu0 0.0
      %3144 = vmatpush1.msra.mxu0 0.0
      %3145 = vmatprep.subr.mxu0 0.0
      %3146 = vmatpush1.msra.mxu0 0.0
      %3147 = vmatprep.subr.mxu0 0.0
      %3148 = vmatpush1.msra.mxu0 0.0
      %3149 = vmatprep.subr.mxu0 0.0
      %3150 = vmatpush1.msra.mxu0 0.0
      %3151 = vmatprep.subr.mxu0 0.0
      %3152 = vmatpush1.msra.mxu0 0.0
      %3153 = vmatprep.subr.mxu0 0.0
      %3154 = vmatpush1.msra.mxu0 0.0
      %3155 = vmatprep.subr.mxu0 0.0
      %3156 = vmatpush1.msra.mxu0 0.0
      %3157 = vmatprep.mubr.f32.mxu0 0.0
      %v3158 = vand.u32 %v2742, 4294901760
      %3159 = vmatmul.mubr.f32.gmra.mrb[0].mxu0 %v3158
      %v3160 = vpop.f32.mrb[0].mxu0
      %v3161 = vadd.f32 %v3076, %v3160
      %v3162 = vpop.f32.mrb[0].mxu0
      %3163 = vmatprep.mubr.f32.mxu0 0.0
      %v3164 = vand.u32 %v2745, 4294901760
      %3165 = vmatmul.mubr.f32.gmra.mrb[0].mxu0 %v3164
      %v3166 = vpop.f32.mrb[0].mxu0
      %v3167 = vadd.f32 %v3084, %v3166
      %v3168 = vpop.f32.mrb[0].mxu0
      %3169 = vdwg.mxu0
      %3170 = vmatprep.subr.mxu0 0.0
      %v3171 = vand.u32 %v2736, 4294901760
      %3172 = vmatpush1.msra.mxu0 %v3171
      %3173 = vmatprep.subr.mxu0 0.0
      %v3174 = vand.u32 %v2738, 4294901760
      %3175 = vmatpush1.msra.mxu0 %v3174
      %3176 = vmatprep.subr.mxu0 0.0
      %3177 = vmatpush1.msra.mxu0 0.0
      %3178 = vmatprep.subr.mxu0 0.0
      %3179 = vmatpush1.msra.mxu0 0.0
      %3180 = vmatprep.subr.mxu0 0.0
      %3181 = vmatpush1.msra.mxu0 0.0
      %3182 = vmatprep.subr.mxu0 0.0
      %3183 = vmatpush1.msra.mxu0 0.0
      %3184 = vmatprep.subr.mxu0 0.0
      %3185 = vmatpush1.msra.mxu0 0.0
      %3186 = vmatprep.subr.mxu0 0.0
      %3187 = vmatpush1.msra.mxu0 0.0
      %3188 = vmatprep.subr.mxu0 0.0
      %3189 = vmatpush1.msra.mxu0 0.0
      %3190 = vmatprep.subr.mxu0 0.0
      %3191 = vmatpush1.msra.mxu0 0.0
      %3192 = vmatprep.subr.mxu0 0.0
      %3193 = vmatpush1.msra.mxu0 0.0
      %3194 = vmatprep.subr.mxu0 0.0
      %3195 = vmatpush1.msra.mxu0 0.0
      %3196 = vmatprep.subr.mxu0 0.0
      %3197 = vmatpush1.msra.mxu0 0.0
      %3198 = vmatprep.subr.mxu0 0.0
      %3199 = vmatpush1.msra.mxu0 0.0
      %3200 = vmatprep.subr.mxu0 0.0
      %3201 = vmatpush1.msra.mxu0 0.0
      %3202 = vmatprep.subr.mxu0 0.0
      %3203 = vmatpush1.msra.mxu0 0.0
      %3204 = vmatprep.subr.mxu0 0.0
      %3205 = vmatpush1.msra.mxu0 0.0
      %3206 = vmatprep.subr.mxu0 0.0
      %3207 = vmatpush1.msra.mxu0 0.0
      %3208 = vmatprep.subr.mxu0 0.0
      %3209 = vmatpush1.msra.mxu0 0.0
      %3210 = vmatprep.subr.mxu0 0.0
      %3211 = vmatpush1.msra.mxu0 0.0
      %3212 = vmatprep.subr.mxu0 0.0
      %3213 = vmatpush1.msra.mxu0 0.0
      %3214 = vmatprep.subr.mxu0 0.0
      %3215 = vmatpush1.msra.mxu0 0.0
      %3216 = vmatprep.subr.mxu0 0.0
      %3217 = vmatpush1.msra.mxu0 0.0
      %3218 = vmatprep.subr.mxu0 0.0
      %3219 = vmatpush1.msra.mxu0 0.0
      %3220 = vmatprep.subr.mxu0 0.0
      %3221 = vmatpush1.msra.mxu0 0.0
      %3222 = vmatprep.subr.mxu0 0.0
      %3223 = vmatpush1.msra.mxu0 0.0
      %3224 = vmatprep.subr.mxu0 0.0
      %3225 = vmatpush1.msra.mxu0 0.0
      %3226 = vmatprep.subr.mxu0 0.0
      %3227 = vmatpush1.msra.mxu0 0.0
      %3228 = vmatprep.subr.mxu0 0.0
      %3229 = vmatpush1.msra.mxu0 0.0
      %3230 = vmatprep.subr.mxu0 0.0
      %3231 = vmatpush1.msra.mxu0 0.0
      %3232 = vmatprep.subr.mxu0 0.0
      %3233 = vmatpush1.msra.mxu0 0.0
      %3234 = vmatprep.subr.mxu0 0.0
      %3235 = vmatpush1.msra.mxu0 0.0
      %3236 = vmatprep.mubr.f32.mxu0 0.0
      %v3237 = vand.u32 %v2742, 4294901760
      %3238 = vmatmul.mubr.f32.gmra.mrb[0].mxu0 %v3237
      %v3239 = vpop.f32.mrb[0].mxu0
      %v3240 = vadd.f32 %v3161, %v3239
      %v3241 = vpop.f32.mrb[0].mxu0
      %3242 = vmatprep.mubr.f32.mxu0 0.0
      %v3243 = vand.u32 %v2745, 4294901760
      %3244 = vmatmul.mubr.f32.gmra.mrb[0].mxu0 %v3243
      %v3245 = vpop.f32.mrb[0].mxu0
      %v3246 = vadd.f32 %v3167, %v3245
      %v3247 = vpop.f32.mrb[0].mxu0
      %3248 = vdwg.mxu0
      %3249 = vrot.lane.b32.xlu0 %v940, 112
      %v3250 = vpop.permute.xlu0 %3249
      %3251 = vrot.lane.b32.xlu0 %v941, 112
      %v3252 = vpop.permute.xlu0 %3251
      %v3255 = vmul.f32 %v3240, %v3250
      %v3256 = vmul.f32 %v3246, %v3252
      %s3257 = scalar_lea.vmem %s9, 16
      %v3258 = vld [vmem:[%s3257] sm:$0xff]
      %v3259 = vld [vmem:[%s3257 + $0x8] sm:$0xff]
      %v3261 = vsel %vm423, %v3255, 0
      %v3264 = vsel %vm423, %v3256, 0
      %3266 = vmatprep.subr.mxu0 0.0
      %v3267 = vand.u32 %v3258, 4294901760
      %3268 = vmatpush1.msra.mxu0 %v3267
      %3269 = vmatprep.subr.mxu0 0.0
      %v3270 = vand.u32 %v3259, 4294901760
      %3271 = vmatpush1.msra.mxu0 %v3270
      %3272 = vmatprep.subr.mxu0 0.0
      %3273 = vmatpush1.msra.mxu0 0.0
      %3274 = vmatprep.subr.mxu0 0.0
      %3275 = vmatpush1.msra.mxu0 0.0
      %3276 = vmatprep.subr.mxu0 0.0
      %3277 = vmatpush1.msra.mxu0 0.0
      %3278 = vmatprep.subr.mxu0 0.0
      %3279 = vmatpush1.msra.mxu0 0.0
      %3280 = vmatprep.subr.mxu0 0.0
      %3281 = vmatpush1.msra.mxu0 0.0
      %3282 = vmatprep.subr.mxu0 0.0
      %3283 = vmatpush1.msra.mxu0 0.0
      %3284 = vmatprep.subr.mxu0 0.0
      %3285 = vmatpush1.msra.mxu0 0.0
      %3286 = vmatprep.subr.mxu0 0.0
      %3287 = vmatpush1.msra.mxu0 0.0
      %3288 = vmatprep.subr.mxu0 0.0
      %3289 = vmatpush1.msra.mxu0 0.0
      %3290 = vmatprep.subr.mxu0 0.0
      %3291 = vmatpush1.msra.mxu0 0.0
      %3292 = vmatprep.subr.mxu0 0.0
      %3293 = vmatpush1.msra.mxu0 0.0
      %3294 = vmatprep.subr.mxu0 0.0
      %3295 = vmatpush1.msra.mxu0 0.0
      %3296 = vmatprep.subr.mxu0 0.0
      %3297 = vmatpush1.msra.mxu0 0.0
      %3298 = vmatprep.subr.mxu0 0.0
      %3299 = vmatpush1.msra.mxu0 0.0
      %3300 = vmatprep.subr.mxu0 0.0
      %3301 = vmatpush1.msra.mxu0 0.0
      %3302 = vmatprep.subr.mxu0 0.0
      %3303 = vmatpush1.msra.mxu0 0.0
      %3304 = vmatprep.subr.mxu0 0.0
      %3305 = vmatpush1.msra.mxu0 0.0
      %3306 = vmatprep.subr.mxu0 0.0
      %3307 = vmatpush1.msra.mxu0 0.0
      %3308 = vmatprep.subr.mxu0 0.0
      %3309 = vmatpush1.msra.mxu0 0.0
      %3310 = vmatprep.subr.mxu0 0.0
      %3311 = vmatpush1.msra.mxu0 0.0
      %3312 = vmatprep.subr.mxu0 0.0
      %3313 = vmatpush1.msra.mxu0 0.0
      %3314 = vmatprep.subr.mxu0 0.0
      %3315 = vmatpush1.msra.mxu0 0.0
      %3316 = vmatprep.subr.mxu0 0.0
      %3317 = vmatpush1.msra.mxu0 0.0
      %3318 = vmatprep.subr.mxu0 0.0
      %3319 = vmatpush1.msra.mxu0 0.0
      %3320 = vmatprep.subr.mxu0 0.0
      %3321 = vmatpush1.msra.mxu0 0.0
      %3322 = vmatprep.subr.mxu0 0.0
      %3323 = vmatpush1.msra.mxu0 0.0
      %3324 = vmatprep.subr.mxu0 0.0
      %3325 = vmatpush1.msra.mxu0 0.0
      %3326 = vmatprep.subr.mxu0 0.0
      %3327 = vmatpush1.msra.mxu0 0.0
      %3328 = vmatprep.subr.mxu0 0.0
      %3329 = vmatpush1.msra.mxu0 0.0
      %3330 = vmatprep.subr.mxu0 0.0
      %3331 = vmatpush1.msra.mxu0 0.0
      %3332 = vmatprep.mubr.f32.mxu0 0.0
      %v3333 = vand.u32 %v3261, 4294901760
      %v3334 = vsub.f32 %v3261, %v3333
      %v3335 = vand.u32 %v3334, 4294901760
      %v3336 = vsub.f32 %v3334, %v3335
      %v3337 = vand.u32 %v3336, 4294901760
      %3338 = vmatmul.mubr.f32.gmra.mrb[0].mxu0 %v3337
      %v3339 = vpop.f32.mrb[0].mxu0
      %v3340 = vadd.f32 0.0, %v3339
      %v3341 = vpop.f32.mrb[0].mxu0
      %3342 = vmatprep.mubr.f32.mxu0 0.0
      %v3343 = vand.u32 %v3264, 4294901760
      %v3344 = vsub.f32 %v3264, %v3343
      %v3345 = vand.u32 %v3344, 4294901760
      %v3346 = vsub.f32 %v3344, %v3345
      %v3347 = vand.u32 %v3346, 4294901760
      %3348 = vmatmul.mubr.f32.gmra.mrb[0].mxu0 %v3347
      %v3349 = vpop.f32.mrb[0].mxu0
      %v3350 = vadd.f32 0.0, %v3349
      %v3351 = vpop.f32.mrb[0].mxu0
      %3352 = vdwg.mxu0
      %3353 = vmatprep.subr.mxu0 0.0
      %v3354 = vand.u32 %v3258, 4294901760
      %v3355 = vsub.f32 %v3258, %v3354
      %v3356 = vand.u32 %v3355, 4294901760
      %v3357 = vsub.f32 %v3355, %v3356
      %v3358 = vand.u32 %v3357, 4294901760
      %3359 = vmatpush1.msra.mxu0 %v3358
      %3360 = vmatprep.subr.mxu0 0.0
      %v3361 = vand.u32 %v3259, 4294901760
      %v3362 = vsub.f32 %v3259, %v3361
      %v3363 = vand.u32 %v3362, 4294901760
      %v3364 = vsub.f32 %v3362, %v3363
      %v3365 = vand.u32 %v3364, 4294901760
      %3366 = vmatpush1.msra.mxu0 %v3365
      %3367 = vmatprep.subr.mxu0 0.0
      %3368 = vmatpush1.msra.mxu0 0.0
      %3369 = vmatprep.subr.mxu0 0.0
      %3370 = vmatpush1.msra.mxu0 0.0
      %3371 = vmatprep.subr.mxu0 0.0
      %3372 = vmatpush1.msra.mxu0 0.0
      %3373 = vmatprep.subr.mxu0 0.0
      %3374 = vmatpush1.msra.mxu0 0.0
      %3375 = vmatprep.subr.mxu0 0.0
      %3376 = vmatpush1.msra.mxu0 0.0
      %3377 = vmatprep.subr.mxu0 0.0
      %3378 = vmatpush1.msra.mxu0 0.0
      %3379 = vmatprep.subr.mxu0 0.0
      %3380 = vmatpush1.msra.mxu0 0.0
      %3381 = vmatprep.subr.mxu0 0.0
      %3382 = vmatpush1.msra.mxu0 0.0
      %3383 = vmatprep.subr.mxu0 0.0
      %3384 = vmatpush1.msra.mxu0 0.0
      %3385 = vmatprep.subr.mxu0 0.0
      %3386 = vmatpush1.msra.mxu0 0.0
      %3387 = vmatprep.subr.mxu0 0.0
      %3388 = vmatpush1.msra.mxu0 0.0
      %3389 = vmatprep.subr.mxu0 0.0
      %3390 = vmatpush1.msra.mxu0 0.0
      %3391 = vmatprep.subr.mxu0 0.0
      %3392 = vmatpush1.msra.mxu0 0.0
      %3393 = vmatprep.subr.mxu0 0.0
      %3394 = vmatpush1.msra.mxu0 0.0
      %3395 = vmatprep.subr.mxu0 0.0
      %3396 = vmatpush1.msra.mxu0 0.0
      %3397 = vmatprep.subr.mxu0 0.0
      %3398 = vmatpush1.msra.mxu0 0.0
      %3399 = vmatprep.subr.mxu0 0.0
      %3400 = vmatpush1.msra.mxu0 0.0
      %3401 = vmatprep.subr.mxu0 0.0
      %3402 = vmatpush1.msra.mxu0 0.0
      %3403 = vmatprep.subr.mxu0 0.0
      %3404 = vmatpush1.msra.mxu0 0.0
      %3405 = vmatprep.subr.mxu0 0.0
      %3406 = vmatpush1.msra.mxu0 0.0
      %3407 = vmatprep.subr.mxu0 0.0
      %3408 = vmatpush1.msra.mxu0 0.0
      %3409 = vmatprep.subr.mxu0 0.0
      %3410 = vmatpush1.msra.mxu0 0.0
      %3411 = vmatprep.subr.mxu0 0.0
      %3412 = vmatpush1.msra.mxu0 0.0
      %3413 = vmatprep.subr.mxu0 0.0
      %3414 = vmatpush1.msra.mxu0 0.0
      %3415 = vmatprep.subr.mxu0 0.0
      %3416 = vmatpush1.msra.mxu0 0.0
      %3417 = vmatprep.subr.mxu0 0.0
      %3418 = vmatpush1.msra.mxu0 0.0
      %3419 = vmatprep.subr.mxu0 0.0
      %3420 = vmatpush1.msra.mxu0 0.0
      %3421 = vmatprep.subr.mxu0 0.0
      %3422 = vmatpush1.msra.mxu0 0.0
      %3423 = vmatprep.subr.mxu0 0.0
      %3424 = vmatpush1.msra.mxu0 0.0
      %3425 = vmatprep.subr.mxu0 0.0
      %3426 = vmatpush1.msra.mxu0 0.0
      %3427 = vmatprep.mubr.f32.mxu0 0.0
      %v3428 = vand.u32 %v3261, 4294901760
      %3429 = vmatmul.mubr.f32.gmra.mrb[0].mxu0 %v3428
      %v3430 = vpop.f32.mrb[0].mxu0
      %v3431 = vadd.f32 %v3340, %v3430
      %v3432 = vpop.f32.mrb[0].mxu0
      %3433 = vmatprep.mubr.f32.mxu0 0.0
      %v3434 = vand.u32 %v3264, 4294901760
      %3435 = vmatmul.mubr.f32.gmra.mrb[0].mxu0 %v3434
      %v3436 = vpop.f32.mrb[0].mxu0
      %v3437 = vadd.f32 %v3350, %v3436
      %v3438 = vpop.f32.mrb[0].mxu0
      %3439 = vdwg.mxu0
      %3440 = vmatprep.subr.mxu0 0.0
      %v3441 = vand.u32 %v3258, 4294901760
      %v3442 = vsub.f32 %v3258, %v3441
      %3443 = vmatpush1.msra.mxu0 %v3442
      %3444 = vmatprep.subr.mxu0 0.0
      %v3445 = vand.u32 %v3259, 4294901760
      %v3446 = vsub.f32 %v3259, %v3445
      %3447 = vmatpush1.msra.mxu0 %v3446
      %3448 = vmatprep.subr.mxu0 0.0
      %3449 = vmatpush1.msra.mxu0 0.0
      %3450 = vmatprep.subr.mxu0 0.0
      %3451 = vmatpush1.msra.mxu0 0.0
      %3452 = vmatprep.subr.mxu0 0.0
      %3453 = vmatpush1.msra.mxu0 0.0
      %3454 = vmatprep.subr.mxu0 0.0
      %3455 = vmatpush1.msra.mxu0 0.0
      %3456 = vmatprep.subr.mxu0 0.0
      %3457 = vmatpush1.msra.mxu0 0.0
      %3458 = vmatprep.subr.mxu0 0.0
      %3459 = vmatpush1.msra.mxu0 0.0
      %3460 = vmatprep.subr.mxu0 0.0
      %3461 = vmatpush1.msra.mxu0 0.0
      %3462 = vmatprep.subr.mxu0 0.0
      %3463 = vmatpush1.msra.mxu0 0.0
      %3464 = vmatprep.subr.mxu0 0.0
      %3465 = vmatpush1.msra.mxu0 0.0
      %3466 = vmatprep.subr.mxu0 0.0
      %3467 = vmatpush1.msra.mxu0 0.0
      %3468 = vmatprep.subr.mxu0 0.0
      %3469 = vmatpush1.msra.mxu0 0.0
      %3470 = vmatprep.subr.mxu0 0.0
      %3471 = vmatpush1.msra.mxu0 0.0
      %3472 = vmatprep.subr.mxu0 0.0
      %3473 = vmatpush1.msra.mxu0 0.0
      %3474 = vmatprep.subr.mxu0 0.0
      %3475 = vmatpush1.msra.mxu0 0.0
      %3476 = vmatprep.subr.mxu0 0.0
      %3477 = vmatpush1.msra.mxu0 0.0
      %3478 = vmatprep.subr.mxu0 0.0
      %3479 = vmatpush1.msra.mxu0 0.0
      %3480 = vmatprep.subr.mxu0 0.0
      %3481 = vmatpush1.msra.mxu0 0.0
      %3482 = vmatprep.subr.mxu0 0.0
      %3483 = vmatpush1.msra.mxu0 0.0
      %3484 = vmatprep.subr.mxu0 0.0
      %3485 = vmatpush1.msra.mxu0 0.0
      %3486 = vmatprep.subr.mxu0 0.0
      %3487 = vmatpush1.msra.mxu0 0.0
      %3488 = vmatprep.subr.mxu0 0.0
      %3489 = vmatpush1.msra.mxu0 0.0
      %3490 = vmatprep.subr.mxu0 0.0
      %3491 = vmatpush1.msra.mxu0 0.0
      %3492 = vmatprep.subr.mxu0 0.0
      %3493 = vmatpush1.msra.mxu0 0.0
      %3494 = vmatprep.subr.mxu0 0.0
      %3495 = vmatpush1.msra.mxu0 0.0
      %3496 = vmatprep.subr.mxu0 0.0
      %3497 = vmatpush1.msra.mxu0 0.0
      %3498 = vmatprep.subr.mxu0 0.0
      %3499 = vmatpush1.msra.mxu0 0.0
      %3500 = vmatprep.subr.mxu0 0.0
      %3501 = vmatpush1.msra.mxu0 0.0
      %3502 = vmatprep.subr.mxu0 0.0
      %3503 = vmatpush1.msra.mxu0 0.0
      %3504 = vmatprep.subr.mxu0 0.0
      %3505 = vmatpush1.msra.mxu0 0.0
      %3506 = vmatprep.subr.mxu0 0.0
      %3507 = vmatpush1.msra.mxu0 0.0
      %3508 = vmatprep.mubr.f32.mxu0 0.0
      %v3509 = vand.u32 %v3261, 4294901760
      %v3510 = vsub.f32 %v3261, %v3509
      %3511 = vmatmul.mubr.f32.gmra.mrb[0].mxu0 %v3510
      %v3512 = vpop.f32.mrb[0].mxu0
      %v3513 = vadd.f32 %v3431, %v3512
      %v3514 = vpop.f32.mrb[0].mxu0
      %3515 = vmatprep.mubr.f32.mxu0 0.0
      %v3516 = vand.u32 %v3264, 4294901760
      %v3517 = vsub.f32 %v3264, %v3516
      %3518 = vmatmul.mubr.f32.gmra.mrb[0].mxu0 %v3517
      %v3519 = vpop.f32.mrb[0].mxu0
      %v3520 = vadd.f32 %v3437, %v3519
      %v3521 = vpop.f32.mrb[0].mxu0
      %3522 = vdwg.mxu0
      %3523 = vmatprep.subr.mxu0 0.0
      %v3524 = vand.u32 %v3258, 4294901760
      %3525 = vmatpush1.msra.mxu0 %v3524
      %3526 = vmatprep.subr.mxu0 0.0
      %v3527 = vand.u32 %v3259, 4294901760
      %3528 = vmatpush1.msra.mxu0 %v3527
      %3529 = vmatprep.subr.mxu0 0.0
      %3530 = vmatpush1.msra.mxu0 0.0
      %3531 = vmatprep.subr.mxu0 0.0
      %3532 = vmatpush1.msra.mxu0 0.0
      %3533 = vmatprep.subr.mxu0 0.0
      %3534 = vmatpush1.msra.mxu0 0.0
      %3535 = vmatprep.subr.mxu0 0.0
      %3536 = vmatpush1.msra.mxu0 0.0
      %3537 = vmatprep.subr.mxu0 0.0
      %3538 = vmatpush1.msra.mxu0 0.0
      %3539 = vmatprep.subr.mxu0 0.0
      %3540 = vmatpush1.msra.mxu0 0.0
      %3541 = vmatprep.subr.mxu0 0.0
      %3542 = vmatpush1.msra.mxu0 0.0
      %3543 = vmatprep.subr.mxu0 0.0
      %3544 = vmatpush1.msra.mxu0 0.0
      %3545 = vmatprep.subr.mxu0 0.0
      %3546 = vmatpush1.msra.mxu0 0.0
      %3547 = vmatprep.subr.mxu0 0.0
      %3548 = vmatpush1.msra.mxu0 0.0
      %3549 = vmatprep.subr.mxu0 0.0
      %3550 = vmatpush1.msra.mxu0 0.0
      %3551 = vmatprep.subr.mxu0 0.0
      %3552 = vmatpush1.msra.mxu0 0.0
      %3553 = vmatprep.subr.mxu0 0.0
      %3554 = vmatpush1.msra.mxu0 0.0
      %3555 = vmatprep.subr.mxu0 0.0
      %3556 = vmatpush1.msra.mxu0 0.0
      %3557 = vmatprep.subr.mxu0 0.0
      %3558 = vmatpush1.msra.mxu0 0.0
      %3559 = vmatprep.subr.mxu0 0.0
      %3560 = vmatpush1.msra.mxu0 0.0
      %3561 = vmatprep.subr.mxu0 0.0
      %3562 = vmatpush1.msra.mxu0 0.0
      %3563 = vmatprep.subr.mxu0 0.0
      %3564 = vmatpush1.msra.mxu0 0.0
      %3565 = vmatprep.subr.mxu0 0.0
      %3566 = vmatpush1.msra.mxu0 0.0
      %3567 = vmatprep.subr.mxu0 0.0
      %3568 = vmatpush1.msra.mxu0 0.0
      %3569 = vmatprep.subr.mxu0 0.0
      %3570 = vmatpush1.msra.mxu0 0.0
      %3571 = vmatprep.subr.mxu0 0.0
      %3572 = vmatpush1.msra.mxu0 0.0
      %3573 = vmatprep.subr.mxu0 0.0
      %3574 = vmatpush1.msra.mxu0 0.0
      %3575 = vmatprep.subr.mxu0 0.0
      %3576 = vmatpush1.msra.mxu0 0.0
      %3577 = vmatprep.subr.mxu0 0.0
      %3578 = vmatpush1.msra.mxu0 0.0
      %3579 = vmatprep.subr.mxu0 0.0
      %3580 = vmatpush1.msra.mxu0 0.0
      %3581 = vmatprep.subr.mxu0 0.0
      %3582 = vmatpush1.msra.mxu0 0.0
      %3583 = vmatprep.subr.mxu0 0.0
      %3584 = vmatpush1.msra.mxu0 0.0
      %3585 = vmatprep.subr.mxu0 0.0
      %3586 = vmatpush1.msra.mxu0 0.0
      %3587 = vmatprep.subr.mxu0 0.0
      %3588 = vmatpush1.msra.mxu0 0.0
      %3589 = vmatprep.mubr.f32.mxu0 0.0
      %v3590 = vand.u32 %v3261, 4294901760
      %v3591 = vsub.f32 %v3261, %v3590
      %v3592 = vand.u32 %v3591, 4294901760
      %3593 = vmatmul.mubr.f32.gmra.mrb[0].mxu0 %v3592
      %v3594 = vpop.f32.mrb[0].mxu0
      %v3595 = vadd.f32 %v3513, %v3594
      %v3596 = vpop.f32.mrb[0].mxu0
      %3597 = vmatprep.mubr.f32.mxu0 0.0
      %v3598 = vand.u32 %v3264, 4294901760
      %v3599 = vsub.f32 %v3264, %v3598
      %v3600 = vand.u32 %v3599, 4294901760
      %3601 = vmatmul.mubr.f32.gmra.mrb[0].mxu0 %v3600
      %v3602 = vpop.f32.mrb[0].mxu0
      %v3603 = vadd.f32 %v3520, %v3602
      %v3604 = vpop.f32.mrb[0].mxu0
      %3605 = vdwg.mxu0
      %3606 = vmatprep.subr.mxu0 0.0
      %v3607 = vand.u32 %v3258, 4294901760
      %v3608 = vsub.f32 %v3258, %v3607
      %v3609 = vand.u32 %v3608, 4294901760
      %3610 = vmatpush1.msra.mxu0 %v3609
      %3611 = vmatprep.subr.mxu0 0.0
      %v3612 = vand.u32 %v3259, 4294901760
      %v3613 = vsub.f32 %v3259, %v3612
      %v3614 = vand.u32 %v3613, 4294901760
      %3615 = vmatpush1.msra.mxu0 %v3614
      %3616 = vmatprep.subr.mxu0 0.0
      %3617 = vmatpush1.msra.mxu0 0.0
      %3618 = vmatprep.subr.mxu0 0.0
      %3619 = vmatpush1.msra.mxu0 0.0
      %3620 = vmatprep.subr.mxu0 0.0
      %3621 = vmatpush1.msra.mxu0 0.0
      %3622 = vmatprep.subr.mxu0 0.0
      %3623 = vmatpush1.msra.mxu0 0.0
      %3624 = vmatprep.subr.mxu0 0.0
      %3625 = vmatpush1.msra.mxu0 0.0
      %3626 = vmatprep.subr.mxu0 0.0
      %3627 = vmatpush1.msra.mxu0 0.0
      %3628 = vmatprep.subr.mxu0 0.0
      %3629 = vmatpush1.msra.mxu0 0.0
      %3630 = vmatprep.subr.mxu0 0.0
      %3631 = vmatpush1.msra.mxu0 0.0
      %3632 = vmatprep.subr.mxu0 0.0
      %3633 = vmatpush1.msra.mxu0 0.0
      %3634 = vmatprep.subr.mxu0 0.0
      %3635 = vmatpush1.msra.mxu0 0.0
      %3636 = vmatprep.subr.mxu0 0.0
      %3637 = vmatpush1.msra.mxu0 0.0
      %3638 = vmatprep.subr.mxu0 0.0
      %3639 = vmatpush1.msra.mxu0 0.0
      %3640 = vmatprep.subr.mxu0 0.0
      %3641 = vmatpush1.msra.mxu0 0.0
      %3642 = vmatprep.subr.mxu0 0.0
      %3643 = vmatpush1.msra.mxu0 0.0
      %3644 = vmatprep.subr.mxu0 0.0
      %3645 = vmatpush1.msra.mxu0 0.0
      %3646 = vmatprep.subr.mxu0 0.0
      %3647 = vmatpush1.msra.mxu0 0.0
      %3648 = vmatprep.subr.mxu0 0.0
      %3649 = vmatpush1.msra.mxu0 0.0
      %3650 = vmatprep.subr.mxu0 0.0
      %3651 = vmatpush1.msra.mxu0 0.0
      %3652 = vmatprep.subr.mxu0 0.0
      %3653 = vmatpush1.msra.mxu0 0.0
      %3654 = vmatprep.subr.mxu0 0.0
      %3655 = vmatpush1.msra.mxu0 0.0
      %3656 = vmatprep.subr.mxu0 0.0
      %3657 = vmatpush1.msra.mxu0 0.0
      %3658 = vmatprep.subr.mxu0 0.0
      %3659 = vmatpush1.msra.mxu0 0.0
      %3660 = vmatprep.subr.mxu0 0.0
      %3661 = vmatpush1.msra.mxu0 0.0
      %3662 = vmatprep.subr.mxu0 0.0
      %3663 = vmatpush1.msra.mxu0 0.0
      %3664 = vmatprep.subr.mxu0 0.0
      %3665 = vmatpush1.msra.mxu0 0.0
      %3666 = vmatprep.subr.mxu0 0.0
      %3667 = vmatpush1.msra.mxu0 0.0
      %3668 = vmatprep.subr.mxu0 0.0
      %3669 = vmatpush1.msra.mxu0 0.0
      %3670 = vmatprep.subr.mxu0 0.0
      %3671 = vmatpush1.msra.mxu0 0.0
      %3672 = vmatprep.subr.mxu0 0.0
      %3673 = vmatpush1.msra.mxu0 0.0
      %3674 = vmatprep.subr.mxu0 0.0
      %3675 = vmatpush1.msra.mxu0 0.0
      %3676 = vmatprep.mubr.f32.mxu0 0.0
      %v3677 = vand.u32 %v3261, 4294901760
      %3678 = vmatmul.mubr.f32.gmra.mrb[0].mxu0 %v3677
      %v3679 = vpop.f32.mrb[0].mxu0
      %v3680 = vadd.f32 %v3595, %v3679
      %v3681 = vpop.f32.mrb[0].mxu0
      %3682 = vmatprep.mubr.f32.mxu0 0.0
      %v3683 = vand.u32 %v3264, 4294901760
      %3684 = vmatmul.mubr.f32.gmra.mrb[0].mxu0 %v3683
      %v3685 = vpop.f32.mrb[0].mxu0
      %v3686 = vadd.f32 %v3603, %v3685
      %v3687 = vpop.f32.mrb[0].mxu0
      %3688 = vdwg.mxu0
      %3689 = vmatprep.subr.mxu0 0.0
      %v3690 = vand.u32 %v3258, 4294901760
      %3691 = vmatpush1.msra.mxu0 %v3690
      %3692 = vmatprep.subr.mxu0 0.0
      %v3693 = vand.u32 %v3259, 4294901760
      %3694 = vmatpush1.msra.mxu0 %v3693
      %3695 = vmatprep.subr.mxu0 0.0
      %3696 = vmatpush1.msra.mxu0 0.0
      %3697 = vmatprep.subr.mxu0 0.0
      %3698 = vmatpush1.msra.mxu0 0.0
      %3699 = vmatprep.subr.mxu0 0.0
      %3700 = vmatpush1.msra.mxu0 0.0
      %3701 = vmatprep.subr.mxu0 0.0
      %3702 = vmatpush1.msra.mxu0 0.0
      %3703 = vmatprep.subr.mxu0 0.0
      %3704 = vmatpush1.msra.mxu0 0.0
      %3705 = vmatprep.subr.mxu0 0.0
      %3706 = vmatpush1.msra.mxu0 0.0
      %3707 = vmatprep.subr.mxu0 0.0
      %3708 = vmatpush1.msra.mxu0 0.0
      %3709 = vmatprep.subr.mxu0 0.0
      %3710 = vmatpush1.msra.mxu0 0.0
      %3711 = vmatprep.subr.mxu0 0.0
      %3712 = vmatpush1.msra.mxu0 0.0
      %3713 = vmatprep.subr.mxu0 0.0
      %3714 = vmatpush1.msra.mxu0 0.0
      %3715 = vmatprep.subr.mxu0 0.0
      %3716 = vmatpush1.msra.mxu0 0.0
      %3717 = vmatprep.subr.mxu0 0.0
      %3718 = vmatpush1.msra.mxu0 0.0
      %3719 = vmatprep.subr.mxu0 0.0
      %3720 = vmatpush1.msra.mxu0 0.0
      %3721 = vmatprep.subr.mxu0 0.0
      %3722 = vmatpush1.msra.mxu0 0.0
      %3723 = vmatprep.subr.mxu0 0.0
      %3724 = vmatpush1.msra.mxu0 0.0
      %3725 = vmatprep.subr.mxu0 0.0
      %3726 = vmatpush1.msra.mxu0 0.0
      %3727 = vmatprep.subr.mxu0 0.0
      %3728 = vmatpush1.msra.mxu0 0.0
      %3729 = vmatprep.subr.mxu0 0.0
      %3730 = vmatpush1.msra.mxu0 0.0
      %3731 = vmatprep.subr.mxu0 0.0
      %3732 = vmatpush1.msra.mxu0 0.0
      %3733 = vmatprep.subr.mxu0 0.0
      %3734 = vmatpush1.msra.mxu0 0.0
      %3735 = vmatprep.subr.mxu0 0.0
      %3736 = vmatpush1.msra.mxu0 0.0
      %3737 = vmatprep.subr.mxu0 0.0
      %3738 = vmatpush1.msra.mxu0 0.0
      %3739 = vmatprep.subr.mxu0 0.0
      %3740 = vmatpush1.msra.mxu0 0.0
      %3741 = vmatprep.subr.mxu0 0.0
      %3742 = vmatpush1.msra.mxu0 0.0
      %3743 = vmatprep.subr.mxu0 0.0
      %3744 = vmatpush1.msra.mxu0 0.0
      %3745 = vmatprep.subr.mxu0 0.0
      %3746 = vmatpush1.msra.mxu0 0.0
      %3747 = vmatprep.subr.mxu0 0.0
      %3748 = vmatpush1.msra.mxu0 0.0
      %3749 = vmatprep.subr.mxu0 0.0
      %3750 = vmatpush1.msra.mxu0 0.0
      %3751 = vmatprep.subr.mxu0 0.0
      %3752 = vmatpush1.msra.mxu0 0.0
      %3753 = vmatprep.subr.mxu0 0.0
      %3754 = vmatpush1.msra.mxu0 0.0
      %3755 = vmatprep.mubr.f32.mxu0 0.0
      %v3756 = vand.u32 %v3261, 4294901760
      %3757 = vmatmul.mubr.f32.gmra.mrb[0].mxu0 %v3756
      %v3758 = vpop.f32.mrb[0].mxu0
      %v3759 = vadd.f32 %v3680, %v3758
      %v3760 = vpop.f32.mrb[0].mxu0
      %3761 = vmatprep.mubr.f32.mxu0 0.0
      %v3762 = vand.u32 %v3264, 4294901760
      %3763 = vmatmul.mubr.f32.gmra.mrb[0].mxu0 %v3762
      %v3764 = vpop.f32.mrb[0].mxu0
      %v3765 = vadd.f32 %v3686, %v3764
      %v3766 = vpop.f32.mrb[0].mxu0
      %3767 = vdwg.mxu0
      %v3768 = vadd.f32 %v2727, %v3759
      %v3769 = vadd.f32 %v2728, %v3765
      %s3770 = scalar_lea.vmem %s9, 48
      %v3771 = vld [vmem:[%s3770] sm:$0xff]
      %v3772 = vld [vmem:[%s3770 + $0x8] sm:$0xff]
      %v3774 = vsel %vm423, %v3240, 0
      %v3777 = vsel %vm423, %v3246, 0
      %3779 = vmatprep.subr.mxu0 0.0
      %v3780 = vand.u32 %v3771, 4294901760
      %3781 = vmatpush1.msra.mxu0 %v3780
      %3782 = vmatprep.subr.mxu0 0.0
      %v3783 = vand.u32 %v3772, 4294901760
      %3784 = vmatpush1.msra.mxu0 %v3783
      %3785 = vmatprep.subr.mxu0 0.0
      %3786 = vmatpush1.msra.mxu0 0.0
      %3787 = vmatprep.subr.mxu0 0.0
      %3788 = vmatpush1.msra.mxu0 0.0
      %3789 = vmatprep.subr.mxu0 0.0
      %3790 = vmatpush1.msra.mxu0 0.0
      %3791 = vmatprep.subr.mxu0 0.0
      %3792 = vmatpush1.msra.mxu0 0.0
      %3793 = vmatprep.subr.mxu0 0.0
      %3794 = vmatpush1.msra.mxu0 0.0
      %3795 = vmatprep.subr.mxu0 0.0
      %3796 = vmatpush1.msra.mxu0 0.0
      %3797 = vmatprep.subr.mxu0 0.0
      %3798 = vmatpush1.msra.mxu0 0.0
      %3799 = vmatprep.subr.mxu0 0.0
      %3800 = vmatpush1.msra.mxu0 0.0
      %3801 = vmatprep.subr.mxu0 0.0
      %3802 = vmatpush1.msra.mxu0 0.0
      %3803 = vmatprep.subr.mxu0 0.0
      %3804 = vmatpush1.msra.mxu0 0.0
      %3805 = vmatprep.subr.mxu0 0.0
      %3806 = vmatpush1.msra.mxu0 0.0
      %3807 = vmatprep.subr.mxu0 0.0
      %3808 = vmatpush1.msra.mxu0 0.0
      %3809 = vmatprep.subr.mxu0 0.0
      %3810 = vmatpush1.msra.mxu0 0.0
      %3811 = vmatprep.subr.mxu0 0.0
      %3812 = vmatpush1.msra.mxu0 0.0
      %3813 = vmatprep.subr.mxu0 0.0
      %3814 = vmatpush1.msra.mxu0 0.0
      %3815 = vmatprep.subr.mxu0 0.0
      %3816 = vmatpush1.msra.mxu0 0.0
      %3817 = vmatprep.subr.mxu0 0.0
      %3818 = vmatpush1.msra.mxu0 0.0
      %3819 = vmatprep.subr.mxu0 0.0
      %3820 = vmatpush1.msra.mxu0 0.0
      %3821 = vmatprep.subr.mxu0 0.0
      %3822 = vmatpush1.msra.mxu0 0.0
      %3823 = vmatprep.subr.mxu0 0.0
      %3824 = vmatpush1.msra.mxu0 0.0
      %3825 = vmatprep.subr.mxu0 0.0
      %3826 = vmatpush1.msra.mxu0 0.0
      %3827 = vmatprep.subr.mxu0 0.0
      %3828 = vmatpush1.msra.mxu0 0.0
      %3829 = vmatprep.subr.mxu0 0.0
      %3830 = vmatpush1.msra.mxu0 0.0
      %3831 = vmatprep.subr.mxu0 0.0
      %3832 = vmatpush1.msra.mxu0 0.0
      %3833 = vmatprep.subr.mxu0 0.0
      %3834 = vmatpush1.msra.mxu0 0.0
      %3835 = vmatprep.subr.mxu0 0.0
      %3836 = vmatpush1.msra.mxu0 0.0
      %3837 = vmatprep.subr.mxu0 0.0
      %3838 = vmatpush1.msra.mxu0 0.0
      %3839 = vmatprep.subr.mxu0 0.0
      %3840 = vmatpush1.msra.mxu0 0.0
      %3841 = vmatprep.subr.mxu0 0.0
      %3842 = vmatpush1.msra.mxu0 0.0
      %3843 = vmatprep.subr.mxu0 0.0
      %3844 = vmatpush1.msra.mxu0 0.0
      %3845 = vmatprep.mubr.f32.mxu0 0.0
      %v3846 = vand.u32 %v3774, 4294901760
      %v3847 = vsub.f32 %v3774, %v3846
      %v3848 = vand.u32 %v3847, 4294901760
      %v3849 = vsub.f32 %v3847, %v3848
      %v3850 = vand.u32 %v3849, 4294901760
      %3851 = vmatmul.mubr.f32.gmra.mrb[0].mxu0 %v3850
      %v3852 = vpop.f32.mrb[0].mxu0
      %v3853 = vadd.f32 0.0, %v3852
      %v3854 = vpop.f32.mrb[0].mxu0
      %3855 = vmatprep.mubr.f32.mxu0 0.0
      %v3856 = vand.u32 %v3777, 4294901760
      %v3857 = vsub.f32 %v3777, %v3856
      %v3858 = vand.u32 %v3857, 4294901760
      %v3859 = vsub.f32 %v3857, %v3858
      %v3860 = vand.u32 %v3859, 4294901760
      %3861 = vmatmul.mubr.f32.gmra.mrb[0].mxu0 %v3860
      %v3862 = vpop.f32.mrb[0].mxu0
      %v3863 = vadd.f32 0.0, %v3862
      %v3864 = vpop.f32.mrb[0].mxu0
      %3865 = vdwg.mxu0
      %3866 = vmatprep.subr.mxu0 0.0
      %v3867 = vand.u32 %v3771, 4294901760
      %v3868 = vsub.f32 %v3771, %v3867
      %v3869 = vand.u32 %v3868, 4294901760
      %v3870 = vsub.f32 %v3868, %v3869
      %v3871 = vand.u32 %v3870, 4294901760
      %3872 = vmatpush1.msra.mxu0 %v3871
      %3873 = vmatprep.subr.mxu0 0.0
      %v3874 = vand.u32 %v3772, 4294901760
      %v3875 = vsub.f32 %v3772, %v3874
      %v3876 = vand.u32 %v3875, 4294901760
      %v3877 = vsub.f32 %v3875, %v3876
      %v3878 = vand.u32 %v3877, 4294901760
      %3879 = vmatpush1.msra.mxu0 %v3878
      %3880 = vmatprep.subr.mxu0 0.0
      %3881 = vmatpush1.msra.mxu0 0.0
      %3882 = vmatprep.subr.mxu0 0.0
      %3883 = vmatpush1.msra.mxu0 0.0
      %3884 = vmatprep.subr.mxu0 0.0
      %3885 = vmatpush1.msra.mxu0 0.0
      %3886 = vmatprep.subr.mxu0 0.0
      %3887 = vmatpush1.msra.mxu0 0.0
      %3888 = vmatprep.subr.mxu0 0.0
      %3889 = vmatpush1.msra.mxu0 0.0
      %3890 = vmatprep.subr.mxu0 0.0
      %3891 = vmatpush1.msra.mxu0 0.0
      %3892 = vmatprep.subr.mxu0 0.0
      %3893 = vmatpush1.msra.mxu0 0.0
      %3894 = vmatprep.subr.mxu0 0.0
      %3895 = vmatpush1.msra.mxu0 0.0
      %3896 = vmatprep.subr.mxu0 0.0
      %3897 = vmatpush1.msra.mxu0 0.0
      %3898 = vmatprep.subr.mxu0 0.0
      %3899 = vmatpush1.msra.mxu0 0.0
      %3900 = vmatprep.subr.mxu0 0.0
      %3901 = vmatpush1.msra.mxu0 0.0
      %3902 = vmatprep.subr.mxu0 0.0
      %3903 = vmatpush1.msra.mxu0 0.0
      %3904 = vmatprep.subr.mxu0 0.0
      %3905 = vmatpush1.msra.mxu0 0.0
      %3906 = vmatprep.subr.mxu0 0.0
      %3907 = vmatpush1.msra.mxu0 0.0
      %3908 = vmatprep.subr.mxu0 0.0
      %3909 = vmatpush1.msra.mxu0 0.0
      %3910 = vmatprep.subr.mxu0 0.0
      %3911 = vmatpush1.msra.mxu0 0.0
      %3912 = vmatprep.subr.mxu0 0.0
      %3913 = vmatpush1.msra.mxu0 0.0
      %3914 = vmatprep.subr.mxu0 0.0
      %3915 = vmatpush1.msra.mxu0 0.0
      %3916 = vmatprep.subr.mxu0 0.0
      %3917 = vmatpush1.msra.mxu0 0.0
      %3918 = vmatprep.subr.mxu0 0.0
      %3919 = vmatpush1.msra.mxu0 0.0
      %3920 = vmatprep.subr.mxu0 0.0
      %3921 = vmatpush1.msra.mxu0 0.0
      %3922 = vmatprep.subr.mxu0 0.0
      %3923 = vmatpush1.msra.mxu0 0.0
      %3924 = vmatprep.subr.mxu0 0.0
      %3925 = vmatpush1.msra.mxu0 0.0
      %3926 = vmatprep.subr.mxu0 0.0
      %3927 = vmatpush1.msra.mxu0 0.0
      %3928 = vmatprep.subr.mxu0 0.0
      %3929 = vmatpush1.msra.mxu0 0.0
      %3930 = vmatprep.subr.mxu0 0.0
      %3931 = vmatpush1.msra.mxu0 0.0
      %3932 = vmatprep.subr.mxu0 0.0
      %3933 = vmatpush1.msra.mxu0 0.0
      %3934 = vmatprep.subr.mxu0 0.0
      %3935 = vmatpush1.msra.mxu0 0.0
      %3936 = vmatprep.subr.mxu0 0.0
      %3937 = vmatpush1.msra.mxu0 0.0
      %3938 = vmatprep.subr.mxu0 0.0
      %3939 = vmatpush1.msra.mxu0 0.0
      %3940 = vmatprep.mubr.f32.mxu0 0.0
      %v3941 = vand.u32 %v3774, 4294901760
      %3942 = vmatmul.mubr.f32.gmra.mrb[0].mxu0 %v3941
      %v3943 = vpop.f32.mrb[0].mxu0
      %v3944 = vadd.f32 %v3853, %v3943
      %v3945 = vpop.f32.mrb[0].mxu0
      %3946 = vmatprep.mubr.f32.mxu0 0.0
      %v3947 = vand.u32 %v3777, 4294901760
      %3948 = vmatmul.mubr.f32.gmra.mrb[0].mxu0 %v3947
      %v3949 = vpop.f32.mrb[0].mxu0
      %v3950 = vadd.f32 %v3863, %v3949
      %v3951 = vpop.f32.mrb[0].mxu0
      %3952 = vdwg.mxu0
      %3953 = vmatprep.subr.mxu0 0.0
      %v3954 = vand.u32 %v3771, 4294901760
      %v3955 = vsub.f32 %v3771, %v3954
      %3956 = vmatpush1.msra.mxu0 %v3955
      %3957 = vmatprep.subr.mxu0 0.0
      %v3958 = vand.u32 %v3772, 4294901760
      %v3959 = vsub.f32 %v3772, %v3958
      %3960 = vmatpush1.msra.mxu0 %v3959
      %3961 = vmatprep.subr.mxu0 0.0
      %3962 = vmatpush1.msra.mxu0 0.0
      %3963 = vmatprep.subr.mxu0 0.0
      %3964 = vmatpush1.msra.mxu0 0.0
      %3965 = vmatprep.subr.mxu0 0.0
      %3966 = vmatpush1.msra.mxu0 0.0
      %3967 = vmatprep.subr.mxu0 0.0
      %3968 = vmatpush1.msra.mxu0 0.0
      %3969 = vmatprep.subr.mxu0 0.0
      %3970 = vmatpush1.msra.mxu0 0.0
      %3971 = vmatprep.subr.mxu0 0.0
      %3972 = vmatpush1.msra.mxu0 0.0
      %3973 = vmatprep.subr.mxu0 0.0
      %3974 = vmatpush1.msra.mxu0 0.0
      %3975 = vmatprep.subr.mxu0 0.0
      %3976 = vmatpush1.msra.mxu0 0.0
      %3977 = vmatprep.subr.mxu0 0.0
      %3978 = vmatpush1.msra.mxu0 0.0
      %3979 = vmatprep.subr.mxu0 0.0
      %3980 = vmatpush1.msra.mxu0 0.0
      %3981 = vmatprep.subr.mxu0 0.0
      %3982 = vmatpush1.msra.mxu0 0.0
      %3983 = vmatprep.subr.mxu0 0.0
      %3984 = vmatpush1.msra.mxu0 0.0
      %3985 = vmatprep.subr.mxu0 0.0
      %3986 = vmatpush1.msra.mxu0 0.0
      %3987 = vmatprep.subr.mxu0 0.0
      %3988 = vmatpush1.msra.mxu0 0.0
      %3989 = vmatprep.subr.mxu0 0.0
      %3990 = vmatpush1.msra.mxu0 0.0
      %3991 = vmatprep.subr.mxu0 0.0
      %3992 = vmatpush1.msra.mxu0 0.0
      %3993 = vmatprep.subr.mxu0 0.0
      %3994 = vmatpush1.msra.mxu0 0.0
      %3995 = vmatprep.subr.mxu0 0.0
      %3996 = vmatpush1.msra.mxu0 0.0
      %3997 = vmatprep.subr.mxu0 0.0
      %3998 = vmatpush1.msra.mxu0 0.0
      %3999 = vmatprep.subr.mxu0 0.0
      %4000 = vmatpush1.msra.mxu0 0.0
      %4001 = vmatprep.subr.mxu0 0.0
      %4002 = vmatpush1.msra.mxu0 0.0
      %4003 = vmatprep.subr.mxu0 0.0
      %4004 = vmatpush1.msra.mxu0 0.0
      %4005 = vmatprep.subr.mxu0 0.0
      %4006 = vmatpush1.msra.mxu0 0.0
      %4007 = vmatprep.subr.mxu0 0.0
      %4008 = vmatpush1.msra.mxu0 0.0
      %4009 = vmatprep.subr.mxu0 0.0
      %4010 = vmatpush1.msra.mxu0 0.0
      %4011 = vmatprep.subr.mxu0 0.0
      %4012 = vmatpush1.msra.mxu0 0.0
      %4013 = vmatprep.subr.mxu0 0.0
      %4014 = vmatpush1.msra.mxu0 0.0
      %4015 = vmatprep.subr.mxu0 0.0
      %4016 = vmatpush1.msra.mxu0 0.0
      %4017 = vmatprep.subr.mxu0 0.0
      %4018 = vmatpush1.msra.mxu0 0.0
      %4019 = vmatprep.subr.mxu0 0.0
      %4020 = vmatpush1.msra.mxu0 0.0
      %4021 = vmatprep.mubr.f32.mxu0 0.0
      %v4022 = vand.u32 %v3774, 4294901760
      %v4023 = vsub.f32 %v3774, %v4022
      %4024 = vmatmul.mubr.f32.gmra.mrb[0].mxu0 %v4023
      %v4025 = vpop.f32.mrb[0].mxu0
      %v4026 = vadd.f32 %v3944, %v4025
      %v4027 = vpop.f32.mrb[0].mxu0
      %4028 = vmatprep.mubr.f32.mxu0 0.0
      %v4029 = vand.u32 %v3777, 4294901760
      %v4030 = vsub.f32 %v3777, %v4029
      %4031 = vmatmul.mubr.f32.gmra.mrb[0].mxu0 %v4030
      %v4032 = vpop.f32.mrb[0].mxu0
      %v4033 = vadd.f32 %v3950, %v4032
      %v4034 = vpop.f32.mrb[0].mxu0
      %4035 = vdwg.mxu0
      %4036 = vmatprep.subr.mxu0 0.0
      %v4037 = vand.u32 %v3771, 4294901760
      %4038 = vmatpush1.msra.mxu0 %v4037
      %4039 = vmatprep.subr.mxu0 0.0
      %v4040 = vand.u32 %v3772, 4294901760
      %4041 = vmatpush1.msra.mxu0 %v4040
      %4042 = vmatprep.subr.mxu0 0.0
      %4043 = vmatpush1.msra.mxu0 0.0
      %4044 = vmatprep.subr.mxu0 0.0
      %4045 = vmatpush1.msra.mxu0 0.0
      %4046 = vmatprep.subr.mxu0 0.0
      %4047 = vmatpush1.msra.mxu0 0.0
      %4048 = vmatprep.subr.mxu0 0.0
      %4049 = vmatpush1.msra.mxu0 0.0
      %4050 = vmatprep.subr.mxu0 0.0
      %4051 = vmatpush1.msra.mxu0 0.0
      %4052 = vmatprep.subr.mxu0 0.0
      %4053 = vmatpush1.msra.mxu0 0.0
      %4054 = vmatprep.subr.mxu0 0.0
      %4055 = vmatpush1.msra.mxu0 0.0
      %4056 = vmatprep.subr.mxu0 0.0
      %4057 = vmatpush1.msra.mxu0 0.0
      %4058 = vmatprep.subr.mxu0 0.0
      %4059 = vmatpush1.msra.mxu0 0.0
      %4060 = vmatprep.subr.mxu0 0.0
      %4061 = vmatpush1.msra.mxu0 0.0
      %4062 = vmatprep.subr.mxu0 0.0
      %4063 = vmatpush1.msra.mxu0 0.0
      %4064 = vmatprep.subr.mxu0 0.0
      %4065 = vmatpush1.msra.mxu0 0.0
      %4066 = vmatprep.subr.mxu0 0.0
      %4067 = vmatpush1.msra.mxu0 0.0
      %4068 = vmatprep.subr.mxu0 0.0
      %4069 = vmatpush1.msra.mxu0 0.0
      %4070 = vmatprep.subr.mxu0 0.0
      %4071 = vmatpush1.msra.mxu0 0.0
      %4072 = vmatprep.subr.mxu0 0.0
      %4073 = vmatpush1.msra.mxu0 0.0
      %4074 = vmatprep.subr.mxu0 0.0
      %4075 = vmatpush1.msra.mxu0 0.0
      %4076 = vmatprep.subr.mxu0 0.0
      %4077 = vmatpush1.msra.mxu0 0.0
      %4078 = vmatprep.subr.mxu0 0.0
      %4079 = vmatpush1.msra.mxu0 0.0
      %4080 = vmatprep.subr.mxu0 0.0
      %4081 = vmatpush1.msra.mxu0 0.0
      %4082 = vmatprep.subr.mxu0 0.0
      %4083 = vmatpush1.msra.mxu0 0.0
      %4084 = vmatprep.subr.mxu0 0.0
      %4085 = vmatpush1.msra.mxu0 0.0
      %4086 = vmatprep.subr.mxu0 0.0
      %4087 = vmatpush1.msra.mxu0 0.0
      %4088 = vmatprep.subr.mxu0 0.0
      %4089 = vmatpush1.msra.mxu0 0.0
      %4090 = vmatprep.subr.mxu0 0.0
      %4091 = vmatpush1.msra.mxu0 0.0
      %4092 = vmatprep.subr.mxu0 0.0
      %4093 = vmatpush1.msra.mxu0 0.0
      %4094 = vmatprep.subr.mxu0 0.0
      %4095 = vmatpush1.msra.mxu0 0.0
      %4096 = vmatprep.subr.mxu0 0.0
      %4097 = vmatpush1.msra.mxu0 0.0
      %4098 = vmatprep.subr.mxu0 0.0
      %4099 = vmatpush1.msra.mxu0 0.0
      %4100 = vmatprep.subr.mxu0 0.0
      %4101 = vmatpush1.msra.mxu0 0.0
      %4102 = vmatprep.mubr.f32.mxu0 0.0
      %v4103 = vand.u32 %v3774, 4294901760
      %v4104 = vsub.f32 %v3774, %v4103
      %v4105 = vand.u32 %v4104, 4294901760
      %4106 = vmatmul.mubr.f32.gmra.mrb[0].mxu0 %v4105
      %v4107 = vpop.f32.mrb[0].mxu0
      %v4108 = vadd.f32 %v4026, %v4107
      %v4109 = vpop.f32.mrb[0].mxu0
      %4110 = vmatprep.mubr.f32.mxu0 0.0
      %v4111 = vand.u32 %v3777, 4294901760
      %v4112 = vsub.f32 %v3777, %v4111
      %v4113 = vand.u32 %v4112, 4294901760
      %4114 = vmatmul.mubr.f32.gmra.mrb[0].mxu0 %v4113
      %v4115 = vpop.f32.mrb[0].mxu0
      %v4116 = vadd.f32 %v4033, %v4115
      %v4117 = vpop.f32.mrb[0].mxu0
      %4118 = vdwg.mxu0
      %4119 = vmatprep.subr.mxu0 0.0
      %v4120 = vand.u32 %v3771, 4294901760
      %v4121 = vsub.f32 %v3771, %v4120
      %v4122 = vand.u32 %v4121, 4294901760
      %4123 = vmatpush1.msra.mxu0 %v4122
      %4124 = vmatprep.subr.mxu0 0.0
      %v4125 = vand.u32 %v3772, 4294901760
      %v4126 = vsub.f32 %v3772, %v4125
      %v4127 = vand.u32 %v4126, 4294901760
      %4128 = vmatpush1.msra.mxu0 %v4127
      %4129 = vmatprep.subr.mxu0 0.0
      %4130 = vmatpush1.msra.mxu0 0.0
      %4131 = vmatprep.subr.mxu0 0.0
      %4132 = vmatpush1.msra.mxu0 0.0
      %4133 = vmatprep.subr.mxu0 0.0
      %4134 = vmatpush1.msra.mxu0 0.0
      %4135 = vmatprep.subr.mxu0 0.0
      %4136 = vmatpush1.msra.mxu0 0.0
      %4137 = vmatprep.subr.mxu0 0.0
      %4138 = vmatpush1.msra.mxu0 0.0
      %4139 = vmatprep.subr.mxu0 0.0
      %4140 = vmatpush1.msra.mxu0 0.0
      %4141 = vmatprep.subr.mxu0 0.0
      %4142 = vmatpush1.msra.mxu0 0.0
      %4143 = vmatprep.subr.mxu0 0.0
      %4144 = vmatpush1.msra.mxu0 0.0
      %4145 = vmatprep.subr.mxu0 0.0
      %4146 = vmatpush1.msra.mxu0 0.0
      %4147 = vmatprep.subr.mxu0 0.0
      %4148 = vmatpush1.msra.mxu0 0.0
      %4149 = vmatprep.subr.mxu0 0.0
      %4150 = vmatpush1.msra.mxu0 0.0
      %4151 = vmatprep.subr.mxu0 0.0
      %4152 = vmatpush1.msra.mxu0 0.0
      %4153 = vmatprep.subr.mxu0 0.0
      %4154 = vmatpush1.msra.mxu0 0.0
      %4155 = vmatprep.subr.mxu0 0.0
      %4156 = vmatpush1.msra.mxu0 0.0
      %4157 = vmatprep.subr.mxu0 0.0
      %4158 = vmatpush1.msra.mxu0 0.0
      %4159 = vmatprep.subr.mxu0 0.0
      %4160 = vmatpush1.msra.mxu0 0.0
      %4161 = vmatprep.subr.mxu0 0.0
      %4162 = vmatpush1.msra.mxu0 0.0
      %4163 = vmatprep.subr.mxu0 0.0
      %4164 = vmatpush1.msra.mxu0 0.0
      %4165 = vmatprep.subr.mxu0 0.0
      %4166 = vmatpush1.msra.mxu0 0.0
      %4167 = vmatprep.subr.mxu0 0.0
      %4168 = vmatpush1.msra.mxu0 0.0
      %4169 = vmatprep.subr.mxu0 0.0
      %4170 = vmatpush1.msra.mxu0 0.0
      %4171 = vmatprep.subr.mxu0 0.0
      %4172 = vmatpush1.msra.mxu0 0.0
      %4173 = vmatprep.subr.mxu0 0.0
      %4174 = vmatpush1.msra.mxu0 0.0
      %4175 = vmatprep.subr.mxu0 0.0
      %4176 = vmatpush1.msra.mxu0 0.0
      %4177 = vmatprep.subr.mxu0 0.0
      %4178 = vmatpush1.msra.mxu0 0.0
      %4179 = vmatprep.subr.mxu0 0.0
      %4180 = vmatpush1.msra.mxu0 0.0
      %4181 = vmatprep.subr.mxu0 0.0
      %4182 = vmatpush1.msra.mxu0 0.0
      %4183 = vmatprep.subr.mxu0 0.0
      %4184 = vmatpush1.msra.mxu0 0.0
      %4185 = vmatprep.subr.mxu0 0.0
      %4186 = vmatpush1.msra.mxu0 0.0
      %4187 = vmatprep.subr.mxu0 0.0
      %4188 = vmatpush1.msra.mxu0 0.0
      %4189 = vmatprep.mubr.f32.mxu0 0.0
      %v4190 = vand.u32 %v3774, 4294901760
      %4191 = vmatmul.mubr.f32.gmra.mrb[0].mxu0 %v4190
      %v4192 = vpop.f32.mrb[0].mxu0
      %v4193 = vadd.f32 %v4108, %v4192
      %v4194 = vpop.f32.mrb[0].mxu0
      %4195 = vmatprep.mubr.f32.mxu0 0.0
      %v4196 = vand.u32 %v3777, 4294901760
      %4197 = vmatmul.mubr.f32.gmra.mrb[0].mxu0 %v4196
      %v4198 = vpop.f32.mrb[0].mxu0
      %v4199 = vadd.f32 %v4116, %v4198
      %v4200 = vpop.f32.mrb[0].mxu0
      %4201 = vdwg.mxu0
      %4202 = vmatprep.subr.mxu0 0.0
      %v4203 = vand.u32 %v3771, 4294901760
      %4204 = vmatpush1.msra.mxu0 %v4203
      %4205 = vmatprep.subr.mxu0 0.0
      %v4206 = vand.u32 %v3772, 4294901760
      %4207 = vmatpush1.msra.mxu0 %v4206
      %4208 = vmatprep.subr.mxu0 0.0
      %4209 = vmatpush1.msra.mxu0 0.0
      %4210 = vmatprep.subr.mxu0 0.0
      %4211 = vmatpush1.msra.mxu0 0.0
      %4212 = vmatprep.subr.mxu0 0.0
      %4213 = vmatpush1.msra.mxu0 0.0
      %4214 = vmatprep.subr.mxu0 0.0
      %4215 = vmatpush1.msra.mxu0 0.0
      %4216 = vmatprep.subr.mxu0 0.0
      %4217 = vmatpush1.msra.mxu0 0.0
      %4218 = vmatprep.subr.mxu0 0.0
      %4219 = vmatpush1.msra.mxu0 0.0
      %4220 = vmatprep.subr.mxu0 0.0
      %4221 = vmatpush1.msra.mxu0 0.0
      %4222 = vmatprep.subr.mxu0 0.0
      %4223 = vmatpush1.msra.mxu0 0.0
      %4224 = vmatprep.subr.mxu0 0.0
      %4225 = vmatpush1.msra.mxu0 0.0
      %4226 = vmatprep.subr.mxu0 0.0
      %4227 = vmatpush1.msra.mxu0 0.0
      %4228 = vmatprep.subr.mxu0 0.0
      %4229 = vmatpush1.msra.mxu0 0.0
      %4230 = vmatprep.subr.mxu0 0.0
      %4231 = vmatpush1.msra.mxu0 0.0
      %4232 = vmatprep.subr.mxu0 0.0
      %4233 = vmatpush1.msra.mxu0 0.0
      %4234 = vmatprep.subr.mxu0 0.0
      %4235 = vmatpush1.msra.mxu0 0.0
      %4236 = vmatprep.subr.mxu0 0.0
      %4237 = vmatpush1.msra.mxu0 0.0
      %4238 = vmatprep.subr.mxu0 0.0
      %4239 = vmatpush1.msra.mxu0 0.0
      %4240 = vmatprep.subr.mxu0 0.0
      %4241 = vmatpush1.msra.mxu0 0.0
      %4242 = vmatprep.subr.mxu0 0.0
      %4243 = vmatpush1.msra.mxu0 0.0
      %4244 = vmatprep.subr.mxu0 0.0
      %4245 = vmatpush1.msra.mxu0 0.0
      %4246 = vmatprep.subr.mxu0 0.0
      %4247 = vmatpush1.msra.mxu0 0.0
      %4248 = vmatprep.subr.mxu0 0.0
      %4249 = vmatpush1.msra.mxu0 0.0
      %4250 = vmatprep.subr.mxu0 0.0
      %4251 = vmatpush1.msra.mxu0 0.0
      %4252 = vmatprep.subr.mxu0 0.0
      %4253 = vmatpush1.msra.mxu0 0.0
      %4254 = vmatprep.subr.mxu0 0.0
      %4255 = vmatpush1.msra.mxu0 0.0
      %4256 = vmatprep.subr.mxu0 0.0
      %4257 = vmatpush1.msra.mxu0 0.0
      %4258 = vmatprep.subr.mxu0 0.0
      %4259 = vmatpush1.msra.mxu0 0.0
      %4260 = vmatprep.subr.mxu0 0.0
      %4261 = vmatpush1.msra.mxu0 0.0
      %4262 = vmatprep.subr.mxu0 0.0
      %4263 = vmatpush1.msra.mxu0 0.0
      %4264 = vmatprep.subr.mxu0 0.0
      %4265 = vmatpush1.msra.mxu0 0.0
      %4266 = vmatprep.subr.mxu0 0.0
      %4267 = vmatpush1.msra.mxu0 0.0
      %4268 = vmatprep.mubr.f32.mxu0 0.0
      %v4269 = vand.u32 %v3774, 4294901760
      %4270 = vmatmul.mubr.f32.gmra.mrb[0].mxu0 %v4269
      %v4271 = vpop.f32.mrb[0].mxu0
      %v4272 = vadd.f32 %v4193, %v4271
      %v4273 = vpop.f32.mrb[0].mxu0
      %4274 = vmatprep.mubr.f32.mxu0 0.0
      %v4275 = vand.u32 %v3777, 4294901760
      %4276 = vmatmul.mubr.f32.gmra.mrb[0].mxu0 %v4275
      %v4277 = vpop.f32.mrb[0].mxu0
      %v4278 = vadd.f32 %v4199, %v4277
      %v4279 = vpop.f32.mrb[0].mxu0
      %4280 = vdwg.mxu0
      %v4281 = vadd.f32 %v3768, %v4272
      %v4282 = vadd.f32 %v3769, %v4278
      %4283 = vst.msk [vmem:[%s410] sm:$0xff] %vm423, %v4281
      %4284 = vst.msk [vmem:[%s410 + $0x8] sm:$0xff] %vm423, %v4282
      %s4285 = smul.u32 2, %s22
      %p4286 = scmp.lt.s32.totalorder %s4285, 3
      %s4287 = scalar_select %p4286, %s4285, 3
      %s4288 = smul.addr %s4287, 8
      %s4289 = scalar_lea.vmem %s11, %s4288
      // Predicated region
      $region65: #{_mgb_forward.1} parent=63 // pred_check
        %p4290 = pneg %p281
      $region66: #{_mgb_forward.1} parent=63 // pred_check_branch
        %4292 = sbr.rel (%p4290) target = $region68
      $region67: #{_mgb_forward.1} parent=63 // pred_region
        %s4293 = smul.u32 2, %s22
      $region68: #{_mgb_forward.1} parent=63 // pred_fallthru
        _
    $region64: #{_mgb_forward.1} parent=5 // pred_fallthru
      _
    %p4294 = scmp.le.s32.totalorder 2, %s17
    // Predicated region
    $region69: #{_mgb_forward.1} parent=5 // pred_check
      %p4295 = pneg %p4294
    $region70: #{_mgb_forward.1} parent=5 // pred_check_branch
      %4297 = sbr.rel (%p4295) target = $region72
    $region71: #{_mgb_forward.1} parent=5 // pred_region
      %s4298 = ssub.s32 %s17, 2
      // Predicated region
      $region73: #{_mgb_forward.1} parent=71 // pred_check
        %p4299 = pneg %p287
      $region74: #{_mgb_forward.1} parent=71 // pred_check_branch
        %4301 = sbr.rel (%p4299) target = $region76
      $region75: #{_mgb_forward.1} parent=71 // pred_region
        %s4302 = smul.u32 2, %s23
        %p4303 = scmp.lt.s32.totalorder %s4302, 3
        %s4304 = scalar_select %p4303, %s4302, 3
        %s4305 = smul.addr %s4304, 8
        %s4306 = scalar_lea.vmem %s11, %s4305
      $region76: #{_mgb_forward.1} parent=71 // pred_fallthru
        _
    $region72: #{_mgb_forward.1} parent=5 // pred_fallthru
      _
  $region6: #{_mgb_forward.1} parent=0 // loop_footer
    %s21 = sadd.s32 1, %s17
  $region7: #{_mgb_forward.1} parent=0 // loop_footer_branch
    %16 = sbr.rel target = $region3
  $region8: #{_mgb_forward.1} parent=0 // loop_exit
    _

</llo_original>
